<compile_context>
chip_gen: v7x
topology: tpu7x:2x2x1
jax: 0.10.0
libtpu: 0.0.40
codegen_flags: <defaults>
</compile_context>

<pallas_src>
import numpy as np

import jax
import jax.numpy as jnp
from jax.experimental import pallas as pl
from jax.experimental.pallas import tpu as pltpu


# ----------------------------- fused kernel --------------------------------

def _make_cpm2_kernel(H, W):
    """Build the fused CPM2 kernel for spatial size (H, W); H, W % 4 == 0."""
    H1, W1 = H // 2, W // 2            # after pool1
    H2, W2 = H1 // 2, W1 // 2          # after pool2

    def _edge_masks(Hc, Wc):
        # Computed once per resolution (hoisted); used by every layer there.
        lane = jax.lax.broadcasted_iota(jnp.int32, (1, Hc * Wc), 1)
        col = (lane & (Wc - 1)) if (Wc & (Wc - 1)) == 0 else (lane % Wc)
        not_left = (col != 0).astype(jnp.float32)
        not_right = (col != Wc - 1).astype(jnp.float32)
        return not_left, not_right

    def _cbr(x, w_ref, b_ref, Hc, Wc, not_left, not_right):
        """Conv3x3(pad=1) + folded BatchNorm(eval) + ReLU on (Cin, Hc*Wc).

        w_ref: (Cout, 9*Cin) bf16, flattened tap-major ((dy,dx) outer, c inner)
        b_ref: (Cout, 1) f32 folded bias.
        """
        C = x.shape[0]
        HWc = Hc * Wc
        # Zero-extend by (Wc + 1) lanes each side: a shift of (dy-1)*Wc+(dx-1)
        # in the flattened index becomes a static slice at offset dy*Wc + dx;
        # vertical out-of-range taps land in the zero borders, horizontal
        # wraps are killed by the per-lane boundary masks below.
        zpad = jnp.zeros((C, Wc + 1), jnp.float32)
        x_ext = jnp.concatenate([zpad, x, zpad], axis=1)
        taps = []
        for dy in range(3):
            for dx in range(3):
                off = dy * Wc + dx
                tap = jax.lax.slice(x_ext, (0, off), (C, off + HWc))
                if dx == 0:
                    tap = tap * not_left        # w - 1 < 0 at col 0
                elif dx == 2:
                    tap = tap * not_right       # w + 1 >= Wc at col Wc-1
                taps.append(tap)
        # Tap-stacked im2col: (9*Cin, HWc), single MXU dot per layer.
        im2col = jnp.concatenate(taps, axis=0).astype(jnp.bfloat16)
        y = jnp.dot(w_ref[...], im2col,
                    preferred_element_type=jnp.float32) + b_ref[...]
        return jnp.maximum(y, 0.0)

    def _maxpool(x, g_ref, Wc):
        """2x2 / stride-2 max pool: VPU max over lane shifts, then a single
        one-hot gather matmul that keeps every window's top-left lane."""
        C, HWc = x.shape
        zpad = jnp.zeros((C, Wc + 1), jnp.float32)
        x_ext = jnp.concatenate([x, zpad], axis=1)
        s01 = jax.lax.slice(x_ext, (0, 1), (C, 1 + HWc))
        s10 = jax.lax.slice(x_ext, (0, Wc), (C, Wc + HWc))
        s11 = jax.lax.slice(x_ext, (0, Wc + 1), (C, Wc + 1 + HWc))
        # Window-straddling lanes are never selected by the one-hot gather
        # (even dims only), so no boundary masks are needed here.
        m = jnp.maximum(jnp.maximum(x, s01), jnp.maximum(s10, s11))
        return jnp.dot(m.astype(jnp.bfloat16), g_ref[...],
                       preferred_element_type=jnp.float32)

    def _upsample(x, u_ref):
        # Bilinear (align_corners=False) upsample as one matmul with the
        # precomputed kron(row, col) interpolation matrix.
        return jnp.dot(x.astype(jnp.bfloat16), u_ref[...],
                       preferred_element_type=jnp.float32)

    def kernel(x_ref,
               w_in, b_in, w1, b1, w2, b2, w3, b3, w4, b4,
               w4d, b4d, w3d, b3d, w2d, b2d, w1d, b1d,
               g1_ref, g2_ref, u48_ref, u816_ref,
               o_ref):
        nl0, nr0 = _edge_masks(H, W)
        nl1, nr1 = _edge_masks(H1, W1)
        nl2, nr2 = _edge_masks(H2, W2)

        x = x_ref[0]                                   # (Cin, H*W) f32

        xin = _cbr(x, w_in, b_in, H, W, nl0, nr0)      # (Cout, H*W)
        x1 = _cbr(xin, w1, b1, H, W, nl0, nr0)         # (mid, H*W)
        xp = _maxpool(x1, g1_ref, W)                   # (mid, H1*W1)
        x2 = _cbr(xp, w2, b2, H1, W1, nl1, nr1)        # (mid, H1*W1)
        xp = _maxpool(x2, g2_ref, W1)                  # (mid, H2*W2)
        x3 = _cbr(xp, w3, b3, H2, W2, nl2, nr2)        # (mid, H2*W2)
        x4 = _cbr(x3, w4, b4, H2, W2, nl2, nr2)        # (mid, H2*W2)

        # TODO(synk): Transformer / get_config are not defined in the
        # reference source, so the transformer branch is identity on x4 and
        # the following upsampleLike(xtr, x4) is size-preserving (a no-op).
        xtrup = x4

        x4d = _cbr(jnp.concatenate([xtrup, x4], axis=0), w4d, b4d,
                   H2, W2, nl2, nr2)                   # cat -> (2*mid, H2*W2)
        x3d = _cbr(jnp.concatenate([x4d, x3], axis=0), w3d, b3d,
                   H2, W2, nl2, nr2)
        x3dup = _upsample(x3d, u48_ref)                # (mid, H1*W1)
        x2d = _cbr(jnp.concatenate([x3dup, x2], axis=0), w2d, b2d,
                   H1, W1, nl1, nr1)
        x2dup = _upsample(x2d, u816_ref)               # (mid, H*W)
        x1d = _cbr(jnp.concatenate([x2dup, x1], axis=0), w1d, b1d,
                   H, W, nl0, nr0)                     # (Cout, H*W)

        o_ref[0] = x1d + xin                           # fused residual add

    return kernel


# ------------------------ constant matrices (host side) ---------------------

def _pool_gather_mat(h_in, w_in):
    """One-hot (h_in*w_in, h_out*w_out) lane-compaction matrix for the 2x2
    stride-2 pool.  The window max is taken in lane space before this gather,
    so the matrix only picks each window's top-left lane (even dims only;
    ceil_mode never pads in that case)."""
    h_out, w_out = h_in // 2, w_in // 2
    m = np.zeros((h_in * w_in, h_out * w_out), np.float32)
    for ho in range(h_out):
        for wo in range(w_out):
            m[(2 * ho) * w_in + 2 * wo, ho * w_out + wo] = 1.0
    return jnp.asarray(m, dtype=jnp.bfloat16)


def _bilerp_matrix(out_size, in_size):
    """1-D interpolation matrix matching F.interpolate(mode='bilinear',
    align_corners=False) half-pixel centers."""
    o = np.arange(out_size, dtype=np.float64)
    src = np.maximum((o + 0.5) * (in_size / out_size) - 0.5, 0.0)
    lo = np.minimum(np.floor(src).astype(np.int64), in_size - 1)
    hi = np.minimum(lo + 1, in_size - 1)
    frac = (src - lo).astype(np.float32)
    m = np.zeros((out_size, in_size), np.float32)
    m[np.arange(out_size), lo] += 1.0 - frac
    m[np.arange(out_size), hi] += frac
    return m


def _upsample_matrix(h_in, w_in, h_out, w_out):
    """(h_in*w_in, h_out*w_out) bf16 matrix U so that up = x_flat @ U."""
    mh = _bilerp_matrix(h_out, h_in)
    mw = _bilerp_matrix(w_out, w_in)
    return jnp.asarray(np.kron(mh.T, mw.T), dtype=jnp.bfloat16)


# ------------------------------- parameters --------------------------------

_LAYERS = ["cbrin", "cbr1", "cbr2", "cbr3", "cbr4",
           "cbr4d", "cbr3d", "cbr2d", "cbr1d"]


def make_cbr_params(key, cin, cout, eps=1e-5):
    k = jax.random.split(key, 6)
    w = 0.1 * jax.random.normal(k[0], (3, 3, cin, cout), jnp.float32)
    b = 0.1 * jax.random.normal(k[1], (cout,), jnp.float32)
    gamma = 1.0 + 0.1 * jax.random.normal(k[2], (cout,), jnp.float32)
    beta = 0.1 * jax.random.normal(k[3], (cout,), jnp.float32)
    mean = 0.1 * jax.random.normal(k[4], (cout,), jnp.float32)
    var = 1.0 + 0.1 * jnp.abs(jax.random.normal(k[5], (cout,), jnp.float32))
    scale = gamma / jnp.sqrt(var + eps)          # BN folded (eval mode)
    shift = beta + (b - mean) * scale            # conv bias folded in as well
    return {"w": w, "scale": scale, "shift": shift}


def make_cpm2_params(key, in_channels=3, mid_channels=12, out_channels=3):
    dims = [
        ("cbrin", in_channels, out_channels),
        ("cbr1", out_channels, mid_channels),
        ("cbr2", mid_channels, mid_channels),
        ("cbr3", mid_channels, mid_channels),
        ("cbr4", mid_channels, mid_channels),
        ("cbr4d", mid_channels * 2, mid_channels),
        ("cbr3d", mid_channels * 2, mid_channels),
        ("cbr2d", mid_channels * 2, mid_channels),
        ("cbr1d", mid_channels * 2, out_channels),
    ]
    keys = jax.random.split(key, len(dims))
    return {name: make_cbr_params(k, ci, co)
            for k, (name, ci, co) in zip(keys, dims)}


def _fold_cbr(layer):
    """Fold BN scale into the conv weight and flatten to (Cout, 9*Cin) bf16 in
    im2col row order ((dy, dx) outer, input channel inner).  Bias is (Cout,1)."""
    w, scale, shift = layer["w"], layer["scale"], layer["shift"]
    cin, cout = w.shape[2], w.shape[3]
    w_flat = jnp.transpose(w * scale, (3, 0, 1, 2)).reshape(cout, 9 * cin)
    return w_flat.astype(jnp.bfloat16), shift.reshape(cout, 1)


# -------------------------------- forward ----------------------------------

def cpm2_forward(x_nchw, params):
    N, Cin, H, W = x_nchw.shape
    # Fast pool path assumes even spatial dims at both pooling levels.
    assert H % 4 == 0 and W % 4 == 0
    HW = H * W
    H1, W1 = H // 2, W // 2
    H2, W2 = H1 // 2, W1 // 2
    Cout = params["cbr1d"]["w"].shape[-1]
    mid = params["cbr2"]["w"].shape[-1]

    # NCHW -> (N, C, H*W): channels on sublanes, flattened spatial on lanes.
    x_flat = x_nchw.reshape(N, Cin, HW)

    folded = []
    for name in _LAYERS:
        folded.extend(_fold_cbr(params[name]))

    g1 = _pool_gather_mat(H, W)                      # (H*W,   H1*W1) bf16
    g2 = _pool_gather_mat(H1, W1)                    # (H1*W1, H2*W2) bf16
    up_2to1 = _upsample_matrix(H2, W2, H1, W1)       # (H2*W2, H1*W1) bf16
    up_1to0 = _upsample_matrix(H1, W1, H, W)         # (H1*W1, H*W)   bf16

    args = [x_flat] + folded + [g1, g2, up_2to1, up_1to0]

    def _const_spec(a):
        zeros = (0,) * a.ndim
        return pl.BlockSpec(a.shape, lambda n, _z=zeros: _z)

    in_specs = [pl.BlockSpec((1, Cin, HW), lambda n: (n, 0, 0))]
    in_specs += [_const_spec(a) for a in args[1:]]

    # Advisory cost estimate for XLA's scheduler.
    hw_of = {"cbrin": HW, "cbr1": HW, "cbr1d": HW,
             "cbr2": H1 * W1, "cbr2d": H1 * W1,
             "cbr3": H2 * W2, "cbr4": H2 * W2,
             "cbr4d": H2 * W2, "cbr3d": H2 * W2}
    flops = 0
    for name in _LAYERS:
        w = params[name]["w"]
        flops += 2 * 9 * w.shape[2] * w.shape[3] * hw_of[name]
    flops += 2 * mid * (HW * H1 * W1 + H1 * W1 * H2 * W2)   # pool gathers
    flops += 2 * mid * (H2 * W2 * H1 * W1 + H1 * W1 * HW)   # upsamples
    flops *= N
    bytes_accessed = sum(int(np.prod(a.shape)) * int(a.dtype.itemsize)
                         for a in args)
    bytes_accessed += N * Cout * HW * 4

    out = pl.pallas_call(
        _make_cpm2_kernel(H, W),
        out_shape=jax.ShapeDtypeStruct((N, Cout, HW), jnp.float32),
        grid=(N,),
        in_specs=in_specs,
        out_specs=pl.BlockSpec((1, Cout, HW), lambda n: (n, 0, 0)),
        compiler_params=pltpu.CompilerParams(
            dimension_semantics=("parallel",)),
        cost_estimate=pl.CostEstimate(
            flops=flops, transcendentals=0, bytes_accessed=bytes_accessed),
    )(*args)

    return out.reshape(N, Cout, H, W)                # NCHW, like PyTorch


# ---------------------------------- main ------------------------------------

if __name__ == "__main__":
    key = jax.random.PRNGKey(0)
    kx, kp = jax.random.split(key)

    N, C, H, W = 2, 3, 16, 16                        # PyTorch NCHW convention
    x_nchw = jax.random.normal(kx, (N, C, H, W), jnp.float32)

    params = make_cpm2_params(kp, in_channels=3, mid_channels=12, out_channels=3)

    fwd = jax.jit(cpm2_forward)
    y_nchw = fwd(x_nchw, params)
    jax.block_until_ready(y_nchw)

    assert y_nchw.shape == (N, 3, H, W)
    assert bool(jnp.all(jnp.isfinite(y_nchw)))
    print("KERNEL_OK")
</pallas_src>

<mosaic_0001>
module attributes {stable_mosaic.version = 11 : i64} {
  func.func @kernel(%arg0: i32, %arg1: memref<1x3x256xf32, #tpu.memory_space<vmem>>, %arg2: memref<3x27xbf16, #tpu.memory_space<vmem>>, %arg3: memref<3x1xf32, #tpu.memory_space<vmem>>, %arg4: memref<12x27xbf16, #tpu.memory_space<vmem>>, %arg5: memref<12x1xf32, #tpu.memory_space<vmem>>, %arg6: memref<12x108xbf16, #tpu.memory_space<vmem>>, %arg7: memref<12x1xf32, #tpu.memory_space<vmem>>, %arg8: memref<12x108xbf16, #tpu.memory_space<vmem>>, %arg9: memref<12x1xf32, #tpu.memory_space<vmem>>, %arg10: memref<12x108xbf16, #tpu.memory_space<vmem>>, %arg11: memref<12x1xf32, #tpu.memory_space<vmem>>, %arg12: memref<12x216xbf16, #tpu.memory_space<vmem>>, %arg13: memref<12x1xf32, #tpu.memory_space<vmem>>, %arg14: memref<12x216xbf16, #tpu.memory_space<vmem>>, %arg15: memref<12x1xf32, #tpu.memory_space<vmem>>, %arg16: memref<12x216xbf16, #tpu.memory_space<vmem>>, %arg17: memref<12x1xf32, #tpu.memory_space<vmem>>, %arg18: memref<3x216xbf16, #tpu.memory_space<vmem>>, %arg19: memref<3x1xf32, #tpu.memory_space<vmem>>, %arg20: memref<256x64xbf16, #tpu.memory_space<vmem>>, %arg21: memref<64x16xbf16, #tpu.memory_space<vmem>>, %arg22: memref<16x64xbf16, #tpu.memory_space<vmem>>, %arg23: memref<64x256xbf16, #tpu.memory_space<vmem>>, %arg24: memref<1x3x256xf32, #tpu.memory_space<vmem>>) attributes {dimension_semantics = [#tpu.dimension_semantics<parallel>], iteration_bounds = array<i64: 2>, scalar_prefetch = 0 : i64, scratch_operands = 0 : i64, tpu.core_type = #tpu.core_type<tc>, window_params = [{transform_indices = @transform_0, window_bounds = array<i64: 1, 3, 256>}, {pipeline_mode = #tpu.pipeline_mode<synchronous>, transform_indices = @transform_1, window_bounds = array<i64: 3, 27>}, {pipeline_mode = #tpu.pipeline_mode<synchronous>, transform_indices = @transform_2, window_bounds = array<i64: 3, 1>}, {pipeline_mode = #tpu.pipeline_mode<synchronous>, transform_indices = @transform_3, window_bounds = array<i64: 12, 27>}, {pipeline_mode = #tpu.pipeline_mode<synchronous>, transform_indices = @transform_4, window_bounds = array<i64: 12, 1>}, {pipeline_mode = #tpu.pipeline_mode<synchronous>, transform_indices = @transform_5, window_bounds = array<i64: 12, 108>}, {pipeline_mode = #tpu.pipeline_mode<synchronous>, transform_indices = @transform_6, window_bounds = array<i64: 12, 1>}, {pipeline_mode = #tpu.pipeline_mode<synchronous>, transform_indices = @transform_7, window_bounds = array<i64: 12, 108>}, {pipeline_mode = #tpu.pipeline_mode<synchronous>, transform_indices = @transform_8, window_bounds = array<i64: 12, 1>}, {pipeline_mode = #tpu.pipeline_mode<synchronous>, transform_indices = @transform_9, window_bounds = array<i64: 12, 108>}, {pipeline_mode = #tpu.pipeline_mode<synchronous>, transform_indices = @transform_10, window_bounds = array<i64: 12, 1>}, {pipeline_mode = #tpu.pipeline_mode<synchronous>, transform_indices = @transform_11, window_bounds = array<i64: 12, 216>}, {pipeline_mode = #tpu.pipeline_mode<synchronous>, transform_indices = @transform_12, window_bounds = array<i64: 12, 1>}, {pipeline_mode = #tpu.pipeline_mode<synchronous>, transform_indices = @transform_13, window_bounds = array<i64: 12, 216>}, {pipeline_mode = #tpu.pipeline_mode<synchronous>, transform_indices = @transform_14, window_bounds = array<i64: 12, 1>}, {pipeline_mode = #tpu.pipeline_mode<synchronous>, transform_indices = @transform_15, window_bounds = array<i64: 12, 216>}, {pipeline_mode = #tpu.pipeline_mode<synchronous>, transform_indices = @transform_16, window_bounds = array<i64: 12, 1>}, {pipeline_mode = #tpu.pipeline_mode<synchronous>, transform_indices = @transform_17, window_bounds = array<i64: 3, 216>}, {pipeline_mode = #tpu.pipeline_mode<synchronous>, transform_indices = @transform_18, window_bounds = array<i64: 3, 1>}, {pipeline_mode = #tpu.pipeline_mode<synchronous>, transform_indices = @transform_19, window_bounds = array<i64: 256, 64>}, {pipeline_mode = #tpu.pipeline_mode<synchronous>, transform_indices = @transform_20, window_bounds = array<i64: 64, 16>}, {pipeline_mode = #tpu.pipeline_mode<synchronous>, transform_indices = @transform_21, window_bounds = array<i64: 16, 64>}, {pipeline_mode = #tpu.pipeline_mode<synchronous>, transform_indices = @transform_22, window_bounds = array<i64: 64, 256>}, {transform_indices = @transform_23, window_bounds = array<i64: 1, 3, 256>}]} {
    %0 = tpu.iota {dimensions = array<i32: 1>} : vector<1x256xi32>
    %c15_i32 = arith.constant 15 : i32
    %1 = vector.broadcast %c15_i32 : i32 to vector<1x256xi32>
    %2 = arith.andi %0, %1 : vector<1x256xi32>
    %c0_i32 = arith.constant 0 : i32
    %3 = vector.broadcast %c0_i32 : i32 to vector<1x256xi32>
    %4 = arith.cmpi ne, %2, %3 : vector<1x256xi32>
    %5 = arith.extui %4 : vector<1x256xi1> to vector<1x256xi32>
    %6 = arith.sitofp %5 : vector<1x256xi32> to vector<1x256xf32>
    %c15_i32_0 = arith.constant 15 : i32
    %7 = vector.broadcast %c15_i32_0 : i32 to vector<1x256xi32>
    %8 = arith.cmpi ne, %2, %7 : vector<1x256xi32>
    %9 = arith.extui %8 : vector<1x256xi1> to vector<1x256xi32>
    %10 = arith.sitofp %9 : vector<1x256xi32> to vector<1x256xf32>
    %11 = tpu.iota {dimensions = array<i32: 1>} : vector<1x64xi32>
    %c7_i32 = arith.constant 7 : i32
    %12 = vector.broadcast %c7_i32 : i32 to vector<1x64xi32>
    %13 = arith.andi %11, %12 : vector<1x64xi32>
    %c0_i32_1 = arith.constant 0 : i32
    %14 = vector.broadcast %c0_i32_1 : i32 to vector<1x64xi32>
    %15 = arith.cmpi ne, %13, %14 : vector<1x64xi32>
    %16 = arith.extui %15 : vector<1x64xi1> to vector<1x64xi32>
    %17 = arith.sitofp %16 : vector<1x64xi32> to vector<1x64xf32>
    %c7_i32_2 = arith.constant 7 : i32
    %18 = vector.broadcast %c7_i32_2 : i32 to vector<1x64xi32>
    %19 = arith.cmpi ne, %13, %18 : vector<1x64xi32>
    %20 = arith.extui %19 : vector<1x64xi1> to vector<1x64xi32>
    %21 = arith.sitofp %20 : vector<1x64xi32> to vector<1x64xf32>
    %22 = tpu.iota {dimensions = array<i32: 1>} : vector<1x16xi32>
    %c3_i32 = arith.constant 3 : i32
    %23 = vector.broadcast %c3_i32 : i32 to vector<1x16xi32>
    %24 = arith.andi %22, %23 : vector<1x16xi32>
    %c0_i32_3 = arith.constant 0 : i32
    %25 = vector.broadcast %c0_i32_3 : i32 to vector<1x16xi32>
    %26 = arith.cmpi ne, %24, %25 : vector<1x16xi32>
    %27 = arith.extui %26 : vector<1x16xi1> to vector<1x16xi32>
    %28 = arith.sitofp %27 : vector<1x16xi32> to vector<1x16xf32>
    %c3_i32_4 = arith.constant 3 : i32
    %29 = vector.broadcast %c3_i32_4 : i32 to vector<1x16xi32>
    %30 = arith.cmpi ne, %24, %29 : vector<1x16xi32>
    %31 = arith.extui %30 : vector<1x16xi1> to vector<1x16xi32>
    %32 = arith.sitofp %31 : vector<1x16xi32> to vector<1x16xf32>
    %c0 = arith.constant 0 : index
    %c0_5 = arith.constant 0 : index
    %c0_6 = arith.constant 0 : index
    %33 = vector.load %arg1[%c0, %c0_5, %c0_6] : memref<1x3x256xf32, #tpu.memory_space<vmem>>, vector<1x3x256xf32>
    %34 = vector.shape_cast %33 : vector<1x3x256xf32> to vector<3x256xf32>
    %cst = arith.constant 0.000000e+00 : f32
    %35 = vector.broadcast %cst : f32 to vector<3x17xf32>
    %36 = tpu.concatenate %35, %34, %35 in 1 : vector<3x17xf32>, vector<3x256xf32>, vector<3x17xf32> -> vector<3x290xf32>
    %37 = vector.extract_strided_slice %36 {offsets = [0, 0], sizes = [3, 256], strides = [1, 1]} : vector<3x290xf32> to vector<3x256xf32>
    %38 = vector.broadcast %6 : vector<1x256xf32> to vector<3x256xf32>
    %39 = arith.mulf %37, %38 : vector<3x256xf32>
    %40 = vector.extract_strided_slice %36 {offsets = [0, 1], sizes = [3, 256], strides = [1, 1]} : vector<3x290xf32> to vector<3x256xf32>
    %41 = vector.extract_strided_slice %36 {offsets = [0, 2], sizes = [3, 256], strides = [1, 1]} : vector<3x290xf32> to vector<3x256xf32>
    %42 = vector.broadcast %10 : vector<1x256xf32> to vector<3x256xf32>
    %43 = arith.mulf %41, %42 : vector<3x256xf32>
    %44 = vector.extract_strided_slice %36 {offsets = [0, 16], sizes = [3, 256], strides = [1, 1]} : vector<3x290xf32> to vector<3x256xf32>
    %45 = vector.broadcast %6 : vector<1x256xf32> to vector<3x256xf32>
    %46 = arith.mulf %44, %45 : vector<3x256xf32>
    %47 = vector.extract_strided_slice %36 {offsets = [0, 17], sizes = [3, 256], strides = [1, 1]} : vector<3x290xf32> to vector<3x256xf32>
    %48 = vector.extract_strided_slice %36 {offsets = [0, 18], sizes = [3, 256], strides = [1, 1]} : vector<3x290xf32> to vector<3x256xf32>
    %49 = vector.broadcast %10 : vector<1x256xf32> to vector<3x256xf32>
    %50 = arith.mulf %48, %49 : vector<3x256xf32>
    %51 = vector.extract_strided_slice %36 {offsets = [0, 32], sizes = [3, 256], strides = [1, 1]} : vector<3x290xf32> to vector<3x256xf32>
    %52 = vector.broadcast %6 : vector<1x256xf32> to vector<3x256xf32>
    %53 = arith.mulf %51, %52 : vector<3x256xf32>
    %54 = vector.extract_strided_slice %36 {offsets = [0, 33], sizes = [3, 256], strides = [1, 1]} : vector<3x290xf32> to vector<3x256xf32>
    %55 = vector.extract_strided_slice %36 {offsets = [0, 34], sizes = [3, 256], strides = [1, 1]} : vector<3x290xf32> to vector<3x256xf32>
    %56 = vector.broadcast %10 : vector<1x256xf32> to vector<3x256xf32>
    %57 = arith.mulf %55, %56 : vector<3x256xf32>
    %58 = tpu.concatenate %39, %40, %43, %46, %47, %50, %53, %54, %57 in 0 : vector<3x256xf32>, vector<3x256xf32>, vector<3x256xf32>, vector<3x256xf32>, vector<3x256xf32>, vector<3x256xf32>, vector<3x256xf32>, vector<3x256xf32>, vector<3x256xf32> -> vector<27x256xf32>
    %59 = arith.truncf %58 : vector<27x256xf32> to vector<27x256xbf16>
    %c0_7 = arith.constant 0 : index
    %c0_8 = arith.constant 0 : index
    %60 = vector.load %arg2[%c0_7, %c0_8] : memref<3x27xbf16, #tpu.memory_space<vmem>>, vector<3x27xbf16>
    %cst_9 = arith.constant dense<0.000000e+00> : vector<3x256xf32>
    %61 = tpu.matmul %60, %59, %cst_9 {dimension_numbers = #tpu.dot_dimension_numbers<[1], [0], [0], [1], [0, 0, 1, 1], [], []>} : vector<3x27xbf16>, vector<27x256xbf16>, vector<3x256xf32> -> vector<3x256xf32>
    %c0_10 = arith.constant 0 : index
    %c0_11 = arith.constant 0 : index
    %62 = vector.load %arg3[%c0_10, %c0_11] : memref<3x1xf32, #tpu.memory_space<vmem>>, vector<3x1xf32>
    %63 = vector.broadcast %62 : vector<3x1xf32> to vector<3x256xf32>
    %64 = arith.addf %61, %63 : vector<3x256xf32>
    %cst_12 = arith.constant 0.000000e+00 : f32
    %65 = vector.broadcast %cst_12 : f32 to vector<3x256xf32>
    %66 = arith.maximumf %64, %65 : vector<3x256xf32>
    %cst_13 = arith.constant 0.000000e+00 : f32
    %67 = vector.broadcast %cst_13 : f32 to vector<3x17xf32>
    %68 = tpu.concatenate %67, %66, %67 in 1 : vector<3x17xf32>, vector<3x256xf32>, vector<3x17xf32> -> vector<3x290xf32>
    %69 = vector.extract_strided_slice %68 {offsets = [0, 0], sizes = [3, 256], strides = [1, 1]} : vector<3x290xf32> to vector<3x256xf32>
    %70 = vector.broadcast %6 : vector<1x256xf32> to vector<3x256xf32>
    %71 = arith.mulf %69, %70 : vector<3x256xf32>
    %72 = vector.extract_strided_slice %68 {offsets = [0, 1], sizes = [3, 256], strides = [1, 1]} : vector<3x290xf32> to vector<3x256xf32>
    %73 = vector.extract_strided_slice %68 {offsets = [0, 2], sizes = [3, 256], strides = [1, 1]} : vector<3x290xf32> to vector<3x256xf32>
    %74 = vector.broadcast %10 : vector<1x256xf32> to vector<3x256xf32>
    %75 = arith.mulf %73, %74 : vector<3x256xf32>
    %76 = vector.extract_strided_slice %68 {offsets = [0, 16], sizes = [3, 256], strides = [1, 1]} : vector<3x290xf32> to vector<3x256xf32>
    %77 = vector.broadcast %6 : vector<1x256xf32> to vector<3x256xf32>
    %78 = arith.mulf %76, %77 : vector<3x256xf32>
    %79 = vector.extract_strided_slice %68 {offsets = [0, 17], sizes = [3, 256], strides = [1, 1]} : vector<3x290xf32> to vector<3x256xf32>
    %80 = vector.extract_strided_slice %68 {offsets = [0, 18], sizes = [3, 256], strides = [1, 1]} : vector<3x290xf32> to vector<3x256xf32>
    %81 = vector.broadcast %10 : vector<1x256xf32> to vector<3x256xf32>
    %82 = arith.mulf %80, %81 : vector<3x256xf32>
    %83 = vector.extract_strided_slice %68 {offsets = [0, 32], sizes = [3, 256], strides = [1, 1]} : vector<3x290xf32> to vector<3x256xf32>
    %84 = vector.broadcast %6 : vector<1x256xf32> to vector<3x256xf32>
    %85 = arith.mulf %83, %84 : vector<3x256xf32>
    %86 = vector.extract_strided_slice %68 {offsets = [0, 33], sizes = [3, 256], strides = [1, 1]} : vector<3x290xf32> to vector<3x256xf32>
    %87 = vector.extract_strided_slice %68 {offsets = [0, 34], sizes = [3, 256], strides = [1, 1]} : vector<3x290xf32> to vector<3x256xf32>
    %88 = vector.broadcast %10 : vector<1x256xf32> to vector<3x256xf32>
    %89 = arith.mulf %87, %88 : vector<3x256xf32>
    %90 = tpu.concatenate %71, %72, %75, %78, %79, %82, %85, %86, %89 in 0 : vector<3x256xf32>, vector<3x256xf32>, vector<3x256xf32>, vector<3x256xf32>, vector<3x256xf32>, vector<3x256xf32>, vector<3x256xf32>, vector<3x256xf32>, vector<3x256xf32> -> vector<27x256xf32>
    %91 = arith.truncf %90 : vector<27x256xf32> to vector<27x256xbf16>
    %c0_14 = arith.constant 0 : index
    %c0_15 = arith.constant 0 : index
    %92 = vector.load %arg4[%c0_14, %c0_15] : memref<12x27xbf16, #tpu.memory_space<vmem>>, vector<12x27xbf16>
    %cst_16 = arith.constant dense<0.000000e+00> : vector<12x256xf32>
    %93 = tpu.matmul %92, %91, %cst_16 {dimension_numbers = #tpu.dot_dimension_numbers<[1], [0], [0], [1], [0, 0, 1, 1], [], []>} : vector<12x27xbf16>, vector<27x256xbf16>, vector<12x256xf32> -> vector<12x256xf32>
    %c0_17 = arith.constant 0 : index
    %c0_18 = arith.constant 0 : index
    %94 = vector.load %arg5[%c0_17, %c0_18] : memref<12x1xf32, #tpu.memory_space<vmem>>, vector<12x1xf32>
    %95 = vector.broadcast %94 : vector<12x1xf32> to vector<12x256xf32>
    %96 = arith.addf %93, %95 : vector<12x256xf32>
    %cst_19 = arith.constant 0.000000e+00 : f32
    %97 = vector.broadcast %cst_19 : f32 to vector<12x256xf32>
    %98 = arith.maximumf %96, %97 : vector<12x256xf32>
    %cst_20 = arith.constant 0.000000e+00 : f32
    %99 = vector.broadcast %cst_20 : f32 to vector<12x17xf32>
    %100 = tpu.concatenate %98, %99 in 1 : vector<12x256xf32>, vector<12x17xf32> -> vector<12x273xf32>
    %101 = vector.extract_strided_slice %100 {offsets = [0, 1], sizes = [12, 256], strides = [1, 1]} : vector<12x273xf32> to vector<12x256xf32>
    %102 = vector.extract_strided_slice %100 {offsets = [0, 16], sizes = [12, 256], strides = [1, 1]} : vector<12x273xf32> to vector<12x256xf32>
    %103 = vector.extract_strided_slice %100 {offsets = [0, 17], sizes = [12, 256], strides = [1, 1]} : vector<12x273xf32> to vector<12x256xf32>
    %104 = arith.maximumf %98, %101 : vector<12x256xf32>
    %105 = arith.maximumf %102, %103 : vector<12x256xf32>
    %106 = arith.maximumf %104, %105 : vector<12x256xf32>
    %107 = arith.truncf %106 : vector<12x256xf32> to vector<12x256xbf16>
    %c0_21 = arith.constant 0 : index
    %c0_22 = arith.constant 0 : index
    %108 = vector.load %arg20[%c0_21, %c0_22] : memref<256x64xbf16, #tpu.memory_space<vmem>>, vector<256x64xbf16>
    %cst_23 = arith.constant dense<0.000000e+00> : vector<12x64xf32>
    %109 = tpu.matmul %107, %108, %cst_23 {dimension_numbers = #tpu.dot_dimension_numbers<[1], [0], [0], [1], [0, 0, 1, 1], [], []>} : vector<12x256xbf16>, vector<256x64xbf16>, vector<12x64xf32> -> vector<12x64xf32>
    %cst_24 = arith.constant 0.000000e+00 : f32
    %110 = vector.broadcast %cst_24 : f32 to vector<12x9xf32>
    %111 = tpu.concatenate %110, %109, %110 in 1 : vector<12x9xf32>, vector<12x64xf32>, vector<12x9xf32> -> vector<12x82xf32>
    %112 = vector.extract_strided_slice %111 {offsets = [0, 0], sizes = [12, 64], strides = [1, 1]} : vector<12x82xf32> to vector<12x64xf32>
    %113 = vector.broadcast %17 : vector<1x64xf32> to vector<12x64xf32>
    %114 = arith.mulf %112, %113 : vector<12x64xf32>
    %115 = vector.extract_strided_slice %111 {offsets = [0, 1], sizes = [12, 64], strides = [1, 1]} : vector<12x82xf32> to vector<12x64xf32>
    %116 = vector.extract_strided_slice %111 {offsets = [0, 2], sizes = [12, 64], strides = [1, 1]} : vector<12x82xf32> to vector<12x64xf32>
    %117 = vector.broadcast %21 : vector<1x64xf32> to vector<12x64xf32>
    %118 = arith.mulf %116, %117 : vector<12x64xf32>
    %119 = vector.extract_strided_slice %111 {offsets = [0, 8], sizes = [12, 64], strides = [1, 1]} : vector<12x82xf32> to vector<12x64xf32>
    %120 = vector.broadcast %17 : vector<1x64xf32> to vector<12x64xf32>
    %121 = arith.mulf %119, %120 : vector<12x64xf32>
    %122 = vector.extract_strided_slice %111 {offsets = [0, 9], sizes = [12, 64], strides = [1, 1]} : vector<12x82xf32> to vector<12x64xf32>
    %123 = vector.extract_strided_slice %111 {offsets = [0, 10], sizes = [12, 64], strides = [1, 1]} : vector<12x82xf32> to vector<12x64xf32>
    %124 = vector.broadcast %21 : vector<1x64xf32> to vector<12x64xf32>
    %125 = arith.mulf %123, %124 : vector<12x64xf32>
    %126 = vector.extract_strided_slice %111 {offsets = [0, 16], sizes = [12, 64], strides = [1, 1]} : vector<12x82xf32> to vector<12x64xf32>
    %127 = vector.broadcast %17 : vector<1x64xf32> to vector<12x64xf32>
    %128 = arith.mulf %126, %127 : vector<12x64xf32>
    %129 = vector.extract_strided_slice %111 {offsets = [0, 17], sizes = [12, 64], strides = [1, 1]} : vector<12x82xf32> to vector<12x64xf32>
    %130 = vector.extract_strided_slice %111 {offsets = [0, 18], sizes = [12, 64], strides = [1, 1]} : vector<12x82xf32> to vector<12x64xf32>
    %131 = vector.broadcast %21 : vector<1x64xf32> to vector<12x64xf32>
    %132 = arith.mulf %130, %131 : vector<12x64xf32>
    %133 = tpu.concatenate %114, %115, %118, %121, %122, %125, %128, %129, %132 in 0 : vector<12x64xf32>, vector<12x64xf32>, vector<12x64xf32>, vector<12x64xf32>, vector<12x64xf32>, vector<12x64xf32>, vector<12x64xf32>, vector<12x64xf32>, vector<12x64xf32> -> vector<108x64xf32>
    %134 = arith.truncf %133 : vector<108x64xf32> to vector<108x64xbf16>
    %c0_25 = arith.constant 0 : index
    %c0_26 = arith.constant 0 : index
    %135 = vector.load %arg6[%c0_25, %c0_26] : memref<12x108xbf16, #tpu.memory_space<vmem>>, vector<12x108xbf16>
    %cst_27 = arith.constant dense<0.000000e+00> : vector<12x64xf32>
    %136 = tpu.matmul %135, %134, %cst_27 {dimension_numbers = #tpu.dot_dimension_numbers<[1], [0], [0], [1], [0, 0, 1, 1], [], []>} : vector<12x108xbf16>, vector<108x64xbf16>, vector<12x64xf32> -> vector<12x64xf32>
    %c0_28 = arith.constant 0 : index
    %c0_29 = arith.constant 0 : index
    %137 = vector.load %arg7[%c0_28, %c0_29] : memref<12x1xf32, #tpu.memory_space<vmem>>, vector<12x1xf32>
    %138 = vector.broadcast %137 : vector<12x1xf32> to vector<12x64xf32>
    %139 = arith.addf %136, %138 : vector<12x64xf32>
    %cst_30 = arith.constant 0.000000e+00 : f32
    %140 = vector.broadcast %cst_30 : f32 to vector<12x64xf32>
    %141 = arith.maximumf %139, %140 : vector<12x64xf32>
    %cst_31 = arith.constant 0.000000e+00 : f32
    %142 = vector.broadcast %cst_31 : f32 to vector<12x9xf32>
    %143 = tpu.concatenate %141, %142 in 1 : vector<12x64xf32>, vector<12x9xf32> -> vector<12x73xf32>
    %144 = vector.extract_strided_slice %143 {offsets = [0, 1], sizes = [12, 64], strides = [1, 1]} : vector<12x73xf32> to vector<12x64xf32>
    %145 = vector.extract_strided_slice %143 {offsets = [0, 8], sizes = [12, 64], strides = [1, 1]} : vector<12x73xf32> to vector<12x64xf32>
    %146 = vector.extract_strided_slice %143 {offsets = [0, 9], sizes = [12, 64], strides = [1, 1]} : vector<12x73xf32> to vector<12x64xf32>
    %147 = arith.maximumf %141, %144 : vector<12x64xf32>
    %148 = arith.maximumf %145, %146 : vector<12x64xf32>
    %149 = arith.maximumf %147, %148 : vector<12x64xf32>
    %150 = arith.truncf %149 : vector<12x64xf32> to vector<12x64xbf16>
    %c0_32 = arith.constant 0 : index
    %c0_33 = arith.constant 0 : index
    %151 = vector.load %arg21[%c0_32, %c0_33] : memref<64x16xbf16, #tpu.memory_space<vmem>>, vector<64x16xbf16>
    %cst_34 = arith.constant dense<0.000000e+00> : vector<12x16xf32>
    %152 = tpu.matmul %150, %151, %cst_34 {dimension_numbers = #tpu.dot_dimension_numbers<[1], [0], [0], [1], [0, 0, 1, 1], [], []>} : vector<12x64xbf16>, vector<64x16xbf16>, vector<12x16xf32> -> vector<12x16xf32>
    %cst_35 = arith.constant 0.000000e+00 : f32
    %153 = vector.broadcast %cst_35 : f32 to vector<12x5xf32>
    %154 = tpu.concatenate %153, %152, %153 in 1 : vector<12x5xf32>, vector<12x16xf32>, vector<12x5xf32> -> vector<12x26xf32>
    %155 = vector.extract_strided_slice %154 {offsets = [0, 0], sizes = [12, 16], strides = [1, 1]} : vector<12x26xf32> to vector<12x16xf32>
    %156 = vector.broadcast %28 : vector<1x16xf32> to vector<12x16xf32>
    %157 = arith.mulf %155, %156 : vector<12x16xf32>
    %158 = vector.extract_strided_slice %154 {offsets = [0, 1], sizes = [12, 16], strides = [1, 1]} : vector<12x26xf32> to vector<12x16xf32>
    %159 = vector.extract_strided_slice %154 {offsets = [0, 2], sizes = [12, 16], strides = [1, 1]} : vector<12x26xf32> to vector<12x16xf32>
    %160 = vector.broadcast %32 : vector<1x16xf32> to vector<12x16xf32>
    %161 = arith.mulf %159, %160 : vector<12x16xf32>
    %162 = vector.extract_strided_slice %154 {offsets = [0, 4], sizes = [12, 16], strides = [1, 1]} : vector<12x26xf32> to vector<12x16xf32>
    %163 = vector.broadcast %28 : vector<1x16xf32> to vector<12x16xf32>
    %164 = arith.mulf %162, %163 : vector<12x16xf32>
    %165 = vector.extract_strided_slice %154 {offsets = [0, 5], sizes = [12, 16], strides = [1, 1]} : vector<12x26xf32> to vector<12x16xf32>
    %166 = vector.extract_strided_slice %154 {offsets = [0, 6], sizes = [12, 16], strides = [1, 1]} : vector<12x26xf32> to vector<12x16xf32>
    %167 = vector.broadcast %32 : vector<1x16xf32> to vector<12x16xf32>
    %168 = arith.mulf %166, %167 : vector<12x16xf32>
    %169 = vector.extract_strided_slice %154 {offsets = [0, 8], sizes = [12, 16], strides = [1, 1]} : vector<12x26xf32> to vector<12x16xf32>
    %170 = vector.broadcast %28 : vector<1x16xf32> to vector<12x16xf32>
    %171 = arith.mulf %169, %170 : vector<12x16xf32>
    %172 = vector.extract_strided_slice %154 {offsets = [0, 9], sizes = [12, 16], strides = [1, 1]} : vector<12x26xf32> to vector<12x16xf32>
    %173 = vector.extract_strided_slice %154 {offsets = [0, 10], sizes = [12, 16], strides = [1, 1]} : vector<12x26xf32> to vector<12x16xf32>
    %174 = vector.broadcast %32 : vector<1x16xf32> to vector<12x16xf32>
    %175 = arith.mulf %173, %174 : vector<12x16xf32>
    %176 = tpu.concatenate %157, %158, %161, %164, %165, %168, %171, %172, %175 in 0 : vector<12x16xf32>, vector<12x16xf32>, vector<12x16xf32>, vector<12x16xf32>, vector<12x16xf32>, vector<12x16xf32>, vector<12x16xf32>, vector<12x16xf32>, vector<12x16xf32> -> vector<108x16xf32>
    %177 = arith.truncf %176 : vector<108x16xf32> to vector<108x16xbf16>
    %c0_36 = arith.constant 0 : index
    %c0_37 = arith.constant 0 : index
    %178 = vector.load %arg8[%c0_36, %c0_37] : memref<12x108xbf16, #tpu.memory_space<vmem>>, vector<12x108xbf16>
    %cst_38 = arith.constant dense<0.000000e+00> : vector<12x16xf32>
    %179 = tpu.matmul %178, %177, %cst_38 {dimension_numbers = #tpu.dot_dimension_numbers<[1], [0], [0], [1], [0, 0, 1, 1], [], []>} : vector<12x108xbf16>, vector<108x16xbf16>, vector<12x16xf32> -> vector<12x16xf32>
    %c0_39 = arith.constant 0 : index
    %c0_40 = arith.constant 0 : index
    %180 = vector.load %arg9[%c0_39, %c0_40] : memref<12x1xf32, #tpu.memory_space<vmem>>, vector<12x1xf32>
    %181 = vector.broadcast %180 : vector<12x1xf32> to vector<12x16xf32>
    %182 = arith.addf %179, %181 : vector<12x16xf32>
    %cst_41 = arith.constant 0.000000e+00 : f32
    %183 = vector.broadcast %cst_41 : f32 to vector<12x16xf32>
    %184 = arith.maximumf %182, %183 : vector<12x16xf32>
    %cst_42 = arith.constant 0.000000e+00 : f32
    %185 = vector.broadcast %cst_42 : f32 to vector<12x5xf32>
    %186 = tpu.concatenate %185, %184, %185 in 1 : vector<12x5xf32>, vector<12x16xf32>, vector<12x5xf32> -> vector<12x26xf32>
    %187 = vector.extract_strided_slice %186 {offsets = [0, 0], sizes = [12, 16], strides = [1, 1]} : vector<12x26xf32> to vector<12x16xf32>
    %188 = vector.broadcast %28 : vector<1x16xf32> to vector<12x16xf32>
    %189 = arith.mulf %187, %188 : vector<12x16xf32>
    %190 = vector.extract_strided_slice %186 {offsets = [0, 1], sizes = [12, 16], strides = [1, 1]} : vector<12x26xf32> to vector<12x16xf32>
    %191 = vector.extract_strided_slice %186 {offsets = [0, 2], sizes = [12, 16], strides = [1, 1]} : vector<12x26xf32> to vector<12x16xf32>
    %192 = vector.broadcast %32 : vector<1x16xf32> to vector<12x16xf32>
    %193 = arith.mulf %191, %192 : vector<12x16xf32>
    %194 = vector.extract_strided_slice %186 {offsets = [0, 4], sizes = [12, 16], strides = [1, 1]} : vector<12x26xf32> to vector<12x16xf32>
    %195 = vector.broadcast %28 : vector<1x16xf32> to vector<12x16xf32>
    %196 = arith.mulf %194, %195 : vector<12x16xf32>
    %197 = vector.extract_strided_slice %186 {offsets = [0, 5], sizes = [12, 16], strides = [1, 1]} : vector<12x26xf32> to vector<12x16xf32>
    %198 = vector.extract_strided_slice %186 {offsets = [0, 6], sizes = [12, 16], strides = [1, 1]} : vector<12x26xf32> to vector<12x16xf32>
    %199 = vector.broadcast %32 : vector<1x16xf32> to vector<12x16xf32>
    %200 = arith.mulf %198, %199 : vector<12x16xf32>
    %201 = vector.extract_strided_slice %186 {offsets = [0, 8], sizes = [12, 16], strides = [1, 1]} : vector<12x26xf32> to vector<12x16xf32>
    %202 = vector.broadcast %28 : vector<1x16xf32> to vector<12x16xf32>
    %203 = arith.mulf %201, %202 : vector<12x16xf32>
    %204 = vector.extract_strided_slice %186 {offsets = [0, 9], sizes = [12, 16], strides = [1, 1]} : vector<12x26xf32> to vector<12x16xf32>
    %205 = vector.extract_strided_slice %186 {offsets = [0, 10], sizes = [12, 16], strides = [1, 1]} : vector<12x26xf32> to vector<12x16xf32>
    %206 = vector.broadcast %32 : vector<1x16xf32> to vector<12x16xf32>
    %207 = arith.mulf %205, %206 : vector<12x16xf32>
    %208 = tpu.concatenate %189, %190, %193, %196, %197, %200, %203, %204, %207 in 0 : vector<12x16xf32>, vector<12x16xf32>, vector<12x16xf32>, vector<12x16xf32>, vector<12x16xf32>, vector<12x16xf32>, vector<12x16xf32>, vector<12x16xf32>, vector<12x16xf32> -> vector<108x16xf32>
    %209 = arith.truncf %208 : vector<108x16xf32> to vector<108x16xbf16>
    %c0_43 = arith.constant 0 : index
    %c0_44 = arith.constant 0 : index
    %210 = vector.load %arg10[%c0_43, %c0_44] : memref<12x108xbf16, #tpu.memory_space<vmem>>, vector<12x108xbf16>
    %cst_45 = arith.constant dense<0.000000e+00> : vector<12x16xf32>
    %211 = tpu.matmul %210, %209, %cst_45 {dimension_numbers = #tpu.dot_dimension_numbers<[1], [0], [0], [1], [0, 0, 1, 1], [], []>} : vector<12x108xbf16>, vector<108x16xbf16>, vector<12x16xf32> -> vector<12x16xf32>
    %c0_46 = arith.constant 0 : index
    %c0_47 = arith.constant 0 : index
    %212 = vector.load %arg11[%c0_46, %c0_47] : memref<12x1xf32, #tpu.memory_space<vmem>>, vector<12x1xf32>
    %213 = vector.broadcast %212 : vector<12x1xf32> to vector<12x16xf32>
    %214 = arith.addf %211, %213 : vector<12x16xf32>
    %cst_48 = arith.constant 0.000000e+00 : f32
    %215 = vector.broadcast %cst_48 : f32 to vector<12x16xf32>
    %216 = arith.maximumf %214, %215 : vector<12x16xf32>
    %217 = tpu.concatenate %216, %216 in 0 : vector<12x16xf32>, vector<12x16xf32> -> vector<24x16xf32>
    %cst_49 = arith.constant 0.000000e+00 : f32
    %218 = vector.broadcast %cst_49 : f32 to vector<24x5xf32>
    %219 = tpu.concatenate %218, %217, %218 in 1 : vector<24x5xf32>, vector<24x16xf32>, vector<24x5xf32> -> vector<24x26xf32>
    %220 = vector.extract_strided_slice %219 {offsets = [0, 0], sizes = [24, 16], strides = [1, 1]} : vector<24x26xf32> to vector<24x16xf32>
    %221 = vector.broadcast %28 : vector<1x16xf32> to vector<24x16xf32>
    %222 = arith.mulf %220, %221 : vector<24x16xf32>
    %223 = vector.extract_strided_slice %219 {offsets = [0, 1], sizes = [24, 16], strides = [1, 1]} : vector<24x26xf32> to vector<24x16xf32>
    %224 = vector.extract_strided_slice %219 {offsets = [0, 2], sizes = [24, 16], strides = [1, 1]} : vector<24x26xf32> to vector<24x16xf32>
    %225 = vector.broadcast %32 : vector<1x16xf32> to vector<24x16xf32>
    %226 = arith.mulf %224, %225 : vector<24x16xf32>
    %227 = vector.extract_strided_slice %219 {offsets = [0, 4], sizes = [24, 16], strides = [1, 1]} : vector<24x26xf32> to vector<24x16xf32>
    %228 = vector.broadcast %28 : vector<1x16xf32> to vector<24x16xf32>
    %229 = arith.mulf %227, %228 : vector<24x16xf32>
    %230 = vector.extract_strided_slice %219 {offsets = [0, 5], sizes = [24, 16], strides = [1, 1]} : vector<24x26xf32> to vector<24x16xf32>
    %231 = vector.extract_strided_slice %219 {offsets = [0, 6], sizes = [24, 16], strides = [1, 1]} : vector<24x26xf32> to vector<24x16xf32>
    %232 = vector.broadcast %32 : vector<1x16xf32> to vector<24x16xf32>
    %233 = arith.mulf %231, %232 : vector<24x16xf32>
    %234 = vector.extract_strided_slice %219 {offsets = [0, 8], sizes = [24, 16], strides = [1, 1]} : vector<24x26xf32> to vector<24x16xf32>
    %235 = vector.broadcast %28 : vector<1x16xf32> to vector<24x16xf32>
    %236 = arith.mulf %234, %235 : vector<24x16xf32>
    %237 = vector.extract_strided_slice %219 {offsets = [0, 9], sizes = [24, 16], strides = [1, 1]} : vector<24x26xf32> to vector<24x16xf32>
    %238 = vector.extract_strided_slice %219 {offsets = [0, 10], sizes = [24, 16], strides = [1, 1]} : vector<24x26xf32> to vector<24x16xf32>
    %239 = vector.broadcast %32 : vector<1x16xf32> to vector<24x16xf32>
    %240 = arith.mulf %238, %239 : vector<24x16xf32>
    %241 = tpu.concatenate %222, %223, %226, %229, %230, %233, %236, %237, %240 in 0 : vector<24x16xf32>, vector<24x16xf32>, vector<24x16xf32>, vector<24x16xf32>, vector<24x16xf32>, vector<24x16xf32>, vector<24x16xf32>, vector<24x16xf32>, vector<24x16xf32> -> vector<216x16xf32>
    %242 = arith.truncf %241 : vector<216x16xf32> to vector<216x16xbf16>
    %c0_50 = arith.constant 0 : index
    %c0_51 = arith.constant 0 : index
    %243 = vector.load %arg12[%c0_50, %c0_51] : memref<12x216xbf16, #tpu.memory_space<vmem>>, vector<12x216xbf16>
    %cst_52 = arith.constant dense<0.000000e+00> : vector<12x16xf32>
    %244 = tpu.matmul %243, %242, %cst_52 {dimension_numbers = #tpu.dot_dimension_numbers<[1], [0], [0], [1], [0, 0, 1, 1], [], []>} : vector<12x216xbf16>, vector<216x16xbf16>, vector<12x16xf32> -> vector<12x16xf32>
    %c0_53 = arith.constant 0 : index
    %c0_54 = arith.constant 0 : index
    %245 = vector.load %arg13[%c0_53, %c0_54] : memref<12x1xf32, #tpu.memory_space<vmem>>, vector<12x1xf32>
    %246 = vector.broadcast %245 : vector<12x1xf32> to vector<12x16xf32>
    %247 = arith.addf %244, %246 : vector<12x16xf32>
    %cst_55 = arith.constant 0.000000e+00 : f32
    %248 = vector.broadcast %cst_55 : f32 to vector<12x16xf32>
    %249 = arith.maximumf %247, %248 : vector<12x16xf32>
    %250 = tpu.concatenate %249, %184 in 0 : vector<12x16xf32>, vector<12x16xf32> -> vector<24x16xf32>
    %cst_56 = arith.constant 0.000000e+00 : f32
    %251 = vector.broadcast %cst_56 : f32 to vector<24x5xf32>
    %252 = tpu.concatenate %251, %250, %251 in 1 : vector<24x5xf32>, vector<24x16xf32>, vector<24x5xf32> -> vector<24x26xf32>
    %253 = vector.extract_strided_slice %252 {offsets = [0, 0], sizes = [24, 16], strides = [1, 1]} : vector<24x26xf32> to vector<24x16xf32>
    %254 = vector.broadcast %28 : vector<1x16xf32> to vector<24x16xf32>
    %255 = arith.mulf %253, %254 : vector<24x16xf32>
    %256 = vector.extract_strided_slice %252 {offsets = [0, 1], sizes = [24, 16], strides = [1, 1]} : vector<24x26xf32> to vector<24x16xf32>
    %257 = vector.extract_strided_slice %252 {offsets = [0, 2], sizes = [24, 16], strides = [1, 1]} : vector<24x26xf32> to vector<24x16xf32>
    %258 = vector.broadcast %32 : vector<1x16xf32> to vector<24x16xf32>
    %259 = arith.mulf %257, %258 : vector<24x16xf32>
    %260 = vector.extract_strided_slice %252 {offsets = [0, 4], sizes = [24, 16], strides = [1, 1]} : vector<24x26xf32> to vector<24x16xf32>
    %261 = vector.broadcast %28 : vector<1x16xf32> to vector<24x16xf32>
    %262 = arith.mulf %260, %261 : vector<24x16xf32>
    %263 = vector.extract_strided_slice %252 {offsets = [0, 5], sizes = [24, 16], strides = [1, 1]} : vector<24x26xf32> to vector<24x16xf32>
    %264 = vector.extract_strided_slice %252 {offsets = [0, 6], sizes = [24, 16], strides = [1, 1]} : vector<24x26xf32> to vector<24x16xf32>
    %265 = vector.broadcast %32 : vector<1x16xf32> to vector<24x16xf32>
    %266 = arith.mulf %264, %265 : vector<24x16xf32>
    %267 = vector.extract_strided_slice %252 {offsets = [0, 8], sizes = [24, 16], strides = [1, 1]} : vector<24x26xf32> to vector<24x16xf32>
    %268 = vector.broadcast %28 : vector<1x16xf32> to vector<24x16xf32>
    %269 = arith.mulf %267, %268 : vector<24x16xf32>
    %270 = vector.extract_strided_slice %252 {offsets = [0, 9], sizes = [24, 16], strides = [1, 1]} : vector<24x26xf32> to vector<24x16xf32>
    %271 = vector.extract_strided_slice %252 {offsets = [0, 10], sizes = [24, 16], strides = [1, 1]} : vector<24x26xf32> to vector<24x16xf32>
    %272 = vector.broadcast %32 : vector<1x16xf32> to vector<24x16xf32>
    %273 = arith.mulf %271, %272 : vector<24x16xf32>
    %274 = tpu.concatenate %255, %256, %259, %262, %263, %266, %269, %270, %273 in 0 : vector<24x16xf32>, vector<24x16xf32>, vector<24x16xf32>, vector<24x16xf32>, vector<24x16xf32>, vector<24x16xf32>, vector<24x16xf32>, vector<24x16xf32>, vector<24x16xf32> -> vector<216x16xf32>
    %275 = arith.truncf %274 : vector<216x16xf32> to vector<216x16xbf16>
    %c0_57 = arith.constant 0 : index
    %c0_58 = arith.constant 0 : index
    %276 = vector.load %arg14[%c0_57, %c0_58] : memref<12x216xbf16, #tpu.memory_space<vmem>>, vector<12x216xbf16>
    %cst_59 = arith.constant dense<0.000000e+00> : vector<12x16xf32>
    %277 = tpu.matmul %276, %275, %cst_59 {dimension_numbers = #tpu.dot_dimension_numbers<[1], [0], [0], [1], [0, 0, 1, 1], [], []>} : vector<12x216xbf16>, vector<216x16xbf16>, vector<12x16xf32> -> vector<12x16xf32>
    %c0_60 = arith.constant 0 : index
    %c0_61 = arith.constant 0 : index
    %278 = vector.load %arg15[%c0_60, %c0_61] : memref<12x1xf32, #tpu.memory_space<vmem>>, vector<12x1xf32>
    %279 = vector.broadcast %278 : vector<12x1xf32> to vector<12x16xf32>
    %280 = arith.addf %277, %279 : vector<12x16xf32>
    %cst_62 = arith.constant 0.000000e+00 : f32
    %281 = vector.broadcast %cst_62 : f32 to vector<12x16xf32>
    %282 = arith.maximumf %280, %281 : vector<12x16xf32>
    %283 = arith.truncf %282 : vector<12x16xf32> to vector<12x16xbf16>
    %c0_63 = arith.constant 0 : index
    %c0_64 = arith.constant 0 : index
    %284 = vector.load %arg22[%c0_63, %c0_64] : memref<16x64xbf16, #tpu.memory_space<vmem>>, vector<16x64xbf16>
    %cst_65 = arith.constant dense<0.000000e+00> : vector<12x64xf32>
    %285 = tpu.matmul %283, %284, %cst_65 {dimension_numbers = #tpu.dot_dimension_numbers<[1], [0], [0], [1], [0, 0, 1, 1], [], []>} : vector<12x16xbf16>, vector<16x64xbf16>, vector<12x64xf32> -> vector<12x64xf32>
    %286 = tpu.concatenate %285, %141 in 0 : vector<12x64xf32>, vector<12x64xf32> -> vector<24x64xf32>
    %cst_66 = arith.constant 0.000000e+00 : f32
    %287 = vector.broadcast %cst_66 : f32 to vector<24x9xf32>
    %288 = tpu.concatenate %287, %286, %287 in 1 : vector<24x9xf32>, vector<24x64xf32>, vector<24x9xf32> -> vector<24x82xf32>
    %289 = vector.extract_strided_slice %288 {offsets = [0, 0], sizes = [24, 64], strides = [1, 1]} : vector<24x82xf32> to vector<24x64xf32>
    %290 = vector.broadcast %17 : vector<1x64xf32> to vector<24x64xf32>
    %291 = arith.mulf %289, %290 : vector<24x64xf32>
    %292 = vector.extract_strided_slice %288 {offsets = [0, 1], sizes = [24, 64], strides = [1, 1]} : vector<24x82xf32> to vector<24x64xf32>
    %293 = vector.extract_strided_slice %288 {offsets = [0, 2], sizes = [24, 64], strides = [1, 1]} : vector<24x82xf32> to vector<24x64xf32>
    %294 = vector.broadcast %21 : vector<1x64xf32> to vector<24x64xf32>
    %295 = arith.mulf %293, %294 : vector<24x64xf32>
    %296 = vector.extract_strided_slice %288 {offsets = [0, 8], sizes = [24, 64], strides = [1, 1]} : vector<24x82xf32> to vector<24x64xf32>
    %297 = vector.broadcast %17 : vector<1x64xf32> to vector<24x64xf32>
    %298 = arith.mulf %296, %297 : vector<24x64xf32>
    %299 = vector.extract_strided_slice %288 {offsets = [0, 9], sizes = [24, 64], strides = [1, 1]} : vector<24x82xf32> to vector<24x64xf32>
    %300 = vector.extract_strided_slice %288 {offsets = [0, 10], sizes = [24, 64], strides = [1, 1]} : vector<24x82xf32> to vector<24x64xf32>
    %301 = vector.broadcast %21 : vector<1x64xf32> to vector<24x64xf32>
    %302 = arith.mulf %300, %301 : vector<24x64xf32>
    %303 = vector.extract_strided_slice %288 {offsets = [0, 16], sizes = [24, 64], strides = [1, 1]} : vector<24x82xf32> to vector<24x64xf32>
    %304 = vector.broadcast %17 : vector<1x64xf32> to vector<24x64xf32>
    %305 = arith.mulf %303, %304 : vector<24x64xf32>
    %306 = vector.extract_strided_slice %288 {offsets = [0, 17], sizes = [24, 64], strides = [1, 1]} : vector<24x82xf32> to vector<24x64xf32>
    %307 = vector.extract_strided_slice %288 {offsets = [0, 18], sizes = [24, 64], strides = [1, 1]} : vector<24x82xf32> to vector<24x64xf32>
    %308 = vector.broadcast %21 : vector<1x64xf32> to vector<24x64xf32>
    %309 = arith.mulf %307, %308 : vector<24x64xf32>
    %310 = tpu.concatenate %291, %292, %295, %298, %299, %302, %305, %306, %309 in 0 : vector<24x64xf32>, vector<24x64xf32>, vector<24x64xf32>, vector<24x64xf32>, vector<24x64xf32>, vector<24x64xf32>, vector<24x64xf32>, vector<24x64xf32>, vector<24x64xf32> -> vector<216x64xf32>
    %311 = arith.truncf %310 : vector<216x64xf32> to vector<216x64xbf16>
    %c0_67 = arith.constant 0 : index
    %c0_68 = arith.constant 0 : index
    %312 = vector.load %arg16[%c0_67, %c0_68] : memref<12x216xbf16, #tpu.memory_space<vmem>>, vector<12x216xbf16>
    %cst_69 = arith.constant dense<0.000000e+00> : vector<12x64xf32>
    %313 = tpu.matmul %312, %311, %cst_69 {dimension_numbers = #tpu.dot_dimension_numbers<[1], [0], [0], [1], [0, 0, 1, 1], [], []>} : vector<12x216xbf16>, vector<216x64xbf16>, vector<12x64xf32> -> vector<12x64xf32>
    %c0_70 = arith.constant 0 : index
    %c0_71 = arith.constant 0 : index
    %314 = vector.load %arg17[%c0_70, %c0_71] : memref<12x1xf32, #tpu.memory_space<vmem>>, vector<12x1xf32>
    %315 = vector.broadcast %314 : vector<12x1xf32> to vector<12x64xf32>
    %316 = arith.addf %313, %315 : vector<12x64xf32>
    %cst_72 = arith.constant 0.000000e+00 : f32
    %317 = vector.broadcast %cst_72 : f32 to vector<12x64xf32>
    %318 = arith.maximumf %316, %317 : vector<12x64xf32>
    %319 = arith.truncf %318 : vector<12x64xf32> to vector<12x64xbf16>
    %c0_73 = arith.constant 0 : index
    %c0_74 = arith.constant 0 : index
    %320 = vector.load %arg23[%c0_73, %c0_74] : memref<64x256xbf16, #tpu.memory_space<vmem>>, vector<64x256xbf16>
    %cst_75 = arith.constant dense<0.000000e+00> : vector<12x256xf32>
    %321 = tpu.matmul %319, %320, %cst_75 {dimension_numbers = #tpu.dot_dimension_numbers<[1], [0], [0], [1], [0, 0, 1, 1], [], []>} : vector<12x64xbf16>, vector<64x256xbf16>, vector<12x256xf32> -> vector<12x256xf32>
    %322 = tpu.concatenate %321, %98 in 0 : vector<12x256xf32>, vector<12x256xf32> -> vector<24x256xf32>
    %cst_76 = arith.constant 0.000000e+00 : f32
    %323 = vector.broadcast %cst_76 : f32 to vector<24x17xf32>
    %324 = tpu.concatenate %323, %322, %323 in 1 : vector<24x17xf32>, vector<24x256xf32>, vector<24x17xf32> -> vector<24x290xf32>
    %325 = vector.extract_strided_slice %324 {offsets = [0, 0], sizes = [24, 256], strides = [1, 1]} : vector<24x290xf32> to vector<24x256xf32>
    %326 = vector.broadcast %6 : vector<1x256xf32> to vector<24x256xf32>
    %327 = arith.mulf %325, %326 : vector<24x256xf32>
    %328 = vector.extract_strided_slice %324 {offsets = [0, 1], sizes = [24, 256], strides = [1, 1]} : vector<24x290xf32> to vector<24x256xf32>
    %329 = vector.extract_strided_slice %324 {offsets = [0, 2], sizes = [24, 256], strides = [1, 1]} : vector<24x290xf32> to vector<24x256xf32>
    %330 = vector.broadcast %10 : vector<1x256xf32> to vector<24x256xf32>
    %331 = arith.mulf %329, %330 : vector<24x256xf32>
    %332 = vector.extract_strided_slice %324 {offsets = [0, 16], sizes = [24, 256], strides = [1, 1]} : vector<24x290xf32> to vector<24x256xf32>
    %333 = vector.broadcast %6 : vector<1x256xf32> to vector<24x256xf32>
    %334 = arith.mulf %332, %333 : vector<24x256xf32>
    %335 = vector.extract_strided_slice %324 {offsets = [0, 17], sizes = [24, 256], strides = [1, 1]} : vector<24x290xf32> to vector<24x256xf32>
    %336 = vector.extract_strided_slice %324 {offsets = [0, 18], sizes = [24, 256], strides = [1, 1]} : vector<24x290xf32> to vector<24x256xf32>
    %337 = vector.broadcast %10 : vector<1x256xf32> to vector<24x256xf32>
    %338 = arith.mulf %336, %337 : vector<24x256xf32>
    %339 = vector.extract_strided_slice %324 {offsets = [0, 32], sizes = [24, 256], strides = [1, 1]} : vector<24x290xf32> to vector<24x256xf32>
    %340 = vector.broadcast %6 : vector<1x256xf32> to vector<24x256xf32>
    %341 = arith.mulf %339, %340 : vector<24x256xf32>
    %342 = vector.extract_strided_slice %324 {offsets = [0, 33], sizes = [24, 256], strides = [1, 1]} : vector<24x290xf32> to vector<24x256xf32>
    %343 = vector.extract_strided_slice %324 {offsets = [0, 34], sizes = [24, 256], strides = [1, 1]} : vector<24x290xf32> to vector<24x256xf32>
    %344 = vector.broadcast %10 : vector<1x256xf32> to vector<24x256xf32>
    %345 = arith.mulf %343, %344 : vector<24x256xf32>
    %346 = tpu.concatenate %327, %328, %331, %334, %335, %338, %341, %342, %345 in 0 : vector<24x256xf32>, vector<24x256xf32>, vector<24x256xf32>, vector<24x256xf32>, vector<24x256xf32>, vector<24x256xf32>, vector<24x256xf32>, vector<24x256xf32>, vector<24x256xf32> -> vector<216x256xf32>
    %347 = arith.truncf %346 : vector<216x256xf32> to vector<216x256xbf16>
    %c0_77 = arith.constant 0 : index
    %c0_78 = arith.constant 0 : index
    %348 = vector.load %arg18[%c0_77, %c0_78] : memref<3x216xbf16, #tpu.memory_space<vmem>>, vector<3x216xbf16>
    %cst_79 = arith.constant dense<0.000000e+00> : vector<3x256xf32>
    %349 = tpu.matmul %348, %347, %cst_79 {dimension_numbers = #tpu.dot_dimension_numbers<[1], [0], [0], [1], [0, 0, 1, 1], [], []>} : vector<3x216xbf16>, vector<216x256xbf16>, vector<3x256xf32> -> vector<3x256xf32>
    %c0_80 = arith.constant 0 : index
    %c0_81 = arith.constant 0 : index
    %350 = vector.load %arg19[%c0_80, %c0_81] : memref<3x1xf32, #tpu.memory_space<vmem>>, vector<3x1xf32>
    %351 = vector.broadcast %350 : vector<3x1xf32> to vector<3x256xf32>
    %352 = arith.addf %349, %351 : vector<3x256xf32>
    %cst_82 = arith.constant 0.000000e+00 : f32
    %353 = vector.broadcast %cst_82 : f32 to vector<3x256xf32>
    %354 = arith.maximumf %352, %353 : vector<3x256xf32>
    %355 = arith.addf %354, %66 : vector<3x256xf32>
    %c0_83 = arith.constant 0 : index
    %c0_84 = arith.constant 0 : index
    %c0_85 = arith.constant 0 : index
    %356 = vector.load %arg24[%c0_83, %c0_84, %c0_85] : memref<1x3x256xf32, #tpu.memory_space<vmem>>, vector<1x3x256xf32>
    %357 = vector.shape_cast %356 : vector<1x3x256xf32> to vector<3x256xf32>
    %358 = vector.shape_cast %355 : vector<3x256xf32> to vector<1x3x256xf32>
    tpu.vector_store %arg24[%c0_83, %c0_84, %c0_85], %358 {strides = array<i32>} : memref<1x3x256xf32, #tpu.memory_space<vmem>>, vector<1x3x256xf32>,
    return
  }
  func.func @transform_0(%arg0: i32) -> (i32, i32, i32) {
    %c0_i32 = arith.constant 0 : i32
    %c0_i32_0 = arith.constant 0 : i32
    %c0_i32_1 = arith.constant 0 : i32
    return %arg0, %c0_i32, %c0_i32_0 : i32, i32, i32
  }
  func.func @transform_1(%arg0: i32) -> (i32, i32) {
    %c0_i32 = arith.constant 0 : i32
    %c0_i32_0 = arith.constant 0 : i32
    %c0_i32_1 = arith.constant 0 : i32
    return %c0_i32, %c0_i32_0 : i32, i32
  }
  func.func @transform_2(%arg0: i32) -> (i32, i32) {
    %c0_i32 = arith.constant 0 : i32
    %c0_i32_0 = arith.constant 0 : i32
    %c0_i32_1 = arith.constant 0 : i32
    return %c0_i32, %c0_i32_0 : i32, i32
  }
  func.func @transform_3(%arg0: i32) -> (i32, i32) {
    %c0_i32 = arith.constant 0 : i32
    %c0_i32_0 = arith.constant 0 : i32
    %c0_i32_1 = arith.constant 0 : i32
    return %c0_i32, %c0_i32_0 : i32, i32
  }
  func.func @transform_4(%arg0: i32) -> (i32, i32) {
    %c0_i32 = arith.constant 0 : i32
    %c0_i32_0 = arith.constant 0 : i32
    %c0_i32_1 = arith.constant 0 : i32
    return %c0_i32, %c0_i32_0 : i32, i32
  }
  func.func @transform_5(%arg0: i32) -> (i32, i32) {
    %c0_i32 = arith.constant 0 : i32
    %c0_i32_0 = arith.constant 0 : i32
    %c0_i32_1 = arith.constant 0 : i32
    return %c0_i32, %c0_i32_0 : i32, i32
  }
  func.func @transform_6(%arg0: i32) -> (i32, i32) {
    %c0_i32 = arith.constant 0 : i32
    %c0_i32_0 = arith.constant 0 : i32
    %c0_i32_1 = arith.constant 0 : i32
    return %c0_i32, %c0_i32_0 : i32, i32
  }
  func.func @transform_7(%arg0: i32) -> (i32, i32) {
    %c0_i32 = arith.constant 0 : i32
    %c0_i32_0 = arith.constant 0 : i32
    %c0_i32_1 = arith.constant 0 : i32
    return %c0_i32, %c0_i32_0 : i32, i32
  }
  func.func @transform_8(%arg0: i32) -> (i32, i32) {
    %c0_i32 = arith.constant 0 : i32
    %c0_i32_0 = arith.constant 0 : i32
    %c0_i32_1 = arith.constant 0 : i32
    return %c0_i32, %c0_i32_0 : i32, i32
  }
  func.func @transform_9(%arg0: i32) -> (i32, i32) {
    %c0_i32 = arith.constant 0 : i32
    %c0_i32_0 = arith.constant 0 : i32
    %c0_i32_1 = arith.constant 0 : i32
    return %c0_i32, %c0_i32_0 : i32, i32
  }
  func.func @transform_10(%arg0: i32) -> (i32, i32) {
    %c0_i32 = arith.constant 0 : i32
    %c0_i32_0 = arith.constant 0 : i32
    %c0_i32_1 = arith.constant 0 : i32
    return %c0_i32, %c0_i32_0 : i32, i32
  }
  func.func @transform_11(%arg0: i32) -> (i32, i32) {
    %c0_i32 = arith.constant 0 : i32
    %c0_i32_0 = arith.constant 0 : i32
    %c0_i32_1 = arith.constant 0 : i32
    return %c0_i32, %c0_i32_0 : i32, i32
  }
  func.func @transform_12(%arg0: i32) -> (i32, i32) {
    %c0_i32 = arith.constant 0 : i32
    %c0_i32_0 = arith.constant 0 : i32
    %c0_i32_1 = arith.constant 0 : i32
    return %c0_i32, %c0_i32_0 : i32, i32
  }
  func.func @transform_13(%arg0: i32) -> (i32, i32) {
    %c0_i32 = arith.constant 0 : i32
    %c0_i32_0 = arith.constant 0 : i32
    %c0_i32_1 = arith.constant 0 : i32
    return %c0_i32, %c0_i32_0 : i32, i32
  }
  func.func @transform_14(%arg0: i32) -> (i32, i32) {
    %c0_i32 = arith.constant 0 : i32
    %c0_i32_0 = arith.constant 0 : i32
    %c0_i32_1 = arith.constant 0 : i32
    return %c0_i32, %c0_i32_0 : i32, i32
  }
  func.func @transform_15(%arg0: i32) -> (i32, i32) {
    %c0_i32 = arith.constant 0 : i32
    %c0_i32_0 = arith.constant 0 : i32
    %c0_i32_1 = arith.constant 0 : i32
    return %c0_i32, %c0_i32_0 : i32, i32
  }
  func.func @transform_16(%arg0: i32) -> (i32, i32) {
    %c0_i32 = arith.constant 0 : i32
    %c0_i32_0 = arith.constant 0 : i32
    %c0_i32_1 = arith.constant 0 : i32
    return %c0_i32, %c0_i32_0 : i32, i32
  }
  func.func @transform_17(%arg0: i32) -> (i32, i32) {
    %c0_i32 = arith.constant 0 : i32
    %c0_i32_0 = arith.constant 0 : i32
    %c0_i32_1 = arith.constant 0 : i32
    return %c0_i32, %c0_i32_0 : i32, i32
  }
  func.func @transform_18(%arg0: i32) -> (i32, i32) {
    %c0_i32 = arith.constant 0 : i32
    %c0_i32_0 = arith.constant 0 : i32
    %c0_i32_1 = arith.constant 0 : i32
    return %c0_i32, %c0_i32_0 : i32, i32
  }
  func.func @transform_19(%arg0: i32) -> (i32, i32) {
    %c0_i32 = arith.constant 0 : i32
    %c0_i32_0 = arith.constant 0 : i32
    %c0_i32_1 = arith.constant 0 : i32
    return %c0_i32, %c0_i32_0 : i32, i32
  }
  func.func @transform_20(%arg0: i32) -> (i32, i32) {
    %c0_i32 = arith.constant 0 : i32
    %c0_i32_0 = arith.constant 0 : i32
    %c0_i32_1 = arith.constant 0 : i32
    return %c0_i32, %c0_i32_0 : i32, i32
  }
  func.func @transform_21(%arg0: i32) -> (i32, i32) {
    %c0_i32 = arith.constant 0 : i32
    %c0_i32_0 = arith.constant 0 : i32
    %c0_i32_1 = arith.constant 0 : i32
    return %c0_i32, %c0_i32_0 : i32, i32
  }
  func.func @transform_22(%arg0: i32) -> (i32, i32) {
    %c0_i32 = arith.constant 0 : i32
    %c0_i32_0 = arith.constant 0 : i32
    %c0_i32_1 = arith.constant 0 : i32
    return %c0_i32, %c0_i32_0 : i32, i32
  }
  func.func @transform_23(%arg0: i32) -> (i32, i32, i32) {
    %c0_i32 = arith.constant 0 : i32
    %c0_i32_0 = arith.constant 0 : i32
    %c0_i32_1 = arith.constant 0 : i32
    return %arg0, %c0_i32, %c0_i32_0 : i32, i32, i32
  }
}

</mosaic_0001>

<llo_original>
// kernel: cpm2_forward.1
$region0: #{cpm2_forward.1}
  #allocation0 [shape = 'u32[]', space=smem, size = 0x4, offset = 0x4, fixed_abs, tag = 'smem constant byte address 0x4 - core index']
  #allocation1 [shape = 'u32[144,128]{1,0:T(1,128)}', space=vmem, size = 0x12000, scoped, tag = 'internal scratch']
  %s0 = inlined_call_operand.vmem [shape: f32[2,3,256], index: 0, kind: input, shape index: {}]
  %s1 = inlined_call_operand.vmem [shape: bf16[3,27], index: 1, kind: input, shape index: {}]
  %s2 = inlined_call_operand.vmem [shape: f32[3,1], index: 2, kind: input, shape index: {}]
  %s3 = inlined_call_operand.vmem [shape: bf16[12,27], index: 3, kind: input, shape index: {}]
  %s4 = inlined_call_operand.vmem [shape: f32[12,1], index: 4, kind: input, shape index: {}]
  %s5 = inlined_call_operand.vmem [shape: bf16[12,108], index: 5, kind: input, shape index: {}]
  %s6 = inlined_call_operand.vmem [shape: f32[12,1], index: 6, kind: input, shape index: {}]
  %s7 = inlined_call_operand.vmem [shape: bf16[12,108], index: 7, kind: input, shape index: {}]
  %s8 = inlined_call_operand.vmem [shape: f32[12,1], index: 8, kind: input, shape index: {}]
  %s9 = inlined_call_operand.vmem [shape: bf16[12,108], index: 9, kind: input, shape index: {}]
  %s10 = inlined_call_operand.vmem [shape: f32[12,1], index: 10, kind: input, shape index: {}]
  %s11 = inlined_call_operand.vmem [shape: bf16[12,216], index: 11, kind: input, shape index: {}]
  %s12 = inlined_call_operand.vmem [shape: f32[12,1], index: 12, kind: input, shape index: {}]
  %s13 = inlined_call_operand.vmem [shape: bf16[12,216], index: 13, kind: input, shape index: {}]
  %s14 = inlined_call_operand.vmem [shape: f32[12,1], index: 14, kind: input, shape index: {}]
  %s15 = inlined_call_operand.vmem [shape: bf16[12,216], index: 15, kind: input, shape index: {}]
  %s16 = inlined_call_operand.vmem [shape: f32[12,1], index: 16, kind: input, shape index: {}]
  %s17 = inlined_call_operand.vmem [shape: bf16[3,216], index: 17, kind: input, shape index: {}]
  %s18 = inlined_call_operand.vmem [shape: f32[3,1], index: 18, kind: input, shape index: {}]
  %s19 = inlined_call_operand.vmem [shape: bf16[256,64], index: 19, kind: input, shape index: {}]
  %s20 = inlined_call_operand.vmem [shape: bf16[64,16], index: 20, kind: input, shape index: {}]
  %s21 = inlined_call_operand.vmem [shape: bf16[16,64], index: 21, kind: input, shape index: {}]
  %s22 = inlined_call_operand.vmem [shape: bf16[64,256], index: 22, kind: input, shape index: {}]
  %s23 = inlined_call_operand.vmem [shape: f32[2,3,256], index: 23, kind: output, shape index: {}]
  %s24 = sld [smem:[#allocation0]]
  $region125: #{cpm2_forward.1} parent=0
    _
  %s26 = ssub.s32 1, %s24
  %s27 = scalar_select 0, %s26, %s24
  loop: start=0, step=1, limit=4
  $region2: #{cpm2_forward.1} parent=0 // loop_pre_header
    _
  $region3: #{cpm2_forward.1} parent=0 // loop_header
    %s29 = sphi 0, %s33
    %p30 = scmp.ge.s32.totalorder %s29, 4
    %s39 = sphi 0, %s41
    %s42 = sphi 0, %s39
    %s43 = sphi 0, %s42
    %s59 = sphi 0, %s43
    %s63 = sphi 0, %s63
    %s65 = sphi 0, %s63
    %s66 = sphi 0, %s65
    %s80 = sphi 0, %s66
    %s84 = sphi 0, %s84
    %s86 = sphi 0, %s84
    %s87 = sphi 0, %s86
    %s101 = sphi 0, %s87
    %s105 = sphi 0, %s105
    %s107 = sphi 0, %s105
    %s108 = sphi 0, %s107
    %s122 = sphi 0, %s108
    %s126 = sphi 0, %s126
    %s128 = sphi 0, %s126
    %s129 = sphi 0, %s128
    %s143 = sphi 0, %s129
    %s147 = sphi 0, %s147
    %s149 = sphi 0, %s147
    %s150 = sphi 0, %s149
    %s164 = sphi 0, %s150
    %s168 = sphi 0, %s168
    %s170 = sphi 0, %s168
    %s171 = sphi 0, %s170
    %s185 = sphi 0, %s171
    %s189 = sphi 0, %s189
    %s191 = sphi 0, %s189
    %s192 = sphi 0, %s191
    %s206 = sphi 0, %s192
    %s210 = sphi 0, %s210
    %s212 = sphi 0, %s210
    %s213 = sphi 0, %s212
    %s227 = sphi 0, %s213
    %s231 = sphi 0, %s231
    %s233 = sphi 0, %s231
    %s234 = sphi 0, %s233
    %s248 = sphi 0, %s234
    %s252 = sphi 0, %s252
    %s254 = sphi 0, %s252
    %s255 = sphi 0, %s254
    %s269 = sphi 0, %s255
    %s273 = sphi 0, %s273
    %s275 = sphi 0, %s273
    %s276 = sphi 0, %s275
    %s290 = sphi 0, %s276
    %s294 = sphi 0, %s294
    %s296 = sphi 0, %s294
    %s297 = sphi 0, %s296
    %s311 = sphi 0, %s297
    %s315 = sphi 0, %s315
    %s317 = sphi 0, %s315
    %s318 = sphi 0, %s317
    %s332 = sphi 0, %s318
    %s336 = sphi 0, %s336
    %s338 = sphi 0, %s336
    %s339 = sphi 0, %s338
    %s353 = sphi 0, %s339
    %s357 = sphi 0, %s357
    %s359 = sphi 0, %s357
    %s360 = sphi 0, %s359
    %s374 = sphi 0, %s360
    %s378 = sphi 0, %s378
    %s380 = sphi 0, %s378
    %s381 = sphi 0, %s380
    %s395 = sphi 0, %s381
    %s399 = sphi 0, %s399
    %s401 = sphi 0, %s399
    %s402 = sphi 0, %s401
    %s416 = sphi 0, %s402
    %s420 = sphi 0, %s420
    %s422 = sphi 0, %s420
    %s423 = sphi 0, %s422
    %s437 = sphi 0, %s423
    %s441 = sphi 0, %s441
    %s443 = sphi 0, %s441
    %s444 = sphi 0, %s443
    %s458 = sphi 0, %s444
    %s462 = sphi 0, %s462
    %s464 = sphi 0, %s462
    %s465 = sphi 0, %s464
    %s479 = sphi 0, %s465
    %s483 = sphi 0, %s483
    %s485 = sphi 0, %s483
    %s486 = sphi 0, %s485
    %s500 = sphi 0, %s486
    %s504 = sphi 0, %s504
    %s506 = sphi 0, %s504
    %s507 = sphi 0, %s506
    %s521 = sphi 0, %s507
    %s527 = sphi 0, %s529
    %s530 = sphi 0, %s527
    %s531 = sphi 0, %s530
    %s547 = sphi 0, %s531
  $region4: #{cpm2_forward.1} parent=0 // loop_header_branch
    %32 = sbr.rel (%p30) target = $region8
  $region5: #{cpm2_forward.1} parent=0 // loop_body
    %s34 = ssub.s32 %s29, 1
    %s35 = ssub.s32 %s29, 2
    %s36 = sadd.s32 %s29, 1
    %s37 = ssub.s32 %s29, %s36
    %p38 = scmp.eq.s32.totalorder %s37, 0
    %s40 = sadd.s32 %s39, 1
    %s41 = scalar_select %p38, %s39, %s40
    %p44 = pneg %p38
    %p45 = scmp.eq.s32.totalorder %s29, 1
    %p46 = por %p44, %p45
    %p47 = scmp.ne.s32.totalorder %s39, %s42
    %p48 = scmp.eq.s32.totalorder %s29, 0
    %p49 = por %p47, %p48
    %p50 = scmp.ne.s32.totalorder %s39, %s42
    %p51 = scmp.eq.s32.totalorder %s34, 1
    %p52 = por %p50, %p51
    %p53 = scmp.ne.s32.totalorder %s42, %s43
    %p54 = scmp.eq.s32.totalorder %s34, 0
    %p55 = por %p53, %p54
    %p56 = scmp.ne.s32.totalorder %s42, %s43
    %p57 = scmp.eq.s32.totalorder %s35, 1
    %p58 = por %p56, %p57
    %p60 = scmp.ne.s32.totalorder %s43, %s59
    %p61 = scmp.eq.s32.totalorder %s35, 0
    %p62 = por %p60, %p61
    %s64 = sadd.s32 %s63, 1
    %p67 = scmp.eq.s32.totalorder %s29, 1
    %p68 = scmp.ne.s32.totalorder %s63, %s65
    %p69 = scmp.eq.s32.totalorder %s29, 0
    %p70 = por %p68, %p69
    %p71 = scmp.ne.s32.totalorder %s63, %s65
    %p72 = scmp.eq.s32.totalorder %s34, 1
    %p73 = por %p71, %p72
    %p74 = scmp.ne.s32.totalorder %s65, %s66
    %p75 = scmp.eq.s32.totalorder %s34, 0
    %p76 = por %p74, %p75
    %p77 = scmp.ne.s32.totalorder %s65, %s66
    %p78 = scmp.eq.s32.totalorder %s35, 1
    %p79 = por %p77, %p78
    %p81 = scmp.ne.s32.totalorder %s66, %s80
    %p82 = scmp.eq.s32.totalorder %s35, 0
    %p83 = por %p81, %p82
    %s85 = sadd.s32 %s84, 1
    %p88 = scmp.eq.s32.totalorder %s29, 1
    %p89 = scmp.ne.s32.totalorder %s84, %s86
    %p90 = scmp.eq.s32.totalorder %s29, 0
    %p91 = por %p89, %p90
    %p92 = scmp.ne.s32.totalorder %s84, %s86
    %p93 = scmp.eq.s32.totalorder %s34, 1
    %p94 = por %p92, %p93
    %p95 = scmp.ne.s32.totalorder %s86, %s87
    %p96 = scmp.eq.s32.totalorder %s34, 0
    %p97 = por %p95, %p96
    %p98 = scmp.ne.s32.totalorder %s86, %s87
    %p99 = scmp.eq.s32.totalorder %s35, 1
    %p100 = por %p98, %p99
    %p102 = scmp.ne.s32.totalorder %s87, %s101
    %p103 = scmp.eq.s32.totalorder %s35, 0
    %p104 = por %p102, %p103
    %s106 = sadd.s32 %s105, 1
    %p109 = scmp.eq.s32.totalorder %s29, 1
    %p110 = scmp.ne.s32.totalorder %s105, %s107
    %p111 = scmp.eq.s32.totalorder %s29, 0
    %p112 = por %p110, %p111
    %p113 = scmp.ne.s32.totalorder %s105, %s107
    %p114 = scmp.eq.s32.totalorder %s34, 1
    %p115 = por %p113, %p114
    %p116 = scmp.ne.s32.totalorder %s107, %s108
    %p117 = scmp.eq.s32.totalorder %s34, 0
    %p118 = por %p116, %p117
    %p119 = scmp.ne.s32.totalorder %s107, %s108
    %p120 = scmp.eq.s32.totalorder %s35, 1
    %p121 = por %p119, %p120
    %p123 = scmp.ne.s32.totalorder %s108, %s122
    %p124 = scmp.eq.s32.totalorder %s35, 0
    %p125 = por %p123, %p124
    %s127 = sadd.s32 %s126, 1
    %p130 = scmp.eq.s32.totalorder %s29, 1
    %p131 = scmp.ne.s32.totalorder %s126, %s128
    %p132 = scmp.eq.s32.totalorder %s29, 0
    %p133 = por %p131, %p132
    %p134 = scmp.ne.s32.totalorder %s126, %s128
    %p135 = scmp.eq.s32.totalorder %s34, 1
    %p136 = por %p134, %p135
    %p137 = scmp.ne.s32.totalorder %s128, %s129
    %p138 = scmp.eq.s32.totalorder %s34, 0
    %p139 = por %p137, %p138
    %p140 = scmp.ne.s32.totalorder %s128, %s129
    %p141 = scmp.eq.s32.totalorder %s35, 1
    %p142 = por %p140, %p141
    %p144 = scmp.ne.s32.totalorder %s129, %s143
    %p145 = scmp.eq.s32.totalorder %s35, 0
    %p146 = por %p144, %p145
    %s148 = sadd.s32 %s147, 1
    %p151 = scmp.eq.s32.totalorder %s29, 1
    %p152 = scmp.ne.s32.totalorder %s147, %s149
    %p153 = scmp.eq.s32.totalorder %s29, 0
    %p154 = por %p152, %p153
    %p155 = scmp.ne.s32.totalorder %s147, %s149
    %p156 = scmp.eq.s32.totalorder %s34, 1
    %p157 = por %p155, %p156
    %p158 = scmp.ne.s32.totalorder %s149, %s150
    %p159 = scmp.eq.s32.totalorder %s34, 0
    %p160 = por %p158, %p159
    %p161 = scmp.ne.s32.totalorder %s149, %s150
    %p162 = scmp.eq.s32.totalorder %s35, 1
    %p163 = por %p161, %p162
    %p165 = scmp.ne.s32.totalorder %s150, %s164
    %p166 = scmp.eq.s32.totalorder %s35, 0
    %p167 = por %p165, %p166
    %s169 = sadd.s32 %s168, 1
    %p172 = scmp.eq.s32.totalorder %s29, 1
    %p173 = scmp.ne.s32.totalorder %s168, %s170
    %p174 = scmp.eq.s32.totalorder %s29, 0
    %p175 = por %p173, %p174
    %p176 = scmp.ne.s32.totalorder %s168, %s170
    %p177 = scmp.eq.s32.totalorder %s34, 1
    %p178 = por %p176, %p177
    %p179 = scmp.ne.s32.totalorder %s170, %s171
    %p180 = scmp.eq.s32.totalorder %s34, 0
    %p181 = por %p179, %p180
    %p182 = scmp.ne.s32.totalorder %s170, %s171
    %p183 = scmp.eq.s32.totalorder %s35, 1
    %p184 = por %p182, %p183
    %p186 = scmp.ne.s32.totalorder %s171, %s185
    %p187 = scmp.eq.s32.totalorder %s35, 0
    %p188 = por %p186, %p187
    %s190 = sadd.s32 %s189, 1
    %p193 = scmp.eq.s32.totalorder %s29, 1
    %p194 = scmp.ne.s32.totalorder %s189, %s191
    %p195 = scmp.eq.s32.totalorder %s29, 0
    %p196 = por %p194, %p195
    %p197 = scmp.ne.s32.totalorder %s189, %s191
    %p198 = scmp.eq.s32.totalorder %s34, 1
    %p199 = por %p197, %p198
    %p200 = scmp.ne.s32.totalorder %s191, %s192
    %p201 = scmp.eq.s32.totalorder %s34, 0
    %p202 = por %p200, %p201
    %p203 = scmp.ne.s32.totalorder %s191, %s192
    %p204 = scmp.eq.s32.totalorder %s35, 1
    %p205 = por %p203, %p204
    %p207 = scmp.ne.s32.totalorder %s192, %s206
    %p208 = scmp.eq.s32.totalorder %s35, 0
    %p209 = por %p207, %p208
    %s211 = sadd.s32 %s210, 1
    %p214 = scmp.eq.s32.totalorder %s29, 1
    %p215 = scmp.ne.s32.totalorder %s210, %s212
    %p216 = scmp.eq.s32.totalorder %s29, 0
    %p217 = por %p215, %p216
    %p218 = scmp.ne.s32.totalorder %s210, %s212
    %p219 = scmp.eq.s32.totalorder %s34, 1
    %p220 = por %p218, %p219
    %p221 = scmp.ne.s32.totalorder %s212, %s213
    %p222 = scmp.eq.s32.totalorder %s34, 0
    %p223 = por %p221, %p222
    %p224 = scmp.ne.s32.totalorder %s212, %s213
    %p225 = scmp.eq.s32.totalorder %s35, 1
    %p226 = por %p224, %p225
    %p228 = scmp.ne.s32.totalorder %s213, %s227
    %p229 = scmp.eq.s32.totalorder %s35, 0
    %p230 = por %p228, %p229
    %s232 = sadd.s32 %s231, 1
    %p235 = scmp.eq.s32.totalorder %s29, 1
    %p236 = scmp.ne.s32.totalorder %s231, %s233
    %p237 = scmp.eq.s32.totalorder %s29, 0
    %p238 = por %p236, %p237
    %p239 = scmp.ne.s32.totalorder %s231, %s233
    %p240 = scmp.eq.s32.totalorder %s34, 1
    %p241 = por %p239, %p240
    %p242 = scmp.ne.s32.totalorder %s233, %s234
    %p243 = scmp.eq.s32.totalorder %s34, 0
    %p244 = por %p242, %p243
    %p245 = scmp.ne.s32.totalorder %s233, %s234
    %p246 = scmp.eq.s32.totalorder %s35, 1
    %p247 = por %p245, %p246
    %p249 = scmp.ne.s32.totalorder %s234, %s248
    %p250 = scmp.eq.s32.totalorder %s35, 0
    %p251 = por %p249, %p250
    %s253 = sadd.s32 %s252, 1
    %p256 = scmp.eq.s32.totalorder %s29, 1
    %p257 = scmp.ne.s32.totalorder %s252, %s254
    %p258 = scmp.eq.s32.totalorder %s29, 0
    %p259 = por %p257, %p258
    %p260 = scmp.ne.s32.totalorder %s252, %s254
    %p261 = scmp.eq.s32.totalorder %s34, 1
    %p262 = por %p260, %p261
    %p263 = scmp.ne.s32.totalorder %s254, %s255
    %p264 = scmp.eq.s32.totalorder %s34, 0
    %p265 = por %p263, %p264
    %p266 = scmp.ne.s32.totalorder %s254, %s255
    %p267 = scmp.eq.s32.totalorder %s35, 1
    %p268 = por %p266, %p267
    %p270 = scmp.ne.s32.totalorder %s255, %s269
    %p271 = scmp.eq.s32.totalorder %s35, 0
    %p272 = por %p270, %p271
    %s274 = sadd.s32 %s273, 1
    %p277 = scmp.eq.s32.totalorder %s29, 1
    %p278 = scmp.ne.s32.totalorder %s273, %s275
    %p279 = scmp.eq.s32.totalorder %s29, 0
    %p280 = por %p278, %p279
    %p281 = scmp.ne.s32.totalorder %s273, %s275
    %p282 = scmp.eq.s32.totalorder %s34, 1
    %p283 = por %p281, %p282
    %p284 = scmp.ne.s32.totalorder %s275, %s276
    %p285 = scmp.eq.s32.totalorder %s34, 0
    %p286 = por %p284, %p285
    %p287 = scmp.ne.s32.totalorder %s275, %s276
    %p288 = scmp.eq.s32.totalorder %s35, 1
    %p289 = por %p287, %p288
    %p291 = scmp.ne.s32.totalorder %s276, %s290
    %p292 = scmp.eq.s32.totalorder %s35, 0
    %p293 = por %p291, %p292
    %s295 = sadd.s32 %s294, 1
    %p298 = scmp.eq.s32.totalorder %s29, 1
    %p299 = scmp.ne.s32.totalorder %s294, %s296
    %p300 = scmp.eq.s32.totalorder %s29, 0
    %p301 = por %p299, %p300
    %p302 = scmp.ne.s32.totalorder %s294, %s296
    %p303 = scmp.eq.s32.totalorder %s34, 1
    %p304 = por %p302, %p303
    %p305 = scmp.ne.s32.totalorder %s296, %s297
    %p306 = scmp.eq.s32.totalorder %s34, 0
    %p307 = por %p305, %p306
    %p308 = scmp.ne.s32.totalorder %s296, %s297
    %p309 = scmp.eq.s32.totalorder %s35, 1
    %p310 = por %p308, %p309
    %p312 = scmp.ne.s32.totalorder %s297, %s311
    %p313 = scmp.eq.s32.totalorder %s35, 0
    %p314 = por %p312, %p313
    %s316 = sadd.s32 %s315, 1
    %p319 = scmp.eq.s32.totalorder %s29, 1
    %p320 = scmp.ne.s32.totalorder %s315, %s317
    %p321 = scmp.eq.s32.totalorder %s29, 0
    %p322 = por %p320, %p321
    %p323 = scmp.ne.s32.totalorder %s315, %s317
    %p324 = scmp.eq.s32.totalorder %s34, 1
    %p325 = por %p323, %p324
    %p326 = scmp.ne.s32.totalorder %s317, %s318
    %p327 = scmp.eq.s32.totalorder %s34, 0
    %p328 = por %p326, %p327
    %p329 = scmp.ne.s32.totalorder %s317, %s318
    %p330 = scmp.eq.s32.totalorder %s35, 1
    %p331 = por %p329, %p330
    %p333 = scmp.ne.s32.totalorder %s318, %s332
    %p334 = scmp.eq.s32.totalorder %s35, 0
    %p335 = por %p333, %p334
    %s337 = sadd.s32 %s336, 1
    %p340 = scmp.eq.s32.totalorder %s29, 1
    %p341 = scmp.ne.s32.totalorder %s336, %s338
    %p342 = scmp.eq.s32.totalorder %s29, 0
    %p343 = por %p341, %p342
    %p344 = scmp.ne.s32.totalorder %s336, %s338
    %p345 = scmp.eq.s32.totalorder %s34, 1
    %p346 = por %p344, %p345
    %p347 = scmp.ne.s32.totalorder %s338, %s339
    %p348 = scmp.eq.s32.totalorder %s34, 0
    %p349 = por %p347, %p348
    %p350 = scmp.ne.s32.totalorder %s338, %s339
    %p351 = scmp.eq.s32.totalorder %s35, 1
    %p352 = por %p350, %p351
    %p354 = scmp.ne.s32.totalorder %s339, %s353
    %p355 = scmp.eq.s32.totalorder %s35, 0
    %p356 = por %p354, %p355
    %s358 = sadd.s32 %s357, 1
    %p361 = scmp.eq.s32.totalorder %s29, 1
    %p362 = scmp.ne.s32.totalorder %s357, %s359
    %p363 = scmp.eq.s32.totalorder %s29, 0
    %p364 = por %p362, %p363
    %p365 = scmp.ne.s32.totalorder %s357, %s359
    %p366 = scmp.eq.s32.totalorder %s34, 1
    %p367 = por %p365, %p366
    %p368 = scmp.ne.s32.totalorder %s359, %s360
    %p369 = scmp.eq.s32.totalorder %s34, 0
    %p370 = por %p368, %p369
    %p371 = scmp.ne.s32.totalorder %s359, %s360
    %p372 = scmp.eq.s32.totalorder %s35, 1
    %p373 = por %p371, %p372
    %p375 = scmp.ne.s32.totalorder %s360, %s374
    %p376 = scmp.eq.s32.totalorder %s35, 0
    %p377 = por %p375, %p376
    %s379 = sadd.s32 %s378, 1
    %p382 = scmp.eq.s32.totalorder %s29, 1
    %p383 = scmp.ne.s32.totalorder %s378, %s380
    %p384 = scmp.eq.s32.totalorder %s29, 0
    %p385 = por %p383, %p384
    %p386 = scmp.ne.s32.totalorder %s378, %s380
    %p387 = scmp.eq.s32.totalorder %s34, 1
    %p388 = por %p386, %p387
    %p389 = scmp.ne.s32.totalorder %s380, %s381
    %p390 = scmp.eq.s32.totalorder %s34, 0
    %p391 = por %p389, %p390
    %p392 = scmp.ne.s32.totalorder %s380, %s381
    %p393 = scmp.eq.s32.totalorder %s35, 1
    %p394 = por %p392, %p393
    %p396 = scmp.ne.s32.totalorder %s381, %s395
    %p397 = scmp.eq.s32.totalorder %s35, 0
    %p398 = por %p396, %p397
    %s400 = sadd.s32 %s399, 1
    %p403 = scmp.eq.s32.totalorder %s29, 1
    %p404 = scmp.ne.s32.totalorder %s399, %s401
    %p405 = scmp.eq.s32.totalorder %s29, 0
    %p406 = por %p404, %p405
    %p407 = scmp.ne.s32.totalorder %s399, %s401
    %p408 = scmp.eq.s32.totalorder %s34, 1
    %p409 = por %p407, %p408
    %p410 = scmp.ne.s32.totalorder %s401, %s402
    %p411 = scmp.eq.s32.totalorder %s34, 0
    %p412 = por %p410, %p411
    %p413 = scmp.ne.s32.totalorder %s401, %s402
    %p414 = scmp.eq.s32.totalorder %s35, 1
    %p415 = por %p413, %p414
    %p417 = scmp.ne.s32.totalorder %s402, %s416
    %p418 = scmp.eq.s32.totalorder %s35, 0
    %p419 = por %p417, %p418
    %s421 = sadd.s32 %s420, 1
    %p424 = scmp.eq.s32.totalorder %s29, 1
    %p425 = scmp.ne.s32.totalorder %s420, %s422
    %p426 = scmp.eq.s32.totalorder %s29, 0
    %p427 = por %p425, %p426
    %p428 = scmp.ne.s32.totalorder %s420, %s422
    %p429 = scmp.eq.s32.totalorder %s34, 1
    %p430 = por %p428, %p429
    %p431 = scmp.ne.s32.totalorder %s422, %s423
    %p432 = scmp.eq.s32.totalorder %s34, 0
    %p433 = por %p431, %p432
    %p434 = scmp.ne.s32.totalorder %s422, %s423
    %p435 = scmp.eq.s32.totalorder %s35, 1
    %p436 = por %p434, %p435
    %p438 = scmp.ne.s32.totalorder %s423, %s437
    %p439 = scmp.eq.s32.totalorder %s35, 0
    %p440 = por %p438, %p439
    %s442 = sadd.s32 %s441, 1
    %p445 = scmp.eq.s32.totalorder %s29, 1
    %p446 = scmp.ne.s32.totalorder %s441, %s443
    %p447 = scmp.eq.s32.totalorder %s29, 0
    %p448 = por %p446, %p447
    %p449 = scmp.ne.s32.totalorder %s441, %s443
    %p450 = scmp.eq.s32.totalorder %s34, 1
    %p451 = por %p449, %p450
    %p452 = scmp.ne.s32.totalorder %s443, %s444
    %p453 = scmp.eq.s32.totalorder %s34, 0
    %p454 = por %p452, %p453
    %p455 = scmp.ne.s32.totalorder %s443, %s444
    %p456 = scmp.eq.s32.totalorder %s35, 1
    %p457 = por %p455, %p456
    %p459 = scmp.ne.s32.totalorder %s444, %s458
    %p460 = scmp.eq.s32.totalorder %s35, 0
    %p461 = por %p459, %p460
    %s463 = sadd.s32 %s462, 1
    %p466 = scmp.eq.s32.totalorder %s29, 1
    %p467 = scmp.ne.s32.totalorder %s462, %s464
    %p468 = scmp.eq.s32.totalorder %s29, 0
    %p469 = por %p467, %p468
    %p470 = scmp.ne.s32.totalorder %s462, %s464
    %p471 = scmp.eq.s32.totalorder %s34, 1
    %p472 = por %p470, %p471
    %p473 = scmp.ne.s32.totalorder %s464, %s465
    %p474 = scmp.eq.s32.totalorder %s34, 0
    %p475 = por %p473, %p474
    %p476 = scmp.ne.s32.totalorder %s464, %s465
    %p477 = scmp.eq.s32.totalorder %s35, 1
    %p478 = por %p476, %p477
    %p480 = scmp.ne.s32.totalorder %s465, %s479
    %p481 = scmp.eq.s32.totalorder %s35, 0
    %p482 = por %p480, %p481
    %s484 = sadd.s32 %s483, 1
    %p487 = scmp.eq.s32.totalorder %s29, 1
    %p488 = scmp.ne.s32.totalorder %s483, %s485
    %p489 = scmp.eq.s32.totalorder %s29, 0
    %p490 = por %p488, %p489
    %p491 = scmp.ne.s32.totalorder %s483, %s485
    %p492 = scmp.eq.s32.totalorder %s34, 1
    %p493 = por %p491, %p492
    %p494 = scmp.ne.s32.totalorder %s485, %s486
    %p495 = scmp.eq.s32.totalorder %s34, 0
    %p496 = por %p494, %p495
    %p497 = scmp.ne.s32.totalorder %s485, %s486
    %p498 = scmp.eq.s32.totalorder %s35, 1
    %p499 = por %p497, %p498
    %p501 = scmp.ne.s32.totalorder %s486, %s500
    %p502 = scmp.eq.s32.totalorder %s35, 0
    %p503 = por %p501, %p502
    %s505 = sadd.s32 %s504, 1
    %p508 = scmp.eq.s32.totalorder %s29, 1
    %p509 = scmp.ne.s32.totalorder %s504, %s506
    %p510 = scmp.eq.s32.totalorder %s29, 0
    %p511 = por %p509, %p510
    %p512 = scmp.ne.s32.totalorder %s504, %s506
    %p513 = scmp.eq.s32.totalorder %s34, 1
    %p514 = por %p512, %p513
    %p515 = scmp.ne.s32.totalorder %s506, %s507
    %p516 = scmp.eq.s32.totalorder %s34, 0
    %p517 = por %p515, %p516
    %p518 = scmp.ne.s32.totalorder %s506, %s507
    %p519 = scmp.eq.s32.totalorder %s35, 1
    %p520 = por %p518, %p519
    %p522 = scmp.ne.s32.totalorder %s507, %s521
    %p523 = scmp.eq.s32.totalorder %s35, 0
    %p524 = por %p522, %p523
    %s525 = ssub.s32 %s29, %s36
    %p526 = scmp.eq.s32.totalorder %s525, 0
    %s528 = sadd.s32 %s527, 1
    %s529 = scalar_select %p526, %s527, %s528
    %p532 = pneg %p526
    %p533 = scmp.eq.s32.totalorder %s29, 1
    %p534 = por %p532, %p533
    %p535 = scmp.ne.s32.totalorder %s527, %s530
    %p536 = scmp.eq.s32.totalorder %s29, 0
    %p537 = por %p535, %p536
    %p538 = scmp.ne.s32.totalorder %s527, %s530
    %p539 = scmp.eq.s32.totalorder %s34, 1
    %p540 = por %p538, %p539
    %p541 = scmp.ne.s32.totalorder %s530, %s531
    %p542 = scmp.eq.s32.totalorder %s34, 0
    %p543 = por %p541, %p542
    %p544 = scmp.ne.s32.totalorder %s530, %s531
    %p545 = scmp.eq.s32.totalorder %s35, 1
    %p546 = por %p544, %p545
    %p548 = scmp.ne.s32.totalorder %s531, %s547
    %p549 = scmp.eq.s32.totalorder %s35, 0
    %p550 = por %p548, %p549
    %p551 = scmp.le.s32.totalorder 1, %s29
    %p552 = scmp.lt.s32.totalorder %s29, 3
    %p553 = pnand %p551, %p552
    %p554 = pneg %p553
    // Predicated region
    $region9: #{cpm2_forward.1} parent=5 // pred_check
      _
    $region10: #{cpm2_forward.1} parent=5 // pred_check_branch
      %556 = sbr.rel (%p553) target = $region12
    $region11: #{cpm2_forward.1} parent=5 // pred_region
      %s557 = ssub.s32 %s29, 1
      // Predicated region
      $region13: #{cpm2_forward.1} parent=11 // pred_check
        %p558 = pneg %p76
      $region14: #{cpm2_forward.1} parent=11 // pred_check_branch
        %560 = sbr.rel (%p558) target = $region16
      $region15: #{cpm2_forward.1} parent=11 // pred_region
        _
      $region16: #{cpm2_forward.1} parent=11 // pred_fallthru
        _
      // Predicated region
      $region17: #{cpm2_forward.1} parent=11 // pred_check
        %p561 = pneg %p97
      $region18: #{cpm2_forward.1} parent=11 // pred_check_branch
        %563 = sbr.rel (%p561) target = $region20
      $region19: #{cpm2_forward.1} parent=11 // pred_region
        _
      $region20: #{cpm2_forward.1} parent=11 // pred_fallthru
        _
      // Predicated region
      $region21: #{cpm2_forward.1} parent=11 // pred_check
        %p564 = pneg %p118
      $region22: #{cpm2_forward.1} parent=11 // pred_check_branch
        %566 = sbr.rel (%p564) target = $region24
      $region23: #{cpm2_forward.1} parent=11 // pred_region
        _
      $region24: #{cpm2_forward.1} parent=11 // pred_fallthru
        _
      // Predicated region
      $region25: #{cpm2_forward.1} parent=11 // pred_check
        %p567 = pneg %p139
      $region26: #{cpm2_forward.1} parent=11 // pred_check_branch
        %569 = sbr.rel (%p567) target = $region28
      $region27: #{cpm2_forward.1} parent=11 // pred_region
        _
      $region28: #{cpm2_forward.1} parent=11 // pred_fallthru
        _
      // Predicated region
      $region29: #{cpm2_forward.1} parent=11 // pred_check
        %p570 = pneg %p160
      $region30: #{cpm2_forward.1} parent=11 // pred_check_branch
        %572 = sbr.rel (%p570) target = $region32
      $region31: #{cpm2_forward.1} parent=11 // pred_region
        _
      $region32: #{cpm2_forward.1} parent=11 // pred_fallthru
        _
      // Predicated region
      $region33: #{cpm2_forward.1} parent=11 // pred_check
        %p573 = pneg %p181
      $region34: #{cpm2_forward.1} parent=11 // pred_check_branch
        %575 = sbr.rel (%p573) target = $region36
      $region35: #{cpm2_forward.1} parent=11 // pred_region
        _
      $region36: #{cpm2_forward.1} parent=11 // pred_fallthru
        _
      // Predicated region
      $region37: #{cpm2_forward.1} parent=11 // pred_check
        %p576 = pneg %p202
      $region38: #{cpm2_forward.1} parent=11 // pred_check_branch
        %578 = sbr.rel (%p576) target = $region40
      $region39: #{cpm2_forward.1} parent=11 // pred_region
        _
      $region40: #{cpm2_forward.1} parent=11 // pred_fallthru
        _
      // Predicated region
      $region41: #{cpm2_forward.1} parent=11 // pred_check
        %p579 = pneg %p223
      $region42: #{cpm2_forward.1} parent=11 // pred_check_branch
        %581 = sbr.rel (%p579) target = $region44
      $region43: #{cpm2_forward.1} parent=11 // pred_region
        _
      $region44: #{cpm2_forward.1} parent=11 // pred_fallthru
        _
      // Predicated region
      $region45: #{cpm2_forward.1} parent=11 // pred_check
        %p582 = pneg %p244
      $region46: #{cpm2_forward.1} parent=11 // pred_check_branch
        %584 = sbr.rel (%p582) target = $region48
      $region47: #{cpm2_forward.1} parent=11 // pred_region
        _
      $region48: #{cpm2_forward.1} parent=11 // pred_fallthru
        _
      // Predicated region
      $region49: #{cpm2_forward.1} parent=11 // pred_check
        %p585 = pneg %p265
      $region50: #{cpm2_forward.1} parent=11 // pred_check_branch
        %587 = sbr.rel (%p585) target = $region52
      $region51: #{cpm2_forward.1} parent=11 // pred_region
        _
      $region52: #{cpm2_forward.1} parent=11 // pred_fallthru
        _
      // Predicated region
      $region53: #{cpm2_forward.1} parent=11 // pred_check
        %p588 = pneg %p286
      $region54: #{cpm2_forward.1} parent=11 // pred_check_branch
        %590 = sbr.rel (%p588) target = $region56
      $region55: #{cpm2_forward.1} parent=11 // pred_region
        _
      $region56: #{cpm2_forward.1} parent=11 // pred_fallthru
        _
      // Predicated region
      $region57: #{cpm2_forward.1} parent=11 // pred_check
        %p591 = pneg %p307
      $region58: #{cpm2_forward.1} parent=11 // pred_check_branch
        %593 = sbr.rel (%p591) target = $region60
      $region59: #{cpm2_forward.1} parent=11 // pred_region
        _
      $region60: #{cpm2_forward.1} parent=11 // pred_fallthru
        _
      // Predicated region
      $region61: #{cpm2_forward.1} parent=11 // pred_check
        %p594 = pneg %p328
      $region62: #{cpm2_forward.1} parent=11 // pred_check_branch
        %596 = sbr.rel (%p594) target = $region64
      $region63: #{cpm2_forward.1} parent=11 // pred_region
        _
      $region64: #{cpm2_forward.1} parent=11 // pred_fallthru
        _
      // Predicated region
      $region65: #{cpm2_forward.1} parent=11 // pred_check
        %p597 = pneg %p349
      $region66: #{cpm2_forward.1} parent=11 // pred_check_branch
        %599 = sbr.rel (%p597) target = $region68
      $region67: #{cpm2_forward.1} parent=11 // pred_region
        _
      $region68: #{cpm2_forward.1} parent=11 // pred_fallthru
        _
      // Predicated region
      $region69: #{cpm2_forward.1} parent=11 // pred_check
        %p600 = pneg %p370
      $region70: #{cpm2_forward.1} parent=11 // pred_check_branch
        %602 = sbr.rel (%p600) target = $region72
      $region71: #{cpm2_forward.1} parent=11 // pred_region
        _
      $region72: #{cpm2_forward.1} parent=11 // pred_fallthru
        _
      // Predicated region
      $region73: #{cpm2_forward.1} parent=11 // pred_check
        %p603 = pneg %p391
      $region74: #{cpm2_forward.1} parent=11 // pred_check_branch
        %605 = sbr.rel (%p603) target = $region76
      $region75: #{cpm2_forward.1} parent=11 // pred_region
        _
      $region76: #{cpm2_forward.1} parent=11 // pred_fallthru
        _
      // Predicated region
      $region77: #{cpm2_forward.1} parent=11 // pred_check
        %p606 = pneg %p412
      $region78: #{cpm2_forward.1} parent=11 // pred_check_branch
        %608 = sbr.rel (%p606) target = $region80
      $region79: #{cpm2_forward.1} parent=11 // pred_region
        _
      $region80: #{cpm2_forward.1} parent=11 // pred_fallthru
        _
      // Predicated region
      $region81: #{cpm2_forward.1} parent=11 // pred_check
        %p609 = pneg %p433
      $region82: #{cpm2_forward.1} parent=11 // pred_check_branch
        %611 = sbr.rel (%p609) target = $region84
      $region83: #{cpm2_forward.1} parent=11 // pred_region
        _
      $region84: #{cpm2_forward.1} parent=11 // pred_fallthru
        _
      // Predicated region
      $region85: #{cpm2_forward.1} parent=11 // pred_check
        %p612 = pneg %p454
      $region86: #{cpm2_forward.1} parent=11 // pred_check_branch
        %614 = sbr.rel (%p612) target = $region88
      $region87: #{cpm2_forward.1} parent=11 // pred_region
        _
      $region88: #{cpm2_forward.1} parent=11 // pred_fallthru
        _
      // Predicated region
      $region89: #{cpm2_forward.1} parent=11 // pred_check
        %p615 = pneg %p475
      $region90: #{cpm2_forward.1} parent=11 // pred_check_branch
        %617 = sbr.rel (%p615) target = $region92
      $region91: #{cpm2_forward.1} parent=11 // pred_region
        _
      $region92: #{cpm2_forward.1} parent=11 // pred_fallthru
        _
      // Predicated region
      $region93: #{cpm2_forward.1} parent=11 // pred_check
        %p618 = pneg %p496
      $region94: #{cpm2_forward.1} parent=11 // pred_check_branch
        %620 = sbr.rel (%p618) target = $region96
      $region95: #{cpm2_forward.1} parent=11 // pred_region
        _
      $region96: #{cpm2_forward.1} parent=11 // pred_fallthru
        _
      // Predicated region
      $region97: #{cpm2_forward.1} parent=11 // pred_check
        %p621 = pneg %p517
      $region98: #{cpm2_forward.1} parent=11 // pred_check_branch
        %623 = sbr.rel (%p621) target = $region100
      $region99: #{cpm2_forward.1} parent=11 // pred_region
        _
      $region100: #{cpm2_forward.1} parent=11 // pred_fallthru
        _
    $region12: #{cpm2_forward.1} parent=5 // pred_fallthru
      _
    %p624 = scmp.lt.s32.totalorder %s29, 2
    // Predicated region
    $region101: #{cpm2_forward.1} parent=5 // pred_check
      %p625 = pneg %p624
    $region102: #{cpm2_forward.1} parent=5 // pred_check_branch
      %627 = sbr.rel (%p625) target = $region104
    $region103: #{cpm2_forward.1} parent=5 // pred_region
      // Predicated region
      $region105: #{cpm2_forward.1} parent=103 // pred_check
        %p628 = pneg %p49
      $region106: #{cpm2_forward.1} parent=103 // pred_check_branch
        %630 = sbr.rel (%p628) target = $region108
      $region107: #{cpm2_forward.1} parent=103 // pred_region
        %p631 = scmp.lt.s32.totalorder %s29, 1
        %s632 = scalar_select %p631, %s29, 1
        %s633 = smul.addr %s632, 2
        %s634 = smul.addr %s633, 4
        %s635 = scalar_lea.vmem %s0, %s634
      $region108: #{cpm2_forward.1} parent=103 // pred_fallthru
        _
    $region104: #{cpm2_forward.1} parent=5 // pred_fallthru
      _
    %p636 = scmp.le.s32.totalorder 1, %s29
    %p637 = scmp.lt.s32.totalorder %s29, 3
    %p638 = pnand %p636, %p637
    %p639 = pneg %p638
    // Predicated region
    $region109: #{cpm2_forward.1} parent=5 // pred_check
      _
    $region110: #{cpm2_forward.1} parent=5 // pred_check_branch
      %641 = sbr.rel (%p638) target = $region112
    $region111: #{cpm2_forward.1} parent=5 // pred_region
      %s642 = ssub.s32 %s29, 1
      %p643 = scmp.lt.s32.totalorder %s34, 1
      %s644 = scalar_select %p643, %s34, 1
      %s645 = smul.addr %s644, 2
      %s646 = smul.addr %s645, 4
      %s647 = scalar_lea.vmem %s0, %s646
      %p648 = pneg %p55
      %p649 = pneg %p52
      %p650 = pneg %p76
      %p651 = pneg %p73
      %p652 = pneg %p97
      %p653 = pneg %p94
      %p654 = pneg %p118
      %p655 = pneg %p115
      %p656 = pneg %p139
      %p657 = pneg %p136
      %p658 = pneg %p160
      %p659 = pneg %p157
      %p660 = pneg %p181
      %p661 = pneg %p178
      %p662 = pneg %p202
      %p663 = pneg %p199
      %p664 = pneg %p223
      %p665 = pneg %p220
      %p666 = pneg %p244
      %p667 = pneg %p241
      %p668 = pneg %p265
      %p669 = pneg %p262
      %p670 = pneg %p286
      %p671 = pneg %p283
      %p672 = pneg %p307
      %p673 = pneg %p304
      %p674 = pneg %p328
      %p675 = pneg %p325
      %p676 = pneg %p349
      %p677 = pneg %p346
      %p678 = pneg %p370
      %p679 = pneg %p367
      %p680 = pneg %p391
      %p681 = pneg %p388
      %p682 = pneg %p412
      %p683 = pneg %p409
      %p684 = pneg %p433
      %p685 = pneg %p430
      %p686 = pneg %p454
      %p687 = pneg %p451
      %p688 = pneg %p475
      %p689 = pneg %p472
      %p690 = pneg %p496
      %p691 = pneg %p493
      %p692 = pneg %p517
      %p693 = pneg %p514
      %p694 = pneg %p543
      %p695 = pneg %p540
      %p696 = scmp.lt.s32.totalorder %s34, 1
      %s697 = scalar_select %p696, %s34, 1
      %s698 = smul.addr %s697, 2
      %s699 = smul.addr %s698, 4
      %s700 = scalar_lea.vmem %s23, %s699
      %p701 = scmp.lt.s32.totalorder %s34, 1
      %s702 = scalar_select %p701, %s34, 1
      %s703 = smul.addr %s702, 2
      %s704 = smul.addr %s703, 4
      %s705 = scalar_lea.vmem %s0, %s704
      %p706 = scmp.lt.s32.totalorder %s34, 1
      %s707 = scalar_select %p706, %s34, 1
      %s708 = smul.addr %s707, 2
      %s709 = smul.addr %s708, 4
      %s710 = scalar_lea.vmem %s23, %s709
      %v712 = vlaneseq
      %v713 = vand.u32 %v712, 127
      %v714 = vadd.s32 %v713, 128
      %v715 = vand.u32 %v713, 15
      %v716 = vand.u32 %v714, 15
      %vm717 = vcmp.ne.s32.totalorder %v715, 0
      %vm718 = vcmp.ne.s32.totalorder %v716, 0
      %v719 = vsel %vm717, 1, 0
      %v720 = vsel %vm718, 1, 0
      %v721 = vcvt.s32.f32 %v719
      %v722 = vcvt.s32.f32 %v720
      %vm723 = vcmp.ne.s32.totalorder %v715, 15
      %vm724 = vcmp.ne.s32.totalorder %v716, 15
      %v725 = vsel %vm723, 1, 0
      %v726 = vsel %vm724, 1, 0
      %v727 = vcvt.s32.f32 %v725
      %v728 = vcvt.s32.f32 %v726
      %v729 = vand.u32 %v713, 7
      %vm730 = vcmp.ne.s32.totalorder %v729, 0
      %v731 = vsel %vm730, 1, 0
      %v732 = vcvt.s32.f32 %v731
      %vm733 = vcmp.ne.s32.totalorder %v729, 7
      %v734 = vsel %vm733, 1, 0
      %v735 = vcvt.s32.f32 %v734
      %v736 = vand.u32 %v713, 3
      %vm737 = vcmp.ne.s32.totalorder %v736, 0
      %v738 = vsel %vm737, 1, 0
      %v739 = vcvt.s32.f32 %v738
      %vm740 = vcmp.ne.s32.totalorder %v736, 3
      %v741 = vsel %vm740, 1, 0
      %v742 = vcvt.s32.f32 %v741
      %v743 = vld [vmem:[%s705] sm:$0x77]
      %v745 = vcombine.high %v743, %v743
      %746 = vrot.lane.b32.xlu0 %v743, 17
      %v747 = vpop.permute.xlu0 %746
      %748 = vrot.lane.b32.xlu0 %v745, 17
      %v749 = vpop.permute.xlu0 %748
      %vm750 = vcmask 138240
      %v751 = vsel %vm750, %v747, %v749
      %v755 = vsel %vm750, 0.0, %v747
      %v756 = vsel %vm750, %v749, 0.0
      %v757 = vmul.f32 %v755, %v721
      %v758 = vmul.f32 %v751, %v722
      %761 = vrot.lane.b32.xlu0 %v727, 2
      %v762 = vpop.permute.xlu0 %761
      %763 = vrot.lane.b32.xlu0 %v728, 2
      %v764 = vpop.permute.xlu0 %763
      %vm765 = vcmask 15360
      %v766 = vsel %vm765, %v762, %v764
      %v770 = vmul.f32 %v755, %v762
      %v771 = vmul.f32 %v751, %v766
      %v772 = vmul.f32 %v756, %v764
      %775 = vrot.lane.b32.xlu0 %v721, 16
      %v776 = vpop.permute.xlu0 %775
      %777 = vrot.lane.b32.xlu0 %v722, 16
      %v778 = vpop.permute.xlu0 %777
      %vm779 = vcmask 130048
      %v780 = vsel %vm779, %v776, %v778
      %v784 = vmul.f32 %v755, %v776
      %v785 = vmul.f32 %v751, %v780
      %v786 = vmul.f32 %v756, %v778
      %787 = vrot.lane.b32.xlu0 %v727, 18
      %v788 = vpop.permute.xlu0 %787
      %789 = vrot.lane.b32.xlu0 %v728, 18
      %v790 = vpop.permute.xlu0 %789
      %vm791 = vcmask 146432
      %v792 = vsel %vm791, %v788, %v790
      %v796 = vmul.f32 %v755, %v788
      %v797 = vmul.f32 %v751, %v792
      %v798 = vmul.f32 %v756, %v790
      %799 = vrot.lane.b32.xlu0 %v721, 32
      %v800 = vpop.permute.xlu0 %799
      %801 = vrot.lane.b32.xlu0 %v722, 32
      %v802 = vpop.permute.xlu0 %801
      %vm803 = vcmask 261120
      %v804 = vsel %vm803, %v800, %v802
      %v808 = vmul.f32 %v755, %v800
      %v809 = vmul.f32 %v751, %v804
      %v810 = vmul.f32 %v756, %v802
      %811 = vrot.lane.b32.xlu0 %v727, 34
      %v812 = vpop.permute.xlu0 %811
      %813 = vrot.lane.b32.xlu0 %v728, 34
      %v814 = vpop.permute.xlu0 %813
      %vm815 = vcmask 277504
      %v816 = vsel %vm815, %v812, %v814
      %v820 = vmul.f32 %v755, %v812
      %v821 = vmul.f32 %v751, %v816
      %v822 = vmul.f32 %v756, %v814
      %v825 = vrot.slane %v755, 5
      %v826 = vrot.slane %v751, 5
      %v827 = vrot.slane %v756, 5
      %828 = vrot.lane.b32.xlu0 %v825, 127
      %v829 = vpop.permute.xlu0 %828
      %830 = vrot.lane.b32.xlu0 %v826, 127
      %v831 = vpop.permute.xlu0 %830
      %832 = vrot.lane.b32.xlu0 %v827, 127
      %v833 = vpop.permute.xlu0 %832
      %vm834 = vcmask 1039360
      %v835 = vsel %vm834, %v829, %v831
      %v836 = vsel %vm834, %v831, %v833
      %v842 = vrot.slane %v770, 2
      %v843 = vrot.slane %v771, 2
      %v844 = vrot.slane %v772, 2
      %845 = vrot.lane.b32.xlu0 %v842, 126
      %v846 = vpop.permute.xlu0 %845
      %847 = vrot.lane.b32.xlu0 %v843, 126
      %v848 = vpop.permute.xlu0 %847
      %849 = vrot.lane.b32.xlu0 %v844, 126
      %v850 = vpop.permute.xlu0 %849
      %vm851 = vcmask 1031168
      %v852 = vsel %vm851, %v846, %v848
      %v853 = vsel %vm851, %v848, %v850
      %v859 = vrot.slane %v784, 7
      %v860 = vrot.slane %v785, 7
      %v861 = vrot.slane %v786, 7
      %862 = vrot.lane.b32.xlu0 %v859, 112
      %v863 = vpop.permute.xlu0 %862
      %864 = vrot.lane.b32.xlu0 %v860, 112
      %v865 = vpop.permute.xlu0 %864
      %866 = vrot.lane.b32.xlu0 %v861, 112
      %v867 = vpop.permute.xlu0 %866
      %vm868 = vcmask 916480
      %v869 = vsel %vm868, %v863, %v865
      %v870 = vsel %vm868, %v865, %v867
      %v873 = vrot.slane %v755, 4
      %v874 = vrot.slane %v751, 4
      %v875 = vrot.slane %v756, 4
      %876 = vrot.lane.b32.xlu0 %v873, 111
      %v877 = vpop.permute.xlu0 %876
      %878 = vrot.lane.b32.xlu0 %v874, 111
      %v879 = vpop.permute.xlu0 %878
      %880 = vrot.lane.b32.xlu0 %v875, 111
      %v881 = vpop.permute.xlu0 %880
      %vm882 = vcmask 908288
      %v883 = vsel %vm882, %v877, %v879
      %v884 = vsel %vm882, %v879, %v881
      %v890 = vrot.slane %v796, 1
      %v891 = vrot.slane %v797, 1
      %v892 = vrot.slane %v798, 1
      %893 = vrot.lane.b32.xlu0 %v890, 110
      %v894 = vpop.permute.xlu0 %893
      %895 = vrot.lane.b32.xlu0 %v891, 110
      %v896 = vpop.permute.xlu0 %895
      %897 = vrot.lane.b32.xlu0 %v892, 110
      %v898 = vpop.permute.xlu0 %897
      %vm899 = vcmask 900096
      %v900 = vsel %vm899, %v894, %v896
      %v901 = vsel %vm899, %v896, %v898
      %v907 = vrot.slane %v808, 6
      %v908 = vrot.slane %v809, 6
      %v909 = vrot.slane %v810, 6
      %910 = vrot.lane.b32.xlu0 %v907, 96
      %v911 = vpop.permute.xlu0 %910
      %912 = vrot.lane.b32.xlu0 %v908, 96
      %v913 = vpop.permute.xlu0 %912
      %914 = vrot.lane.b32.xlu0 %v909, 96
      %v915 = vpop.permute.xlu0 %914
      %vm916 = vcmask 785408
      %v917 = vsel %vm916, %v911, %v913
      %v918 = vsel %vm916, %v913, %v915
      %v921 = vrot.slane %v755, 3
      %v922 = vrot.slane %v751, 3
      %v923 = vrot.slane %v756, 3
      %924 = vrot.lane.b32.xlu0 %v921, 95
      %v925 = vpop.permute.xlu0 %924
      %926 = vrot.lane.b32.xlu0 %v922, 95
      %v927 = vpop.permute.xlu0 %926
      %928 = vrot.lane.b32.xlu0 %v923, 95
      %v929 = vpop.permute.xlu0 %928
      %vm930 = vcmask 777216
      %v931 = vsel %vm930, %v925, %v927
      %v932 = vsel %vm930, %v927, %v929
      %938 = vrot.lane.b32.xlu0 %v820, 94
      %v939 = vpop.permute.xlu0 %938
      %940 = vrot.lane.b32.xlu0 %v821, 94
      %v941 = vpop.permute.xlu0 %940
      %942 = vrot.lane.b32.xlu0 %v822, 94
      %v943 = vpop.permute.xlu0 %942
      %vm944 = vcmask 769024
      %v945 = vsel %vm944, %v939, %v941
      %v946 = vsel %vm944, %v941, %v943
      %vm949 = vcmask 1042432
      %v950 = vsel %vm949, %v757, %v835
      %v951 = vsel %vm949, %v758, %v836
      %vm952 = vcmask 1045504
      %v953 = vsel %vm952, %v950, %v852
      %v954 = vsel %vm952, %v951, %v853
      %vm955 = vcmask 1040384
      %v956 = vsel %vm955, %v852, %v869
      %v957 = vsel %vm955, %v853, %v870
      %vm958 = vcmask 1043456
      %v959 = vsel %vm958, %v956, %v883
      %v960 = vsel %vm958, %v957, %v884
      %vm961 = vcmask 1046528
      %v962 = vsel %vm961, %v959, %v900
      %v963 = vsel %vm961, %v960, %v901
      %vm964 = vcmask 1041408
      %v965 = vsel %vm964, %v900, %v917
      %v966 = vsel %vm964, %v901, %v918
      %vm967 = vcmask 1044480
      %v968 = vsel %vm967, %v965, %v931
      %v969 = vsel %vm967, %v966, %v932
      %v970 = vpack.c.bf16 %v962, %v953
      %v971 = vpack.c.bf16 %v963, %v954
      %v972 = vpack.c.bf16 %v945, %v968
      %v973 = vpack.c.bf16 %v946, %v969
      %v974 = vld [vmem:[%s1] sm:$0x3]
      %v975 = vld [vmem:[%s2] sm:$0x7]
      %977 = vset.pattern.permute.xlu0 0
      %978 = vperm.xlu0 %977, %v975
      %v979 = vpop.permute.xlu0 %978
      %vm981 = vcmask 220160
      %v983 = vsel %vm981, %v974, 0
      %v985 = vsel %vm967, 4294967295, 65535
      %v986 = vsel %vm952, %v985, 0
      %v988 = vand.u32 %v972, %v986
      %v991 = vand.u32 %v973, %v986
      %993 = vmatprep.subr.bf16.mxu0 %v971
      %994 = vmatpush1.bf16.msra.mxu0 %v970
      %995 = vmatprep.subr.bf16.mxu0 %v991
      %996 = vmatpush1.bf16.msra.mxu0 %v988
      %997 = vmatprep.subr.bf16.mxu0 0
      %998 = vmatpush1.bf16.msra.mxu0 0
      %999 = vmatprep.subr.bf16.mxu0 0
      %1000 = vmatpush1.bf16.msra.mxu0 0
      %1001 = vmatprep.subr.bf16.mxu0 0
      %1002 = vmatpush1.bf16.msra.mxu0 0
      %1003 = vmatprep.subr.bf16.mxu0 0
      %1004 = vmatpush1.bf16.msra.mxu0 0
      %1005 = vmatprep.subr.bf16.mxu0 0
      %1006 = vmatpush1.bf16.msra.mxu0 0
      %1007 = vmatprep.subr.bf16.mxu0 0
      %1008 = vmatpush1.bf16.msra.mxu0 0
      %1009 = vmatprep.subr.bf16.mxu0 0
      %1010 = vmatpush1.bf16.msra.mxu0 0
      %1011 = vmatprep.subr.bf16.mxu0 0
      %1012 = vmatpush1.bf16.msra.mxu0 0
      %1013 = vmatprep.subr.bf16.mxu0 0
      %1014 = vmatpush1.bf16.msra.mxu0 0
      %1015 = vmatprep.subr.bf16.mxu0 0
      %1016 = vmatpush1.bf16.msra.mxu0 0
      %1017 = vmatprep.subr.bf16.mxu0 0
      %1018 = vmatpush1.bf16.msra.mxu0 0
      %1019 = vmatprep.subr.bf16.mxu0 0
      %1020 = vmatpush1.bf16.msra.mxu0 0
      %1021 = vmatprep.subr.bf16.mxu0 0
      %1022 = vmatpush1.bf16.msra.mxu0 0
      %1023 = vmatprep.subr.bf16.mxu0 0
      %1024 = vmatpush1.bf16.msra.mxu0 0
      %1025 = vmatprep.mubr.bf16.mxu0 0
      %1026 = vmatmul.mubr.bf16.gmra.mrb[0].mxu0 %v983
      %v1027 = vpop.f32.mrb[0].mxu0
      %v1028 = vadd.f32 %v979, %v1027
      %v1029 = vpop.f32.mrb[0].mxu0
      %v1030 = vadd.f32 %v979, %v1029
      %v1031 = vpop.f32.mrb[0].mxu0
      %v1032 = vpop.f32.mrb[0].mxu0
      %1033 = vdwg.mxu0
      %v1034 = vmax.f32 %v1028, 0.0
      %v1035 = vmax.f32 %v1030, 0.0
      %1038 = vrot.lane.b32.xlu0 %v1034, 17
      %v1039 = vpop.permute.xlu0 %1038
      %1040 = vrot.lane.b32.xlu0 %v1035, 17
      %v1041 = vpop.permute.xlu0 %1040
      %v1042 = vsel %vm750, %v1039, %v1041
      %v1046 = vsel %vm750, 0.0, %v1039
      %v1047 = vsel %vm750, %v1041, 0.0
      %v1048 = vmul.f32 %v1046, %v721
      %v1049 = vmul.f32 %v1042, %v722
      %v1050 = vmul.f32 %v1046, %v762
      %v1051 = vmul.f32 %v1042, %v766
      %v1052 = vmul.f32 %v1047, %v764
      %v1053 = vmul.f32 %v1046, %v776
      %v1054 = vmul.f32 %v1042, %v780
      %v1055 = vmul.f32 %v1047, %v778
      %v1056 = vmul.f32 %v1046, %v788
      %v1057 = vmul.f32 %v1042, %v792
      %v1058 = vmul.f32 %v1047, %v790
      %v1059 = vmul.f32 %v1046, %v800
      %v1060 = vmul.f32 %v1042, %v804
      %v1061 = vmul.f32 %v1047, %v802
      %v1062 = vmul.f32 %v1046, %v812
      %v1063 = vmul.f32 %v1042, %v816
      %v1064 = vmul.f32 %v1047, %v814
      %v1067 = vrot.slane %v1046, 5
      %v1068 = vrot.slane %v1042, 5
      %v1069 = vrot.slane %v1047, 5
      %1070 = vrot.lane.b32.xlu0 %v1067, 127
      %v1071 = vpop.permute.xlu0 %1070
      %1072 = vrot.lane.b32.xlu0 %v1068, 127
      %v1073 = vpop.permute.xlu0 %1072
      %1074 = vrot.lane.b32.xlu0 %v1069, 127
      %v1075 = vpop.permute.xlu0 %1074
      %v1076 = vsel %vm834, %v1071, %v1073
      %v1077 = vsel %vm834, %v1073, %v1075
      %v1083 = vrot.slane %v1050, 2
      %v1084 = vrot.slane %v1051, 2
      %v1085 = vrot.slane %v1052, 2
      %1086 = vrot.lane.b32.xlu0 %v1083, 126
      %v1087 = vpop.permute.xlu0 %1086
      %1088 = vrot.lane.b32.xlu0 %v1084, 126
      %v1089 = vpop.permute.xlu0 %1088
      %1090 = vrot.lane.b32.xlu0 %v1085, 126
      %v1091 = vpop.permute.xlu0 %1090
      %v1092 = vsel %vm851, %v1087, %v1089
      %v1093 = vsel %vm851, %v1089, %v1091
      %v1099 = vrot.slane %v1053, 7
      %v1100 = vrot.slane %v1054, 7
      %v1101 = vrot.slane %v1055, 7
      %1102 = vrot.lane.b32.xlu0 %v1099, 112
      %v1103 = vpop.permute.xlu0 %1102
      %1104 = vrot.lane.b32.xlu0 %v1100, 112
      %v1105 = vpop.permute.xlu0 %1104
      %1106 = vrot.lane.b32.xlu0 %v1101, 112
      %v1107 = vpop.permute.xlu0 %1106
      %v1108 = vsel %vm868, %v1103, %v1105
      %v1109 = vsel %vm868, %v1105, %v1107
      %v1112 = vrot.slane %v1046, 4
      %v1113 = vrot.slane %v1042, 4
      %v1114 = vrot.slane %v1047, 4
      %1115 = vrot.lane.b32.xlu0 %v1112, 111
      %v1116 = vpop.permute.xlu0 %1115
      %1117 = vrot.lane.b32.xlu0 %v1113, 111
      %v1118 = vpop.permute.xlu0 %1117
      %1119 = vrot.lane.b32.xlu0 %v1114, 111
      %v1120 = vpop.permute.xlu0 %1119
      %v1121 = vsel %vm882, %v1116, %v1118
      %v1122 = vsel %vm882, %v1118, %v1120
      %v1128 = vrot.slane %v1056, 1
      %v1129 = vrot.slane %v1057, 1
      %v1130 = vrot.slane %v1058, 1
      %1131 = vrot.lane.b32.xlu0 %v1128, 110
      %v1132 = vpop.permute.xlu0 %1131
      %1133 = vrot.lane.b32.xlu0 %v1129, 110
      %v1134 = vpop.permute.xlu0 %1133
      %1135 = vrot.lane.b32.xlu0 %v1130, 110
      %v1136 = vpop.permute.xlu0 %1135
      %v1137 = vsel %vm899, %v1132, %v1134
      %v1138 = vsel %vm899, %v1134, %v1136
      %v1144 = vrot.slane %v1059, 6
      %v1145 = vrot.slane %v1060, 6
      %v1146 = vrot.slane %v1061, 6
      %1147 = vrot.lane.b32.xlu0 %v1144, 96
      %v1148 = vpop.permute.xlu0 %1147
      %1149 = vrot.lane.b32.xlu0 %v1145, 96
      %v1150 = vpop.permute.xlu0 %1149
      %1151 = vrot.lane.b32.xlu0 %v1146, 96
      %v1152 = vpop.permute.xlu0 %1151
      %v1153 = vsel %vm916, %v1148, %v1150
      %v1154 = vsel %vm916, %v1150, %v1152
      %v1157 = vrot.slane %v1046, 3
      %v1158 = vrot.slane %v1042, 3
      %v1159 = vrot.slane %v1047, 3
      %1160 = vrot.lane.b32.xlu0 %v1157, 95
      %v1161 = vpop.permute.xlu0 %1160
      %1162 = vrot.lane.b32.xlu0 %v1158, 95
      %v1163 = vpop.permute.xlu0 %1162
      %1164 = vrot.lane.b32.xlu0 %v1159, 95
      %v1165 = vpop.permute.xlu0 %1164
      %v1166 = vsel %vm930, %v1161, %v1163
      %v1167 = vsel %vm930, %v1163, %v1165
      %1173 = vrot.lane.b32.xlu0 %v1062, 94
      %v1174 = vpop.permute.xlu0 %1173
      %1175 = vrot.lane.b32.xlu0 %v1063, 94
      %v1176 = vpop.permute.xlu0 %1175
      %1177 = vrot.lane.b32.xlu0 %v1064, 94
      %v1178 = vpop.permute.xlu0 %1177
      %v1179 = vsel %vm944, %v1174, %v1176
      %v1180 = vsel %vm944, %v1176, %v1178
      %v1183 = vsel %vm949, %v1048, %v1076
      %v1184 = vsel %vm949, %v1049, %v1077
      %v1185 = vsel %vm952, %v1183, %v1092
      %v1186 = vsel %vm952, %v1184, %v1093
      %v1187 = vsel %vm955, %v1092, %v1108
      %v1188 = vsel %vm955, %v1093, %v1109
      %v1189 = vsel %vm958, %v1187, %v1121
      %v1190 = vsel %vm958, %v1188, %v1122
      %v1191 = vsel %vm961, %v1189, %v1137
      %v1192 = vsel %vm961, %v1190, %v1138
      %v1193 = vsel %vm964, %v1137, %v1153
      %v1194 = vsel %vm964, %v1138, %v1154
      %v1195 = vsel %vm967, %v1193, %v1166
      %v1196 = vsel %vm967, %v1194, %v1167
      %v1197 = vpack.c.bf16 %v1191, %v1185
      %v1198 = vpack.c.bf16 %v1192, %v1186
      %v1199 = vpack.c.bf16 %v1179, %v1195
      %v1200 = vpack.c.bf16 %v1180, %v1196
      %v1201 = vld [vmem:[%s3] sm:$0xf]
      %v1202 = vld [vmem:[%s3 + $0x4] sm:$0x3]
      %v1203 = vld [vmem:[%s4] sm:$0xff]
      %v1204 = vld [vmem:[%s4 + $0x8] sm:$0xf]
      %1206 = vset.pattern.permute.xlu0 0
      %1207 = vperm.xlu0 %1206, %v1203
      %v1208 = vpop.permute.xlu0 %1207
      %1211 = vset.pattern.permute.xlu0 0
      %1212 = vperm.xlu0 %1211, %v1204
      %v1213 = vpop.permute.xlu0 %1212
      %v1217 = vunpack.c.l.b16 %v1201
      %v1218 = vunpack.c.l.b16 %v1202
      %v1219 = vpack.c.b16 %v1218, %v1217
      %v1221 = vsel %vm981, %v1219, 0
      %v1224 = vand.u32 %v1199, %v986
      %v1227 = vand.u32 %v1200, %v986
      %1229 = vmatprep.subr.bf16.mxu0 %v1198
      %1230 = vmatpush1.bf16.msra.mxu0 %v1197
      %1231 = vmatprep.subr.bf16.mxu0 %v1227
      %1232 = vmatpush1.bf16.msra.mxu0 %v1224
      %1233 = vmatprep.subr.bf16.mxu0 0
      %1234 = vmatpush1.bf16.msra.mxu0 0
      %1235 = vmatprep.subr.bf16.mxu0 0
      %1236 = vmatpush1.bf16.msra.mxu0 0
      %1237 = vmatprep.subr.bf16.mxu0 0
      %1238 = vmatpush1.bf16.msra.mxu0 0
      %1239 = vmatprep.subr.bf16.mxu0 0
      %1240 = vmatpush1.bf16.msra.mxu0 0
      %1241 = vmatprep.subr.bf16.mxu0 0
      %1242 = vmatpush1.bf16.msra.mxu0 0
      %1243 = vmatprep.subr.bf16.mxu0 0
      %1244 = vmatpush1.bf16.msra.mxu0 0
      %1245 = vmatprep.subr.bf16.mxu0 0
      %1246 = vmatpush1.bf16.msra.mxu0 0
      %1247 = vmatprep.subr.bf16.mxu0 0
      %1248 = vmatpush1.bf16.msra.mxu0 0
      %1249 = vmatprep.subr.bf16.mxu0 0
      %1250 = vmatpush1.bf16.msra.mxu0 0
      %1251 = vmatprep.subr.bf16.mxu0 0
      %1252 = vmatpush1.bf16.msra.mxu0 0
      %1253 = vmatprep.subr.bf16.mxu0 0
      %1254 = vmatpush1.bf16.msra.mxu0 0
      %1255 = vmatprep.subr.bf16.mxu0 0
      %1256 = vmatpush1.bf16.msra.mxu0 0
      %1257 = vmatprep.subr.bf16.mxu0 0
      %1258 = vmatpush1.bf16.msra.mxu0 0
      %1259 = vmatprep.subr.bf16.mxu0 0
      %1260 = vmatpush1.bf16.msra.mxu0 0
      %1261 = vmatprep.mubr.bf16.mxu0 0
      %1262 = vmatmul.mubr.bf16.gmra.mrb[0].mxu0 %v1221
      %v1263 = vpop.f32.mrb[0].mxu0
      %v1264 = vadd.f32 %v1208, %v1263
      %v1265 = vpop.f32.mrb[0].mxu0
      %v1266 = vadd.f32 %v1208, %v1265
      %v1267 = vpop.f32.mrb[0].mxu0
      %v1268 = vadd.f32 %v1213, %v1267
      %v1269 = vpop.f32.mrb[0].mxu0
      %v1270 = vadd.f32 %v1213, %v1269
      %1271 = vdwg.mxu0
      %v1272 = vmax.f32 %v1264, 0.0
      %v1273 = vmax.f32 %v1266, 0.0
      %v1274 = vmax.f32 %v1268, 0.0
      %v1275 = vmax.f32 %v1270, 0.0
      %1281 = vrot.lane.b32.xlu0 %v1272, 127
      %v1282 = vpop.permute.xlu0 %1281
      %1283 = vrot.lane.b32.xlu0 %v1273, 127
      %v1284 = vpop.permute.xlu0 %1283
      %1285 = vrot.lane.b32.xlu0 0.0, 127
      %v1286 = vpop.permute.xlu0 %1285
      %1287 = vrot.lane.b32.xlu0 %v1274, 127
      %v1288 = vpop.permute.xlu0 %1287
      %1289 = vrot.lane.b32.xlu0 %v1275, 127
      %v1290 = vpop.permute.xlu0 %1289
      %v1291 = vsel %vm834, %v1282, %v1284
      %v1292 = vsel %vm834, %v1284, %v1286
      %v1293 = vsel %vm834, %v1288, %v1290
      %v1294 = vsel %vm834, %v1290, %v1286
      %v1299 = vmax.f32 %v1272, %v1291
      %v1300 = vmax.f32 %v1273, %v1292
      %v1301 = vmax.f32 %v1274, %v1293
      %v1302 = vmax.f32 %v1275, %v1294
      %v1304 = vmax.f32 %v1286, 0.0
      %1310 = vrot.lane.b32.xlu0 %v1299, 112
      %v1311 = vpop.permute.xlu0 %1310
      %1312 = vrot.lane.b32.xlu0 %v1300, 112
      %v1313 = vpop.permute.xlu0 %1312
      %1314 = vrot.lane.b32.xlu0 %v1304, 112
      %v1315 = vpop.permute.xlu0 %1314
      %1316 = vrot.lane.b32.xlu0 %v1301, 112
      %v1317 = vpop.permute.xlu0 %1316
      %1318 = vrot.lane.b32.xlu0 %v1302, 112
      %v1319 = vpop.permute.xlu0 %1318
      %v1320 = vsel %vm868, %v1311, %v1313
      %v1321 = vsel %vm868, %v1313, %v1315
      %v1322 = vsel %vm868, %v1317, %v1319
      %v1323 = vsel %vm868, %v1319, %v1315
      %v1328 = vmax.f32 %v1299, %v1320
      %v1329 = vmax.f32 %v1300, %v1321
      %v1330 = vmax.f32 %v1301, %v1322
      %v1331 = vmax.f32 %v1302, %v1323
      %v1332 = vpack.c.bf16 %v1330, %v1328
      %v1333 = vpack.c.bf16 %v1331, %v1329
      %v1334 = vld [vmem:[%s19] sm:$0xf]
      %v1335 = vld [vmem:[%s19 + $0x4] sm:$0xf]
      %v1336 = vld [vmem:[%s19 + $0x8] sm:$0xf]
      %v1337 = vld [vmem:[%s19 + $0xc] sm:$0xf]
      %v1338 = vld [vmem:[%s19 + $0x10] sm:$0xf]
      %v1339 = vld [vmem:[%s19 + $0x14] sm:$0xf]
      %v1340 = vld [vmem:[%s19 + $0x18] sm:$0xf]
      %v1341 = vld [vmem:[%s19 + $0x1c] sm:$0xf]
      %v1342 = vld [vmem:[%s19 + $0x20] sm:$0xf]
      %v1343 = vld [vmem:[%s19 + $0x24] sm:$0xf]
      %v1344 = vld [vmem:[%s19 + $0x28] sm:$0xf]
      %v1345 = vld [vmem:[%s19 + $0x2c] sm:$0xf]
      %v1346 = vld [vmem:[%s19 + $0x30] sm:$0xf]
      %v1347 = vld [vmem:[%s19 + $0x34] sm:$0xf]
      %v1348 = vld [vmem:[%s19 + $0x38] sm:$0xf]
      %v1349 = vld [vmem:[%s19 + $0x3c] sm:$0xf]
      %v1350 = vld [vmem:[%s19 + $0x40] sm:$0xf]
      %v1351 = vld [vmem:[%s19 + $0x44] sm:$0xf]
      %v1352 = vld [vmem:[%s19 + $0x48] sm:$0xf]
      %v1353 = vld [vmem:[%s19 + $0x4c] sm:$0xf]
      %v1354 = vld [vmem:[%s19 + $0x50] sm:$0xf]
      %v1355 = vld [vmem:[%s19 + $0x54] sm:$0xf]
      %v1356 = vld [vmem:[%s19 + $0x58] sm:$0xf]
      %v1357 = vld [vmem:[%s19 + $0x5c] sm:$0xf]
      %v1358 = vld [vmem:[%s19 + $0x60] sm:$0xf]
      %v1359 = vld [vmem:[%s19 + $0x64] sm:$0xf]
      %v1360 = vld [vmem:[%s19 + $0x68] sm:$0xf]
      %v1361 = vld [vmem:[%s19 + $0x6c] sm:$0xf]
      %v1362 = vld [vmem:[%s19 + $0x70] sm:$0xf]
      %v1363 = vld [vmem:[%s19 + $0x74] sm:$0xf]
      %v1364 = vld [vmem:[%s19 + $0x78] sm:$0xf]
      %v1365 = vld [vmem:[%s19 + $0x7c] sm:$0xf]
      %v1398 = vunpack.c.l.b16 %v1334
      %v1399 = vunpack.c.l.b16 %v1335
      %v1400 = vunpack.c.l.b16 %v1336
      %v1401 = vunpack.c.l.b16 %v1337
      %v1402 = vunpack.c.l.b16 %v1338
      %v1403 = vunpack.c.l.b16 %v1339
      %v1404 = vunpack.c.l.b16 %v1340
      %v1405 = vunpack.c.l.b16 %v1341
      %v1406 = vunpack.c.l.b16 %v1342
      %v1407 = vunpack.c.l.b16 %v1343
      %v1408 = vunpack.c.l.b16 %v1344
      %v1409 = vunpack.c.l.b16 %v1345
      %v1410 = vunpack.c.l.b16 %v1346
      %v1411 = vunpack.c.l.b16 %v1347
      %v1412 = vunpack.c.l.b16 %v1348
      %v1413 = vunpack.c.l.b16 %v1349
      %v1414 = vunpack.c.l.b16 %v1350
      %v1415 = vunpack.c.l.b16 %v1351
      %v1416 = vunpack.c.l.b16 %v1352
      %v1417 = vunpack.c.l.b16 %v1353
      %v1418 = vunpack.c.l.b16 %v1354
      %v1419 = vunpack.c.l.b16 %v1355
      %v1420 = vunpack.c.l.b16 %v1356
      %v1421 = vunpack.c.l.b16 %v1357
      %v1422 = vunpack.c.l.b16 %v1358
      %v1423 = vunpack.c.l.b16 %v1359
      %v1424 = vunpack.c.l.b16 %v1360
      %v1425 = vunpack.c.l.b16 %v1361
      %v1426 = vunpack.c.l.b16 %v1362
      %v1427 = vunpack.c.l.b16 %v1363
      %v1428 = vunpack.c.l.b16 %v1364
      %v1429 = vunpack.c.l.b16 %v1365
      %v1430 = vpack.c.b16 %v1399, %v1398
      %v1431 = vpack.c.b16 %v1401, %v1400
      %v1432 = vpack.c.b16 %v1403, %v1402
      %v1433 = vpack.c.b16 %v1405, %v1404
      %v1434 = vpack.c.b16 %v1407, %v1406
      %v1435 = vpack.c.b16 %v1409, %v1408
      %v1436 = vpack.c.b16 %v1411, %v1410
      %v1437 = vpack.c.b16 %v1413, %v1412
      %v1438 = vpack.c.b16 %v1415, %v1414
      %v1439 = vpack.c.b16 %v1417, %v1416
      %v1440 = vpack.c.b16 %v1419, %v1418
      %v1441 = vpack.c.b16 %v1421, %v1420
      %v1442 = vpack.c.b16 %v1423, %v1422
      %v1443 = vpack.c.b16 %v1425, %v1424
      %v1444 = vpack.c.b16 %v1427, %v1426
      %v1445 = vpack.c.b16 %v1429, %v1428
      %1462 = vmatprep.subr.bf16.mxu0 0
      %1463 = vmatpush1.bf16.msra.mxu0 %v1430
      %1464 = vmatprep.subr.bf16.mxu0 0
      %1465 = vmatpush1.bf16.msra.mxu0 %v1431
      %1466 = vmatprep.subr.bf16.mxu0 0
      %1467 = vmatpush1.bf16.msra.mxu0 %v1432
      %1468 = vmatprep.subr.bf16.mxu0 0
      %1469 = vmatpush1.bf16.msra.mxu0 %v1433
      %1470 = vmatprep.subr.bf16.mxu0 0
      %1471 = vmatpush1.bf16.msra.mxu0 %v1434
      %1472 = vmatprep.subr.bf16.mxu0 0
      %1473 = vmatpush1.bf16.msra.mxu0 %v1435
      %1474 = vmatprep.subr.bf16.mxu0 0
      %1475 = vmatpush1.bf16.msra.mxu0 %v1436
      %1476 = vmatprep.subr.bf16.mxu0 0
      %1477 = vmatpush1.bf16.msra.mxu0 %v1437
      %1478 = vmatprep.subr.bf16.mxu0 0
      %1479 = vmatpush1.bf16.msra.mxu0 %v1438
      %1480 = vmatprep.subr.bf16.mxu0 0
      %1481 = vmatpush1.bf16.msra.mxu0 %v1439
      %1482 = vmatprep.subr.bf16.mxu0 0
      %1483 = vmatpush1.bf16.msra.mxu0 %v1440
      %1484 = vmatprep.subr.bf16.mxu0 0
      %1485 = vmatpush1.bf16.msra.mxu0 %v1441
      %1486 = vmatprep.subr.bf16.mxu0 0
      %1487 = vmatpush1.bf16.msra.mxu0 %v1442
      %1488 = vmatprep.subr.bf16.mxu0 0
      %1489 = vmatpush1.bf16.msra.mxu0 %v1443
      %1490 = vmatprep.subr.bf16.mxu0 0
      %1491 = vmatpush1.bf16.msra.mxu0 %v1444
      %1492 = vmatprep.subr.bf16.mxu0 0
      %1493 = vmatpush1.bf16.msra.mxu0 %v1445
      %1494 = vmatprep.mubr.bf16.mxu0 %v1333
      %1495 = vmatmul.mubr.bf16.gmra.mrb[0].mxu0 %v1332
      %v1496 = vpop.f32.mrb[0].mxu0
      %v1497 = vadd.f32 0.0, %v1496
      %v1498 = vpop.f32.mrb[0].mxu0
      %v1499 = vpop.f32.mrb[0].mxu0
      %v1500 = vadd.f32 0.0, %v1499
      %v1501 = vpop.f32.mrb[0].mxu0
      %1502 = vdwg.mxu0
      %1505 = vrot.lane.b32.xlu0 %v1497, 9
      %v1506 = vpop.permute.xlu0 %1505
      %1507 = vrot.lane.b32.xlu0 %v1500, 9
      %v1508 = vpop.permute.xlu0 %1507
      %vm1511 = vcmask 72704
      %v1512 = vsel %vm1511, 0.0, %v1506
      %v1513 = vsel %vm1511, 0.0, %v1508
      %vm1514 = vcmask 596992
      %v1515 = vsel %vm1514, %v1512, 0.0
      %v1516 = vsel %vm1514, %v1513, 0.0
      %v1517 = vmul.f32 %v1515, %v732
      %v1518 = vmul.f32 %v1516, %v732
      %1520 = vrot.lane.b32.xlu0 %v735, 2
      %v1521 = vpop.permute.xlu0 %1520
      %v1523 = vmul.f32 %v1515, %v1521
      %v1524 = vmul.f32 %v1516, %v1521
      %1526 = vrot.lane.b32.xlu0 %v732, 8
      %v1527 = vpop.permute.xlu0 %1526
      %v1529 = vmul.f32 %v1515, %v1527
      %v1530 = vmul.f32 %v1516, %v1527
      %1531 = vrot.lane.b32.xlu0 %v735, 10
      %v1532 = vpop.permute.xlu0 %1531
      %v1534 = vmul.f32 %v1515, %v1532
      %v1535 = vmul.f32 %v1516, %v1532
      %1536 = vrot.lane.b32.xlu0 %v732, 16
      %v1537 = vpop.permute.xlu0 %1536
      %v1539 = vmul.f32 %v1515, %v1537
      %v1540 = vmul.f32 %v1516, %v1537
      %1541 = vrot.lane.b32.xlu0 %v735, 18
      %v1542 = vpop.permute.xlu0 %1541
      %v1544 = vmul.f32 %v1515, %v1542
      %v1545 = vmul.f32 %v1516, %v1542
      %v1548 = vrot.slane %v1515, 4
      %v1549 = vrot.slane %v1516, 4
      %v1550 = vsel %vm958, %v1548, %v1549
      %1551 = vrot.lane.b32.xlu0 %v1548, 127
      %v1552 = vpop.permute.xlu0 %1551
      %1553 = vrot.lane.b32.xlu0 %v1550, 127
      %v1554 = vpop.permute.xlu0 %1553
      %1559 = vrot.lane.b32.xlu0 %v1523, 126
      %v1560 = vpop.permute.xlu0 %1559
      %1561 = vrot.lane.b32.xlu0 %v1524, 126
      %v1562 = vpop.permute.xlu0 %1561
      %v1567 = vrot.slane %v1529, 4
      %v1568 = vrot.slane %v1530, 4
      %v1569 = vsel %vm958, %v1567, %v1568
      %1570 = vrot.lane.b32.xlu0 %v1567, 120
      %v1571 = vpop.permute.xlu0 %1570
      %1572 = vrot.lane.b32.xlu0 %v1569, 120
      %v1573 = vpop.permute.xlu0 %1572
      %1576 = vrot.lane.b32.xlu0 %v1515, 119
      %v1577 = vpop.permute.xlu0 %1576
      %1578 = vrot.lane.b32.xlu0 %v1516, 119
      %v1579 = vpop.permute.xlu0 %1578
      %v1584 = vrot.slane %v1534, 4
      %v1585 = vrot.slane %v1535, 4
      %v1586 = vsel %vm958, %v1584, %v1585
      %1587 = vrot.lane.b32.xlu0 %v1584, 118
      %v1588 = vpop.permute.xlu0 %1587
      %1589 = vrot.lane.b32.xlu0 %v1586, 118
      %v1590 = vpop.permute.xlu0 %1589
      %1595 = vrot.lane.b32.xlu0 %v1539, 112
      %v1596 = vpop.permute.xlu0 %1595
      %1597 = vrot.lane.b32.xlu0 %v1540, 112
      %v1598 = vpop.permute.xlu0 %1597
      %1601 = vrot.lane.b32.xlu0 %v1548, 111
      %v1602 = vpop.permute.xlu0 %1601
      %1603 = vrot.lane.b32.xlu0 %v1550, 111
      %v1604 = vpop.permute.xlu0 %1603
      %1609 = vrot.lane.b32.xlu0 %v1544, 110
      %v1610 = vpop.permute.xlu0 %1609
      %1611 = vrot.lane.b32.xlu0 %v1545, 110
      %v1612 = vpop.permute.xlu0 %1611
      %v1615 = vsel %vm958, %v1518, %v1552
      %v1616 = vsel %vm958, %v1562, %v1571
      %v1617 = vsel %vm958, %v1579, %v1588
      %v1618 = vsel %vm958, %v1598, %v1602
      %v1619 = vpack.c.bf16 %v1615, %v1517
      %v1620 = vpack.c.bf16 %v1560, %v1554
      %v1621 = vpack.c.bf16 %v1573, %v1616
      %v1622 = vpack.c.bf16 %v1617, %v1577
      %v1623 = vpack.c.bf16 %v1596, %v1590
      %v1624 = vpack.c.bf16 %v1604, %v1618
      %v1625 = vpack.c.bf16 %v1612, %v1610
      %v1626 = vld [vmem:[%s5] sm:$0xf]
      %v1627 = vld [vmem:[%s5 + $0x4] sm:$0x3]
      %v1628 = vld [vmem:[%s6] sm:$0xff]
      %v1629 = vld [vmem:[%s6 + $0x8] sm:$0xf]
      %1631 = vset.pattern.permute.xlu0 0
      %1632 = vperm.xlu0 %1631, %v1628
      %v1633 = vpop.permute.xlu0 %1632
      %1636 = vset.pattern.permute.xlu0 0
      %1637 = vperm.xlu0 %1636, %v1629
      %v1638 = vpop.permute.xlu0 %1637
      %v1642 = vunpack.c.l.b16 %v1626
      %v1643 = vunpack.c.l.b16 %v1627
      %v1644 = vpack.c.b16 %v1643, %v1642
      %vm1645 = vcmask 883712
      %v1647 = vsel %vm1645, %v1644, 0
      %v1650 = vsel %vm952, %v1625, 0
      %1652 = vmatprep.subr.bf16.mxu0 0
      %1653 = vmatpush1.bf16.msra.mxu0 %v1619
      %1654 = vmatprep.subr.bf16.mxu0 0
      %1655 = vmatpush1.bf16.msra.mxu0 %v1620
      %1656 = vmatprep.subr.bf16.mxu0 0
      %1657 = vmatpush1.bf16.msra.mxu0 %v1621
      %1658 = vmatprep.subr.bf16.mxu0 0
      %1659 = vmatpush1.bf16.msra.mxu0 %v1622
      %1660 = vmatprep.subr.bf16.mxu0 0
      %1661 = vmatpush1.bf16.msra.mxu0 %v1623
      %1662 = vmatprep.subr.bf16.mxu0 0
      %1663 = vmatpush1.bf16.msra.mxu0 %v1624
      %1664 = vmatprep.subr.bf16.mxu0 0
      %1665 = vmatpush1.bf16.msra.mxu0 %v1650
      %1666 = vmatprep.subr.bf16.mxu0 0
      %1667 = vmatpush1.bf16.msra.mxu0 0
      %1668 = vmatprep.subr.bf16.mxu0 0
      %1669 = vmatpush1.bf16.msra.mxu0 0
      %1670 = vmatprep.subr.bf16.mxu0 0
      %1671 = vmatpush1.bf16.msra.mxu0 0
      %1672 = vmatprep.subr.bf16.mxu0 0
      %1673 = vmatpush1.bf16.msra.mxu0 0
      %1674 = vmatprep.subr.bf16.mxu0 0
      %1675 = vmatpush1.bf16.msra.mxu0 0
      %1676 = vmatprep.subr.bf16.mxu0 0
      %1677 = vmatpush1.bf16.msra.mxu0 0
      %1678 = vmatprep.subr.bf16.mxu0 0
      %1679 = vmatpush1.bf16.msra.mxu0 0
      %1680 = vmatprep.subr.bf16.mxu0 0
      %1681 = vmatpush1.bf16.msra.mxu0 0
      %1682 = vmatprep.subr.bf16.mxu0 0
      %1683 = vmatpush1.bf16.msra.mxu0 0
      %1684 = vmatprep.mubr.bf16.mxu0 0
      %1685 = vmatmul.mubr.bf16.gmra.mrb[0].mxu0 %v1647
      %v1686 = vpop.f32.mrb[0].mxu0
      %v1687 = vadd.f32 %v1633, %v1686
      %v1688 = vpop.f32.mrb[0].mxu0
      %v1689 = vpop.f32.mrb[0].mxu0
      %v1690 = vadd.f32 %v1638, %v1689
      %v1691 = vpop.f32.mrb[0].mxu0
      %1692 = vdwg.mxu0
      %v1693 = vmax.f32 %v1687, 0.0
      %v1694 = vmax.f32 %v1690, 0.0
      %vm1695 = vcmask 523264
      %v1696 = vsel %vm1695, %v1693, 0.0
      %v1697 = vsel %vm1695, %v1694, 0.0
      %1700 = vrot.lane.b32.xlu0 %v1696, 127
      %v1701 = vpop.permute.xlu0 %1700
      %1702 = vrot.lane.b32.xlu0 %v1697, 127
      %v1703 = vpop.permute.xlu0 %1702
      %v1706 = vmax.f32 %v1693, %v1701
      %v1707 = vmax.f32 %v1694, %v1703
      %v1708 = vmax.f32 %v1696, %v1701
      %v1709 = vmax.f32 %v1697, %v1703
      %1712 = vrot.lane.b32.xlu0 %v1708, 120
      %v1713 = vpop.permute.xlu0 %1712
      %1714 = vrot.lane.b32.xlu0 %v1709, 120
      %v1715 = vpop.permute.xlu0 %1714
      %v1718 = vmax.f32 %v1706, %v1713
      %v1719 = vmax.f32 %v1707, %v1715
      %v1720 = vpack.c.bf16 %v1719, %v1718
      %v1721 = vld [vmem:[%s20] sm:$0xf]
      %v1722 = vld [vmem:[%s20 + $0x4] sm:$0xf]
      %v1723 = vld [vmem:[%s20 + $0x8] sm:$0xf]
      %v1724 = vld [vmem:[%s20 + $0xc] sm:$0xf]
      %v1725 = vld [vmem:[%s20 + $0x10] sm:$0xf]
      %v1726 = vld [vmem:[%s20 + $0x14] sm:$0xf]
      %v1727 = vld [vmem:[%s20 + $0x18] sm:$0xf]
      %v1728 = vld [vmem:[%s20 + $0x1c] sm:$0xf]
      %v1737 = vunpack.c.l.b16 %v1721
      %v1738 = vunpack.c.l.b16 %v1722
      %v1739 = vunpack.c.l.b16 %v1723
      %v1740 = vunpack.c.l.b16 %v1724
      %v1741 = vunpack.c.l.b16 %v1725
      %v1742 = vunpack.c.l.b16 %v1726
      %v1743 = vunpack.c.l.b16 %v1727
      %v1744 = vunpack.c.l.b16 %v1728
      %v1745 = vpack.c.b16 %v1738, %v1737
      %v1746 = vpack.c.b16 %v1740, %v1739
      %v1747 = vpack.c.b16 %v1742, %v1741
      %v1748 = vpack.c.b16 %v1744, %v1743
      %v1754 = vsel %vm1695, %v1720, 0
      %1756 = vmatprep.subr.bf16.mxu0 0
      %1757 = vmatpush1.bf16.msra.mxu0 %v1745
      %1758 = vmatprep.subr.bf16.mxu0 0
      %1759 = vmatpush1.bf16.msra.mxu0 %v1746
      %1760 = vmatprep.subr.bf16.mxu0 0
      %1761 = vmatpush1.bf16.msra.mxu0 %v1747
      %1762 = vmatprep.subr.bf16.mxu0 0
      %1763 = vmatpush1.bf16.msra.mxu0 %v1748
      %1764 = vmatprep.subr.bf16.mxu0 0
      %1765 = vmatpush1.bf16.msra.mxu0 0
      %1766 = vmatprep.subr.bf16.mxu0 0
      %1767 = vmatpush1.bf16.msra.mxu0 0
      %1768 = vmatprep.subr.bf16.mxu0 0
      %1769 = vmatpush1.bf16.msra.mxu0 0
      %1770 = vmatprep.subr.bf16.mxu0 0
      %1771 = vmatpush1.bf16.msra.mxu0 0
      %1772 = vmatprep.subr.bf16.mxu0 0
      %1773 = vmatpush1.bf16.msra.mxu0 0
      %1774 = vmatprep.subr.bf16.mxu0 0
      %1775 = vmatpush1.bf16.msra.mxu0 0
      %1776 = vmatprep.subr.bf16.mxu0 0
      %1777 = vmatpush1.bf16.msra.mxu0 0
      %1778 = vmatprep.subr.bf16.mxu0 0
      %1779 = vmatpush1.bf16.msra.mxu0 0
      %1780 = vmatprep.subr.bf16.mxu0 0
      %1781 = vmatpush1.bf16.msra.mxu0 0
      %1782 = vmatprep.subr.bf16.mxu0 0
      %1783 = vmatpush1.bf16.msra.mxu0 0
      %1784 = vmatprep.subr.bf16.mxu0 0
      %1785 = vmatpush1.bf16.msra.mxu0 0
      %1786 = vmatprep.subr.bf16.mxu0 0
      %1787 = vmatpush1.bf16.msra.mxu0 0
      %1788 = vmatprep.mubr.bf16.mxu0 0
      %1789 = vmatmul.mubr.bf16.gmra.mrb[0].mxu0 %v1754
      %v1790 = vpop.f32.mrb[0].mxu0
      %v1791 = vadd.f32 0.0, %v1790
      %v1792 = vpop.f32.mrb[0].mxu0
      %v1793 = vpop.f32.mrb[0].mxu0
      %v1794 = vadd.f32 0.0, %v1793
      %v1795 = vpop.f32.mrb[0].mxu0
      %1796 = vdwg.mxu0
      %1799 = vrot.lane.b32.xlu0 %v1791, 5
      %v1800 = vpop.permute.xlu0 %1799
      %1801 = vrot.lane.b32.xlu0 %v1794, 5
      %v1802 = vpop.permute.xlu0 %1801
      %vm1805 = vcmask 39936
      %v1806 = vsel %vm1805, 0.0, %v1800
      %v1807 = vsel %vm1805, 0.0, %v1802
      %vm1808 = vcmask 171008
      %v1809 = vsel %vm1808, %v1806, 0.0
      %v1810 = vsel %vm1808, %v1807, 0.0
      %v1811 = vmul.f32 %v1809, %v739
      %v1812 = vmul.f32 %v1810, %v739
      %1814 = vrot.lane.b32.xlu0 %v742, 2
      %v1815 = vpop.permute.xlu0 %1814
      %v1817 = vmul.f32 %v1809, %v1815
      %v1818 = vmul.f32 %v1810, %v1815
      %1820 = vrot.lane.b32.xlu0 %v739, 4
      %v1821 = vpop.permute.xlu0 %1820
      %v1823 = vmul.f32 %v1809, %v1821
      %v1824 = vmul.f32 %v1810, %v1821
      %1825 = vrot.lane.b32.xlu0 %v742, 6
      %v1826 = vpop.permute.xlu0 %1825
      %v1828 = vmul.f32 %v1809, %v1826
      %v1829 = vmul.f32 %v1810, %v1826
      %1830 = vrot.lane.b32.xlu0 %v739, 8
      %v1831 = vpop.permute.xlu0 %1830
      %v1833 = vmul.f32 %v1809, %v1831
      %v1834 = vmul.f32 %v1810, %v1831
      %1835 = vrot.lane.b32.xlu0 %v742, 10
      %v1836 = vpop.permute.xlu0 %1835
      %v1838 = vmul.f32 %v1809, %v1836
      %v1839 = vmul.f32 %v1810, %v1836
      %v1842 = vrot.slane %v1809, 4
      %v1843 = vrot.slane %v1810, 4
      %v1844 = vsel %vm958, %v1842, %v1843
      %1845 = vrot.lane.b32.xlu0 %v1842, 127
      %v1846 = vpop.permute.xlu0 %1845
      %1847 = vrot.lane.b32.xlu0 %v1844, 127
      %v1848 = vpop.permute.xlu0 %1847
      %1853 = vrot.lane.b32.xlu0 %v1817, 126
      %v1854 = vpop.permute.xlu0 %1853
      %1855 = vrot.lane.b32.xlu0 %v1818, 126
      %v1856 = vpop.permute.xlu0 %1855
      %v1861 = vrot.slane %v1823, 4
      %v1862 = vrot.slane %v1824, 4
      %v1863 = vsel %vm958, %v1861, %v1862
      %1864 = vrot.lane.b32.xlu0 %v1861, 124
      %v1865 = vpop.permute.xlu0 %1864
      %1866 = vrot.lane.b32.xlu0 %v1863, 124
      %v1867 = vpop.permute.xlu0 %1866
      %1870 = vrot.lane.b32.xlu0 %v1809, 123
      %v1871 = vpop.permute.xlu0 %1870
      %1872 = vrot.lane.b32.xlu0 %v1810, 123
      %v1873 = vpop.permute.xlu0 %1872
      %v1878 = vrot.slane %v1828, 4
      %v1879 = vrot.slane %v1829, 4
      %v1880 = vsel %vm958, %v1878, %v1879
      %1881 = vrot.lane.b32.xlu0 %v1878, 122
      %v1882 = vpop.permute.xlu0 %1881
      %1883 = vrot.lane.b32.xlu0 %v1880, 122
      %v1884 = vpop.permute.xlu0 %1883
      %1889 = vrot.lane.b32.xlu0 %v1833, 120
      %v1890 = vpop.permute.xlu0 %1889
      %1891 = vrot.lane.b32.xlu0 %v1834, 120
      %v1892 = vpop.permute.xlu0 %1891
      %1895 = vrot.lane.b32.xlu0 %v1842, 119
      %v1896 = vpop.permute.xlu0 %1895
      %1897 = vrot.lane.b32.xlu0 %v1844, 119
      %v1898 = vpop.permute.xlu0 %1897
      %1903 = vrot.lane.b32.xlu0 %v1838, 118
      %v1904 = vpop.permute.xlu0 %1903
      %1905 = vrot.lane.b32.xlu0 %v1839, 118
      %v1906 = vpop.permute.xlu0 %1905
      %v1909 = vsel %vm958, %v1812, %v1846
      %v1910 = vsel %vm958, %v1856, %v1865
      %v1911 = vsel %vm958, %v1873, %v1882
      %v1912 = vsel %vm958, %v1892, %v1896
      %v1913 = vpack.c.bf16 %v1909, %v1811
      %v1914 = vpack.c.bf16 %v1854, %v1848
      %v1915 = vpack.c.bf16 %v1867, %v1910
      %v1916 = vpack.c.bf16 %v1911, %v1871
      %v1917 = vpack.c.bf16 %v1890, %v1884
      %v1918 = vpack.c.bf16 %v1898, %v1912
      %v1919 = vpack.c.bf16 %v1906, %v1904
      %v1920 = vld [vmem:[%s7] sm:$0xf]
      %v1921 = vld [vmem:[%s7 + $0x4] sm:$0x3]
      %v1922 = vld [vmem:[%s8] sm:$0xff]
      %v1923 = vld [vmem:[%s8 + $0x8] sm:$0xf]
      %1925 = vset.pattern.permute.xlu0 0
      %1926 = vperm.xlu0 %1925, %v1922
      %v1927 = vpop.permute.xlu0 %1926
      %1930 = vset.pattern.permute.xlu0 0
      %1931 = vperm.xlu0 %1930, %v1923
      %v1932 = vpop.permute.xlu0 %1931
      %v1936 = vunpack.c.l.b16 %v1920
      %v1937 = vunpack.c.l.b16 %v1921
      %v1938 = vpack.c.b16 %v1937, %v1936
      %v1940 = vsel %vm1645, %v1938, 0
      %v1943 = vsel %vm952, %v1919, 0
      %1945 = vmatprep.subr.bf16.mxu0 0
      %1946 = vmatpush1.bf16.msra.mxu0 %v1913
      %1947 = vmatprep.subr.bf16.mxu0 0
      %1948 = vmatpush1.bf16.msra.mxu0 %v1914
      %1949 = vmatprep.subr.bf16.mxu0 0
      %1950 = vmatpush1.bf16.msra.mxu0 %v1915
      %1951 = vmatprep.subr.bf16.mxu0 0
      %1952 = vmatpush1.bf16.msra.mxu0 %v1916
      %1953 = vmatprep.subr.bf16.mxu0 0
      %1954 = vmatpush1.bf16.msra.mxu0 %v1917
      %1955 = vmatprep.subr.bf16.mxu0 0
      %1956 = vmatpush1.bf16.msra.mxu0 %v1918
      %1957 = vmatprep.subr.bf16.mxu0 0
      %1958 = vmatpush1.bf16.msra.mxu0 %v1943
      %1959 = vmatprep.subr.bf16.mxu0 0
      %1960 = vmatpush1.bf16.msra.mxu0 0
      %1961 = vmatprep.subr.bf16.mxu0 0
      %1962 = vmatpush1.bf16.msra.mxu0 0
      %1963 = vmatprep.subr.bf16.mxu0 0
      %1964 = vmatpush1.bf16.msra.mxu0 0
      %1965 = vmatprep.subr.bf16.mxu0 0
      %1966 = vmatpush1.bf16.msra.mxu0 0
      %1967 = vmatprep.subr.bf16.mxu0 0
      %1968 = vmatpush1.bf16.msra.mxu0 0
      %1969 = vmatprep.subr.bf16.mxu0 0
      %1970 = vmatpush1.bf16.msra.mxu0 0
      %1971 = vmatprep.subr.bf16.mxu0 0
      %1972 = vmatpush1.bf16.msra.mxu0 0
      %1973 = vmatprep.subr.bf16.mxu0 0
      %1974 = vmatpush1.bf16.msra.mxu0 0
      %1975 = vmatprep.subr.bf16.mxu0 0
      %1976 = vmatpush1.bf16.msra.mxu0 0
      %1977 = vmatprep.mubr.bf16.mxu0 0
      %1978 = vmatmul.mubr.bf16.gmra.mrb[0].mxu0 %v1940
      %v1979 = vpop.f32.mrb[0].mxu0
      %v1980 = vadd.f32 %v1927, %v1979
      %v1981 = vpop.f32.mrb[0].mxu0
      %v1982 = vpop.f32.mrb[0].mxu0
      %v1983 = vadd.f32 %v1932, %v1982
      %v1984 = vpop.f32.mrb[0].mxu0
      %1985 = vdwg.mxu0
      %v1986 = vmax.f32 %v1980, 0.0
      %v1987 = vmax.f32 %v1983, 0.0
      %1990 = vrot.lane.b32.xlu0 %v1986, 5
      %v1991 = vpop.permute.xlu0 %1990
      %1992 = vrot.lane.b32.xlu0 %v1987, 5
      %v1993 = vpop.permute.xlu0 %1992
      %v1996 = vsel %vm1805, 0.0, %v1991
      %v1997 = vsel %vm1805, 0.0, %v1993
      %v1998 = vsel %vm1808, %v1996, 0.0
      %v1999 = vsel %vm1808, %v1997, 0.0
      %v2000 = vmul.f32 %v1998, %v739
      %v2001 = vmul.f32 %v1999, %v739
      %v2002 = vmul.f32 %v1998, %v1815
      %v2003 = vmul.f32 %v1999, %v1815
      %v2004 = vmul.f32 %v1998, %v1821
      %v2005 = vmul.f32 %v1999, %v1821
      %v2006 = vmul.f32 %v1998, %v1826
      %v2007 = vmul.f32 %v1999, %v1826
      %v2008 = vmul.f32 %v1998, %v1831
      %v2009 = vmul.f32 %v1999, %v1831
      %v2010 = vmul.f32 %v1998, %v1836
      %v2011 = vmul.f32 %v1999, %v1836
      %v2014 = vrot.slane %v1998, 4
      %v2015 = vrot.slane %v1999, 4
      %v2016 = vsel %vm958, %v2014, %v2015
      %2017 = vrot.lane.b32.xlu0 %v2014, 127
      %v2018 = vpop.permute.xlu0 %2017
      %2019 = vrot.lane.b32.xlu0 %v2016, 127
      %v2020 = vpop.permute.xlu0 %2019
      %2025 = vrot.lane.b32.xlu0 %v2002, 126
      %v2026 = vpop.permute.xlu0 %2025
      %2027 = vrot.lane.b32.xlu0 %v2003, 126
      %v2028 = vpop.permute.xlu0 %2027
      %v2033 = vrot.slane %v2004, 4
      %v2034 = vrot.slane %v2005, 4
      %v2035 = vsel %vm958, %v2033, %v2034
      %2036 = vrot.lane.b32.xlu0 %v2033, 124
      %v2037 = vpop.permute.xlu0 %2036
      %2038 = vrot.lane.b32.xlu0 %v2035, 124
      %v2039 = vpop.permute.xlu0 %2038
      %2042 = vrot.lane.b32.xlu0 %v1998, 123
      %v2043 = vpop.permute.xlu0 %2042
      %2044 = vrot.lane.b32.xlu0 %v1999, 123
      %v2045 = vpop.permute.xlu0 %2044
      %v2050 = vrot.slane %v2006, 4
      %v2051 = vrot.slane %v2007, 4
      %v2052 = vsel %vm958, %v2050, %v2051
      %2053 = vrot.lane.b32.xlu0 %v2050, 122
      %v2054 = vpop.permute.xlu0 %2053
      %2055 = vrot.lane.b32.xlu0 %v2052, 122
      %v2056 = vpop.permute.xlu0 %2055
      %2061 = vrot.lane.b32.xlu0 %v2008, 120
      %v2062 = vpop.permute.xlu0 %2061
      %2063 = vrot.lane.b32.xlu0 %v2009, 120
      %v2064 = vpop.permute.xlu0 %2063
      %2067 = vrot.lane.b32.xlu0 %v2014, 119
      %v2068 = vpop.permute.xlu0 %2067
      %2069 = vrot.lane.b32.xlu0 %v2016, 119
      %v2070 = vpop.permute.xlu0 %2069
      %2075 = vrot.lane.b32.xlu0 %v2010, 118
      %v2076 = vpop.permute.xlu0 %2075
      %2077 = vrot.lane.b32.xlu0 %v2011, 118
      %v2078 = vpop.permute.xlu0 %2077
      %v2081 = vsel %vm958, %v2001, %v2018
      %v2082 = vsel %vm958, %v2028, %v2037
      %v2083 = vsel %vm958, %v2045, %v2054
      %v2084 = vsel %vm958, %v2064, %v2068
      %v2085 = vpack.c.bf16 %v2081, %v2000
      %v2086 = vpack.c.bf16 %v2026, %v2020
      %v2087 = vpack.c.bf16 %v2039, %v2082
      %v2088 = vpack.c.bf16 %v2083, %v2043
      %v2089 = vpack.c.bf16 %v2062, %v2056
      %v2090 = vpack.c.bf16 %v2070, %v2084
      %v2091 = vpack.c.bf16 %v2078, %v2076
      %v2092 = vld [vmem:[%s9] sm:$0xf]
      %v2093 = vld [vmem:[%s9 + $0x4] sm:$0x3]
      %v2094 = vld [vmem:[%s10] sm:$0xff]
      %v2095 = vld [vmem:[%s10 + $0x8] sm:$0xf]
      %2097 = vset.pattern.permute.xlu0 0
      %2098 = vperm.xlu0 %2097, %v2094
      %v2099 = vpop.permute.xlu0 %2098
      %2102 = vset.pattern.permute.xlu0 0
      %2103 = vperm.xlu0 %2102, %v2095
      %v2104 = vpop.permute.xlu0 %2103
      %v2108 = vunpack.c.l.b16 %v2092
      %v2109 = vunpack.c.l.b16 %v2093
      %v2110 = vpack.c.b16 %v2109, %v2108
      %v2112 = vsel %vm1645, %v2110, 0
      %v2115 = vsel %vm952, %v2091, 0
      %2117 = vmatprep.subr.bf16.mxu0 0
      %2118 = vmatpush1.bf16.msra.mxu0 %v2085
      %2119 = vmatprep.subr.bf16.mxu0 0
      %2120 = vmatpush1.bf16.msra.mxu0 %v2086
      %2121 = vmatprep.subr.bf16.mxu0 0
      %2122 = vmatpush1.bf16.msra.mxu0 %v2087
      %2123 = vmatprep.subr.bf16.mxu0 0
      %2124 = vmatpush1.bf16.msra.mxu0 %v2088
      %2125 = vmatprep.subr.bf16.mxu0 0
      %2126 = vmatpush1.bf16.msra.mxu0 %v2089
      %2127 = vmatprep.subr.bf16.mxu0 0
      %2128 = vmatpush1.bf16.msra.mxu0 %v2090
      %2129 = vmatprep.subr.bf16.mxu0 0
      %2130 = vmatpush1.bf16.msra.mxu0 %v2115
      %2131 = vmatprep.subr.bf16.mxu0 0
      %2132 = vmatpush1.bf16.msra.mxu0 0
      %2133 = vmatprep.subr.bf16.mxu0 0
      %2134 = vmatpush1.bf16.msra.mxu0 0
      %2135 = vmatprep.subr.bf16.mxu0 0
      %2136 = vmatpush1.bf16.msra.mxu0 0
      %2137 = vmatprep.subr.bf16.mxu0 0
      %2138 = vmatpush1.bf16.msra.mxu0 0
      %2139 = vmatprep.subr.bf16.mxu0 0
      %2140 = vmatpush1.bf16.msra.mxu0 0
      %2141 = vmatprep.subr.bf16.mxu0 0
      %2142 = vmatpush1.bf16.msra.mxu0 0
      %2143 = vmatprep.subr.bf16.mxu0 0
      %2144 = vmatpush1.bf16.msra.mxu0 0
      %2145 = vmatprep.subr.bf16.mxu0 0
      %2146 = vmatpush1.bf16.msra.mxu0 0
      %2147 = vmatprep.subr.bf16.mxu0 0
      %2148 = vmatpush1.bf16.msra.mxu0 0
      %2149 = vmatprep.mubr.bf16.mxu0 0
      %2150 = vmatmul.mubr.bf16.gmra.mrb[0].mxu0 %v2112
      %v2151 = vpop.f32.mrb[0].mxu0
      %v2152 = vadd.f32 %v2099, %v2151
      %v2153 = vpop.f32.mrb[0].mxu0
      %v2154 = vpop.f32.mrb[0].mxu0
      %v2155 = vadd.f32 %v2104, %v2154
      %v2156 = vpop.f32.mrb[0].mxu0
      %2157 = vdwg.mxu0
      %v2158 = vmax.f32 %v2152, 0.0
      %v2159 = vmax.f32 %v2155, 0.0
      %v2162 = vrot.slane %v2158, 4
      %v2163 = vrot.slane %v2159, 4
      %v2164 = vsel %vm958, %v2162, %v2163
      %v2166 = vsel %vm958, %v2159, %v2162
      %2168 = vrot.lane.b32.xlu0 %v2158, 5
      %v2169 = vpop.permute.xlu0 %2168
      %2170 = vrot.lane.b32.xlu0 %v2166, 5
      %v2171 = vpop.permute.xlu0 %2170
      %2172 = vrot.lane.b32.xlu0 %v2164, 5
      %v2173 = vpop.permute.xlu0 %2172
      %v2177 = vsel %vm1805, 0.0, %v2169
      %v2178 = vsel %vm1805, 0.0, %v2171
      %v2179 = vsel %vm1805, 0.0, %v2173
      %v2180 = vsel %vm1808, %v2177, 0.0
      %v2181 = vsel %vm1808, %v2178, 0.0
      %v2182 = vsel %vm1808, %v2179, 0.0
      %v2183 = vmul.f32 %v2180, %v739
      %v2184 = vmul.f32 %v2181, %v739
      %v2185 = vmul.f32 %v2182, %v739
      %v2186 = vmul.f32 %v2180, %v1815
      %v2187 = vmul.f32 %v2181, %v1815
      %v2188 = vmul.f32 %v2182, %v1815
      %v2189 = vmul.f32 %v2180, %v1821
      %v2190 = vmul.f32 %v2181, %v1821
      %v2191 = vmul.f32 %v2182, %v1821
      %v2192 = vmul.f32 %v2180, %v1826
      %v2193 = vmul.f32 %v2181, %v1826
      %v2194 = vmul.f32 %v2182, %v1826
      %v2195 = vmul.f32 %v2180, %v1831
      %v2196 = vmul.f32 %v2181, %v1831
      %v2197 = vmul.f32 %v2182, %v1831
      %v2198 = vmul.f32 %v2180, %v1836
      %v2199 = vmul.f32 %v2181, %v1836
      %v2200 = vmul.f32 %v2182, %v1836
      %2204 = vrot.lane.b32.xlu0 %v2180, 127
      %v2205 = vpop.permute.xlu0 %2204
      %2206 = vrot.lane.b32.xlu0 %v2181, 127
      %v2207 = vpop.permute.xlu0 %2206
      %2208 = vrot.lane.b32.xlu0 %v2182, 127
      %v2209 = vpop.permute.xlu0 %2208
      %2216 = vrot.lane.b32.xlu0 %v2186, 126
      %v2217 = vpop.permute.xlu0 %2216
      %2218 = vrot.lane.b32.xlu0 %v2187, 126
      %v2219 = vpop.permute.xlu0 %2218
      %2220 = vrot.lane.b32.xlu0 %v2188, 126
      %v2221 = vpop.permute.xlu0 %2220
      %2228 = vrot.lane.b32.xlu0 %v2189, 124
      %v2229 = vpop.permute.xlu0 %2228
      %2230 = vrot.lane.b32.xlu0 %v2190, 124
      %v2231 = vpop.permute.xlu0 %2230
      %2232 = vrot.lane.b32.xlu0 %v2191, 124
      %v2233 = vpop.permute.xlu0 %2232
      %2237 = vrot.lane.b32.xlu0 %v2180, 123
      %v2238 = vpop.permute.xlu0 %2237
      %2239 = vrot.lane.b32.xlu0 %v2181, 123
      %v2240 = vpop.permute.xlu0 %2239
      %2241 = vrot.lane.b32.xlu0 %v2182, 123
      %v2242 = vpop.permute.xlu0 %2241
      %2249 = vrot.lane.b32.xlu0 %v2192, 122
      %v2250 = vpop.permute.xlu0 %2249
      %2251 = vrot.lane.b32.xlu0 %v2193, 122
      %v2252 = vpop.permute.xlu0 %2251
      %2253 = vrot.lane.b32.xlu0 %v2194, 122
      %v2254 = vpop.permute.xlu0 %2253
      %2261 = vrot.lane.b32.xlu0 %v2195, 120
      %v2262 = vpop.permute.xlu0 %2261
      %2263 = vrot.lane.b32.xlu0 %v2196, 120
      %v2264 = vpop.permute.xlu0 %2263
      %2265 = vrot.lane.b32.xlu0 %v2197, 120
      %v2266 = vpop.permute.xlu0 %2265
      %2270 = vrot.lane.b32.xlu0 %v2180, 119
      %v2271 = vpop.permute.xlu0 %2270
      %2272 = vrot.lane.b32.xlu0 %v2181, 119
      %v2273 = vpop.permute.xlu0 %2272
      %2274 = vrot.lane.b32.xlu0 %v2182, 119
      %v2275 = vpop.permute.xlu0 %2274
      %2282 = vrot.lane.b32.xlu0 %v2198, 118
      %v2283 = vpop.permute.xlu0 %2282
      %2284 = vrot.lane.b32.xlu0 %v2199, 118
      %v2285 = vpop.permute.xlu0 %2284
      %2286 = vrot.lane.b32.xlu0 %v2200, 118
      %v2287 = vpop.permute.xlu0 %2286
      %v2291 = vpack.c.bf16 %v2184, %v2183
      %v2292 = vpack.c.bf16 %v2205, %v2185
      %v2293 = vpack.c.bf16 %v2209, %v2207
      %v2294 = vpack.c.bf16 %v2219, %v2217
      %v2295 = vpack.c.bf16 %v2229, %v2221
      %v2296 = vpack.c.bf16 %v2233, %v2231
      %v2297 = vpack.c.bf16 %v2240, %v2238
      %v2298 = vpack.c.bf16 %v2250, %v2242
      %v2299 = vpack.c.bf16 %v2254, %v2252
      %v2300 = vpack.c.bf16 %v2264, %v2262
      %v2301 = vpack.c.bf16 %v2271, %v2266
      %v2302 = vpack.c.bf16 %v2275, %v2273
      %v2303 = vpack.c.bf16 %v2285, %v2283
      %v2304 = vpack.c.bf16 %v2287, %v2287
      %v2305 = vld [vmem:[%s11] sm:$0xff]
      %v2306 = vld [vmem:[%s11 + $0x8] sm:$0x33]
      %v2307 = vld [vmem:[%s12] sm:$0xff]
      %v2308 = vld [vmem:[%s12 + $0x8] sm:$0xf]
      %2310 = vset.pattern.permute.xlu0 0
      %2311 = vperm.xlu0 %2310, %v2307
      %v2312 = vpop.permute.xlu0 %2311
      %2315 = vset.pattern.permute.xlu0 0
      %2316 = vperm.xlu0 %2315, %v2308
      %v2317 = vpop.permute.xlu0 %2316
      %v2321 = vunpack.c.l.b16 %v2305
      %v2322 = vunpack.c.h.b16 %v2305
      %v2323 = vunpack.c.l.b16 %v2306
      %v2324 = vunpack.c.h.b16 %v2306
      %v2325 = vpack.c.b16 %v2323, %v2321
      %v2326 = vpack.c.b16 %v2324, %v2322
      %vm2328 = vcmask 719872
      %v2330 = vsel %vm2328, %v2326, 0
      %v2333 = vsel %vm958, %v2304, 0
      %2335 = vmatprep.subr.bf16.mxu0 0
      %2336 = vmatpush1.bf16.msra.mxu0 %v2291
      %2337 = vmatprep.subr.bf16.mxu0 0
      %2338 = vmatpush1.bf16.msra.mxu0 %v2292
      %2339 = vmatprep.subr.bf16.mxu0 0
      %2340 = vmatpush1.bf16.msra.mxu0 %v2293
      %2341 = vmatprep.subr.bf16.mxu0 0
      %2342 = vmatpush1.bf16.msra.mxu0 %v2294
      %2343 = vmatprep.subr.bf16.mxu0 0
      %2344 = vmatpush1.bf16.msra.mxu0 %v2295
      %2345 = vmatprep.subr.bf16.mxu0 0
      %2346 = vmatpush1.bf16.msra.mxu0 %v2296
      %2347 = vmatprep.subr.bf16.mxu0 0
      %2348 = vmatpush1.bf16.msra.mxu0 %v2297
      %2349 = vmatprep.subr.bf16.mxu0 0
      %2350 = vmatpush1.bf16.msra.mxu0 %v2298
      %2351 = vmatprep.subr.bf16.mxu0 0
      %2352 = vmatpush1.bf16.msra.mxu0 %v2299
      %2353 = vmatprep.subr.bf16.mxu0 0
      %2354 = vmatpush1.bf16.msra.mxu0 %v2300
      %2355 = vmatprep.subr.bf16.mxu0 0
      %2356 = vmatpush1.bf16.msra.mxu0 %v2301
      %2357 = vmatprep.subr.bf16.mxu0 0
      %2358 = vmatpush1.bf16.msra.mxu0 %v2302
      %2359 = vmatprep.subr.bf16.mxu0 0
      %2360 = vmatpush1.bf16.msra.mxu0 %v2303
      %2361 = vmatprep.subr.bf16.mxu0 0
      %2362 = vmatpush1.bf16.msra.mxu0 %v2333
      %2363 = vmatprep.subr.bf16.mxu0 0
      %2364 = vmatpush1.bf16.msra.mxu0 0
      %2365 = vmatprep.subr.bf16.mxu0 0
      %2366 = vmatpush1.bf16.msra.mxu0 0
      %2367 = vmatprep.mubr.bf16.mxu0 %v2330
      %2368 = vmatmul.mubr.bf16.gmra.mrb[0].mxu0 %v2325
      %v2369 = vpop.f32.mrb[0].mxu0
      %v2370 = vadd.f32 %v2312, %v2369
      %v2371 = vpop.f32.mrb[0].mxu0
      %v2372 = vpop.f32.mrb[0].mxu0
      %v2373 = vadd.f32 %v2317, %v2372
      %v2374 = vpop.f32.mrb[0].mxu0
      %2375 = vdwg.mxu0
      %v2376 = vmax.f32 %v2370, 0.0
      %v2377 = vmax.f32 %v2373, 0.0
      %v2378 = vrot.slane %v1986, 4
      %v2379 = vrot.slane %v1987, 4
      %v2380 = vsel %vm958, %v2378, %v2379
      %v2382 = vsel %vm958, %v2377, %v2378
      %2385 = vrot.lane.b32.xlu0 %v2376, 5
      %v2386 = vpop.permute.xlu0 %2385
      %2387 = vrot.lane.b32.xlu0 %v2382, 5
      %v2388 = vpop.permute.xlu0 %2387
      %2389 = vrot.lane.b32.xlu0 %v2380, 5
      %v2390 = vpop.permute.xlu0 %2389
      %v2394 = vsel %vm1805, 0.0, %v2386
      %v2395 = vsel %vm1805, 0.0, %v2388
      %v2396 = vsel %vm1805, 0.0, %v2390
      %v2397 = vsel %vm1808, %v2394, 0.0
      %v2398 = vsel %vm1808, %v2395, 0.0
      %v2399 = vsel %vm1808, %v2396, 0.0
      %v2400 = vmul.f32 %v2397, %v739
      %v2401 = vmul.f32 %v2398, %v739
      %v2402 = vmul.f32 %v2399, %v739
      %v2403 = vmul.f32 %v2397, %v1815
      %v2404 = vmul.f32 %v2398, %v1815
      %v2405 = vmul.f32 %v2399, %v1815
      %v2406 = vmul.f32 %v2397, %v1821
      %v2407 = vmul.f32 %v2398, %v1821
      %v2408 = vmul.f32 %v2399, %v1821
      %v2409 = vmul.f32 %v2397, %v1826
      %v2410 = vmul.f32 %v2398, %v1826
      %v2411 = vmul.f32 %v2399, %v1826
      %v2412 = vmul.f32 %v2397, %v1831
      %v2413 = vmul.f32 %v2398, %v1831
      %v2414 = vmul.f32 %v2399, %v1831
      %v2415 = vmul.f32 %v2397, %v1836
      %v2416 = vmul.f32 %v2398, %v1836
      %v2417 = vmul.f32 %v2399, %v1836
      %2421 = vrot.lane.b32.xlu0 %v2397, 127
      %v2422 = vpop.permute.xlu0 %2421
      %2423 = vrot.lane.b32.xlu0 %v2398, 127
      %v2424 = vpop.permute.xlu0 %2423
      %2425 = vrot.lane.b32.xlu0 %v2399, 127
      %v2426 = vpop.permute.xlu0 %2425
      %2433 = vrot.lane.b32.xlu0 %v2403, 126
      %v2434 = vpop.permute.xlu0 %2433
      %2435 = vrot.lane.b32.xlu0 %v2404, 126
      %v2436 = vpop.permute.xlu0 %2435
      %2437 = vrot.lane.b32.xlu0 %v2405, 126
      %v2438 = vpop.permute.xlu0 %2437
      %2445 = vrot.lane.b32.xlu0 %v2406, 124
      %v2446 = vpop.permute.xlu0 %2445
      %2447 = vrot.lane.b32.xlu0 %v2407, 124
      %v2448 = vpop.permute.xlu0 %2447
      %2449 = vrot.lane.b32.xlu0 %v2408, 124
      %v2450 = vpop.permute.xlu0 %2449
      %2454 = vrot.lane.b32.xlu0 %v2397, 123
      %v2455 = vpop.permute.xlu0 %2454
      %2456 = vrot.lane.b32.xlu0 %v2398, 123
      %v2457 = vpop.permute.xlu0 %2456
      %2458 = vrot.lane.b32.xlu0 %v2399, 123
      %v2459 = vpop.permute.xlu0 %2458
      %2466 = vrot.lane.b32.xlu0 %v2409, 122
      %v2467 = vpop.permute.xlu0 %2466
      %2468 = vrot.lane.b32.xlu0 %v2410, 122
      %v2469 = vpop.permute.xlu0 %2468
      %2470 = vrot.lane.b32.xlu0 %v2411, 122
      %v2471 = vpop.permute.xlu0 %2470
      %2478 = vrot.lane.b32.xlu0 %v2412, 120
      %v2479 = vpop.permute.xlu0 %2478
      %2480 = vrot.lane.b32.xlu0 %v2413, 120
      %v2481 = vpop.permute.xlu0 %2480
      %2482 = vrot.lane.b32.xlu0 %v2414, 120
      %v2483 = vpop.permute.xlu0 %2482
      %2487 = vrot.lane.b32.xlu0 %v2397, 119
      %v2488 = vpop.permute.xlu0 %2487
      %2489 = vrot.lane.b32.xlu0 %v2398, 119
      %v2490 = vpop.permute.xlu0 %2489
      %2491 = vrot.lane.b32.xlu0 %v2399, 119
      %v2492 = vpop.permute.xlu0 %2491
      %2499 = vrot.lane.b32.xlu0 %v2415, 118
      %v2500 = vpop.permute.xlu0 %2499
      %2501 = vrot.lane.b32.xlu0 %v2416, 118
      %v2502 = vpop.permute.xlu0 %2501
      %2503 = vrot.lane.b32.xlu0 %v2417, 118
      %v2504 = vpop.permute.xlu0 %2503
      %v2508 = vpack.c.bf16 %v2401, %v2400
      %v2509 = vpack.c.bf16 %v2422, %v2402
      %v2510 = vpack.c.bf16 %v2426, %v2424
      %v2511 = vpack.c.bf16 %v2436, %v2434
      %v2512 = vpack.c.bf16 %v2446, %v2438
      %v2513 = vpack.c.bf16 %v2450, %v2448
      %v2514 = vpack.c.bf16 %v2457, %v2455
      %v2515 = vpack.c.bf16 %v2467, %v2459
      %v2516 = vpack.c.bf16 %v2471, %v2469
      %v2517 = vpack.c.bf16 %v2481, %v2479
      %v2518 = vpack.c.bf16 %v2488, %v2483
      %v2519 = vpack.c.bf16 %v2492, %v2490
      %v2520 = vpack.c.bf16 %v2502, %v2500
      %v2521 = vpack.c.bf16 %v2504, %v2504
      %v2522 = vld [vmem:[%s13] sm:$0xff]
      %v2523 = vld [vmem:[%s13 + $0x8] sm:$0x33]
      %v2524 = vld [vmem:[%s14] sm:$0xff]
      %v2525 = vld [vmem:[%s14 + $0x8] sm:$0xf]
      %2527 = vset.pattern.permute.xlu0 0
      %2528 = vperm.xlu0 %2527, %v2524
      %v2529 = vpop.permute.xlu0 %2528
      %2532 = vset.pattern.permute.xlu0 0
      %2533 = vperm.xlu0 %2532, %v2525
      %v2534 = vpop.permute.xlu0 %2533
      %v2538 = vunpack.c.l.b16 %v2522
      %v2539 = vunpack.c.h.b16 %v2522
      %v2540 = vunpack.c.l.b16 %v2523
      %v2541 = vunpack.c.h.b16 %v2523
      %v2542 = vpack.c.b16 %v2540, %v2538
      %v2543 = vpack.c.b16 %v2541, %v2539
      %v2546 = vsel %vm2328, %v2543, 0
      %v2549 = vsel %vm958, %v2521, 0
      %2551 = vmatprep.subr.bf16.mxu0 0
      %2552 = vmatpush1.bf16.msra.mxu0 %v2508
      %2553 = vmatprep.subr.bf16.mxu0 0
      %2554 = vmatpush1.bf16.msra.mxu0 %v2509
      %2555 = vmatprep.subr.bf16.mxu0 0
      %2556 = vmatpush1.bf16.msra.mxu0 %v2510
      %2557 = vmatprep.subr.bf16.mxu0 0
      %2558 = vmatpush1.bf16.msra.mxu0 %v2511
      %2559 = vmatprep.subr.bf16.mxu0 0
      %2560 = vmatpush1.bf16.msra.mxu0 %v2512
      %2561 = vmatprep.subr.bf16.mxu0 0
      %2562 = vmatpush1.bf16.msra.mxu0 %v2513
      %2563 = vmatprep.subr.bf16.mxu0 0
      %2564 = vmatpush1.bf16.msra.mxu0 %v2514
      %2565 = vmatprep.subr.bf16.mxu0 0
      %2566 = vmatpush1.bf16.msra.mxu0 %v2515
      %2567 = vmatprep.subr.bf16.mxu0 0
      %2568 = vmatpush1.bf16.msra.mxu0 %v2516
      %2569 = vmatprep.subr.bf16.mxu0 0
      %2570 = vmatpush1.bf16.msra.mxu0 %v2517
      %2571 = vmatprep.subr.bf16.mxu0 0
      %2572 = vmatpush1.bf16.msra.mxu0 %v2518
      %2573 = vmatprep.subr.bf16.mxu0 0
      %2574 = vmatpush1.bf16.msra.mxu0 %v2519
      %2575 = vmatprep.subr.bf16.mxu0 0
      %2576 = vmatpush1.bf16.msra.mxu0 %v2520
      %2577 = vmatprep.subr.bf16.mxu0 0
      %2578 = vmatpush1.bf16.msra.mxu0 %v2549
      %2579 = vmatprep.subr.bf16.mxu0 0
      %2580 = vmatpush1.bf16.msra.mxu0 0
      %2581 = vmatprep.subr.bf16.mxu0 0
      %2582 = vmatpush1.bf16.msra.mxu0 0
      %2583 = vmatprep.mubr.bf16.mxu0 %v2546
      %2584 = vmatmul.mubr.bf16.gmra.mrb[0].mxu0 %v2542
      %v2585 = vpop.f32.mrb[0].mxu0
      %v2586 = vadd.f32 %v2529, %v2585
      %v2587 = vpop.f32.mrb[0].mxu0
      %v2588 = vpop.f32.mrb[0].mxu0
      %v2589 = vadd.f32 %v2534, %v2588
      %v2590 = vpop.f32.mrb[0].mxu0
      %2591 = vdwg.mxu0
      %v2592 = vmax.f32 %v2586, 0.0
      %v2593 = vmax.f32 %v2589, 0.0
      %v2594 = vpack.c.bf16 %v2593, %v2592
      %v2595 = vld [vmem:[%s21] sm:$0xf]
      %v2596 = vld [vmem:[%s21 + $0x4] sm:$0xf]
      %v2599 = vunpack.c.l.b16 %v2595
      %v2600 = vunpack.c.l.b16 %v2596
      %v2601 = vpack.c.b16 %v2600, %v2599
      %v2604 = vsel %vm779, %v2594, 0
      %2606 = vmatprep.subr.bf16.mxu0 0
      %2607 = vmatpush1.bf16.msra.mxu0 %v2601
      %2608 = vmatprep.subr.bf16.mxu0 0
      %2609 = vmatpush1.bf16.msra.mxu0 0
      %2610 = vmatprep.subr.bf16.mxu0 0
      %2611 = vmatpush1.bf16.msra.mxu0 0
      %2612 = vmatprep.subr.bf16.mxu0 0
      %2613 = vmatpush1.bf16.msra.mxu0 0
      %2614 = vmatprep.subr.bf16.mxu0 0
      %2615 = vmatpush1.bf16.msra.mxu0 0
      %2616 = vmatprep.subr.bf16.mxu0 0
      %2617 = vmatpush1.bf16.msra.mxu0 0
      %2618 = vmatprep.subr.bf16.mxu0 0
      %2619 = vmatpush1.bf16.msra.mxu0 0
      %2620 = vmatprep.subr.bf16.mxu0 0
      %2621 = vmatpush1.bf16.msra.mxu0 0
      %2622 = vmatprep.subr.bf16.mxu0 0
      %2623 = vmatpush1.bf16.msra.mxu0 0
      %2624 = vmatprep.subr.bf16.mxu0 0
      %2625 = vmatpush1.bf16.msra.mxu0 0
      %2626 = vmatprep.subr.bf16.mxu0 0
      %2627 = vmatpush1.bf16.msra.mxu0 0
      %2628 = vmatprep.subr.bf16.mxu0 0
      %2629 = vmatpush1.bf16.msra.mxu0 0
      %2630 = vmatprep.subr.bf16.mxu0 0
      %2631 = vmatpush1.bf16.msra.mxu0 0
      %2632 = vmatprep.subr.bf16.mxu0 0
      %2633 = vmatpush1.bf16.msra.mxu0 0
      %2634 = vmatprep.subr.bf16.mxu0 0
      %2635 = vmatpush1.bf16.msra.mxu0 0
      %2636 = vmatprep.subr.bf16.mxu0 0
      %2637 = vmatpush1.bf16.msra.mxu0 0
      %2638 = vmatprep.mubr.bf16.mxu0 0
      %2639 = vmatmul.mubr.bf16.gmra.mrb[0].mxu0 %v2604
      %v2640 = vpop.f32.mrb[0].mxu0
      %v2641 = vadd.f32 0.0, %v2640
      %v2642 = vpop.f32.mrb[0].mxu0
      %v2643 = vpop.f32.mrb[0].mxu0
      %v2644 = vadd.f32 0.0, %v2643
      %v2645 = vpop.f32.mrb[0].mxu0
      %2646 = vdwg.mxu0
      %v2649 = vrot.slane %v1693, 4
      %v2650 = vrot.slane %v1694, 4
      %v2651 = vsel %vm958, %v2649, %v2650
      %v2653 = vsel %vm958, %v2644, %v2649
      %2656 = vrot.lane.b32.xlu0 %v2641, 9
      %v2657 = vpop.permute.xlu0 %2656
      %2658 = vrot.lane.b32.xlu0 %v2653, 9
      %v2659 = vpop.permute.xlu0 %2658
      %2660 = vrot.lane.b32.xlu0 %v2651, 9
      %v2661 = vpop.permute.xlu0 %2660
      %v2665 = vsel %vm1511, 0.0, %v2657
      %v2666 = vsel %vm1511, 0.0, %v2659
      %v2667 = vsel %vm1511, 0.0, %v2661
      %v2668 = vsel %vm1514, %v2665, 0.0
      %v2669 = vsel %vm1514, %v2666, 0.0
      %v2670 = vsel %vm1514, %v2667, 0.0
      %v2671 = vmul.f32 %v2668, %v732
      %v2672 = vmul.f32 %v2669, %v732
      %v2673 = vmul.f32 %v2670, %v732
      %v2674 = vmul.f32 %v2668, %v1521
      %v2675 = vmul.f32 %v2669, %v1521
      %v2676 = vmul.f32 %v2670, %v1521
      %v2677 = vmul.f32 %v2668, %v1527
      %v2678 = vmul.f32 %v2669, %v1527
      %v2679 = vmul.f32 %v2670, %v1527
      %v2680 = vmul.f32 %v2668, %v1532
      %v2681 = vmul.f32 %v2669, %v1532
      %v2682 = vmul.f32 %v2670, %v1532
      %v2683 = vmul.f32 %v2668, %v1537
      %v2684 = vmul.f32 %v2669, %v1537
      %v2685 = vmul.f32 %v2670, %v1537
      %v2686 = vmul.f32 %v2668, %v1542
      %v2687 = vmul.f32 %v2669, %v1542
      %v2688 = vmul.f32 %v2670, %v1542
      %2692 = vrot.lane.b32.xlu0 %v2668, 127
      %v2693 = vpop.permute.xlu0 %2692
      %2694 = vrot.lane.b32.xlu0 %v2669, 127
      %v2695 = vpop.permute.xlu0 %2694
      %2696 = vrot.lane.b32.xlu0 %v2670, 127
      %v2697 = vpop.permute.xlu0 %2696
      %2704 = vrot.lane.b32.xlu0 %v2674, 126
      %v2705 = vpop.permute.xlu0 %2704
      %2706 = vrot.lane.b32.xlu0 %v2675, 126
      %v2707 = vpop.permute.xlu0 %2706
      %2708 = vrot.lane.b32.xlu0 %v2676, 126
      %v2709 = vpop.permute.xlu0 %2708
      %2716 = vrot.lane.b32.xlu0 %v2677, 120
      %v2717 = vpop.permute.xlu0 %2716
      %2718 = vrot.lane.b32.xlu0 %v2678, 120
      %v2719 = vpop.permute.xlu0 %2718
      %2720 = vrot.lane.b32.xlu0 %v2679, 120
      %v2721 = vpop.permute.xlu0 %2720
      %2725 = vrot.lane.b32.xlu0 %v2668, 119
      %v2726 = vpop.permute.xlu0 %2725
      %2727 = vrot.lane.b32.xlu0 %v2669, 119
      %v2728 = vpop.permute.xlu0 %2727
      %2729 = vrot.lane.b32.xlu0 %v2670, 119
      %v2730 = vpop.permute.xlu0 %2729
      %2737 = vrot.lane.b32.xlu0 %v2680, 118
      %v2738 = vpop.permute.xlu0 %2737
      %2739 = vrot.lane.b32.xlu0 %v2681, 118
      %v2740 = vpop.permute.xlu0 %2739
      %2741 = vrot.lane.b32.xlu0 %v2682, 118
      %v2742 = vpop.permute.xlu0 %2741
      %2749 = vrot.lane.b32.xlu0 %v2683, 112
      %v2750 = vpop.permute.xlu0 %2749
      %2751 = vrot.lane.b32.xlu0 %v2684, 112
      %v2752 = vpop.permute.xlu0 %2751
      %2753 = vrot.lane.b32.xlu0 %v2685, 112
      %v2754 = vpop.permute.xlu0 %2753
      %2758 = vrot.lane.b32.xlu0 %v2668, 111
      %v2759 = vpop.permute.xlu0 %2758
      %2760 = vrot.lane.b32.xlu0 %v2669, 111
      %v2761 = vpop.permute.xlu0 %2760
      %2762 = vrot.lane.b32.xlu0 %v2670, 111
      %v2763 = vpop.permute.xlu0 %2762
      %2770 = vrot.lane.b32.xlu0 %v2686, 110
      %v2771 = vpop.permute.xlu0 %2770
      %2772 = vrot.lane.b32.xlu0 %v2687, 110
      %v2773 = vpop.permute.xlu0 %2772
      %2774 = vrot.lane.b32.xlu0 %v2688, 110
      %v2775 = vpop.permute.xlu0 %2774
      %v2779 = vpack.c.bf16 %v2672, %v2671
      %v2780 = vpack.c.bf16 %v2693, %v2673
      %v2781 = vpack.c.bf16 %v2697, %v2695
      %v2782 = vpack.c.bf16 %v2707, %v2705
      %v2783 = vpack.c.bf16 %v2717, %v2709
      %v2784 = vpack.c.bf16 %v2721, %v2719
      %v2785 = vpack.c.bf16 %v2728, %v2726
      %v2786 = vpack.c.bf16 %v2738, %v2730
      %v2787 = vpack.c.bf16 %v2742, %v2740
      %v2788 = vpack.c.bf16 %v2752, %v2750
      %v2789 = vpack.c.bf16 %v2759, %v2754
      %v2790 = vpack.c.bf16 %v2763, %v2761
      %v2791 = vpack.c.bf16 %v2773, %v2771
      %v2792 = vpack.c.bf16 %v2775, %v2775
      %v2793 = vld [vmem:[%s15] sm:$0xff]
      %v2794 = vld [vmem:[%s15 + $0x8] sm:$0x33]
      %v2795 = vld [vmem:[%s16] sm:$0xff]
      %v2796 = vld [vmem:[%s16 + $0x8] sm:$0xf]
      %2798 = vset.pattern.permute.xlu0 0
      %2799 = vperm.xlu0 %2798, %v2795
      %v2800 = vpop.permute.xlu0 %2799
      %2803 = vset.pattern.permute.xlu0 0
      %2804 = vperm.xlu0 %2803, %v2796
      %v2805 = vpop.permute.xlu0 %2804
      %v2809 = vunpack.c.l.b16 %v2793
      %v2810 = vunpack.c.h.b16 %v2793
      %v2811 = vunpack.c.l.b16 %v2794
      %v2812 = vunpack.c.h.b16 %v2794
      %v2813 = vpack.c.b16 %v2811, %v2809
      %v2814 = vpack.c.b16 %v2812, %v2810
      %v2817 = vsel %vm2328, %v2814, 0
      %v2820 = vsel %vm958, %v2792, 0
      %2822 = vmatprep.subr.bf16.mxu0 0
      %2823 = vmatpush1.bf16.msra.mxu0 %v2779
      %2824 = vmatprep.subr.bf16.mxu0 0
      %2825 = vmatpush1.bf16.msra.mxu0 %v2780
      %2826 = vmatprep.subr.bf16.mxu0 0
      %2827 = vmatpush1.bf16.msra.mxu0 %v2781
      %2828 = vmatprep.subr.bf16.mxu0 0
      %2829 = vmatpush1.bf16.msra.mxu0 %v2782
      %2830 = vmatprep.subr.bf16.mxu0 0
      %2831 = vmatpush1.bf16.msra.mxu0 %v2783
      %2832 = vmatprep.subr.bf16.mxu0 0
      %2833 = vmatpush1.bf16.msra.mxu0 %v2784
      %2834 = vmatprep.subr.bf16.mxu0 0
      %2835 = vmatpush1.bf16.msra.mxu0 %v2785
      %2836 = vmatprep.subr.bf16.mxu0 0
      %2837 = vmatpush1.bf16.msra.mxu0 %v2786
      %2838 = vmatprep.subr.bf16.mxu0 0
      %2839 = vmatpush1.bf16.msra.mxu0 %v2787
      %2840 = vmatprep.subr.bf16.mxu0 0
      %2841 = vmatpush1.bf16.msra.mxu0 %v2788
      %2842 = vmatprep.subr.bf16.mxu0 0
      %2843 = vmatpush1.bf16.msra.mxu0 %v2789
      %2844 = vmatprep.subr.bf16.mxu0 0
      %2845 = vmatpush1.bf16.msra.mxu0 %v2790
      %2846 = vmatprep.subr.bf16.mxu0 0
      %2847 = vmatpush1.bf16.msra.mxu0 %v2791
      %2848 = vmatprep.subr.bf16.mxu0 0
      %2849 = vmatpush1.bf16.msra.mxu0 %v2820
      %2850 = vmatprep.subr.bf16.mxu0 0
      %2851 = vmatpush1.bf16.msra.mxu0 0
      %2852 = vmatprep.subr.bf16.mxu0 0
      %2853 = vmatpush1.bf16.msra.mxu0 0
      %2854 = vmatprep.mubr.bf16.mxu0 %v2817
      %2855 = vmatmul.mubr.bf16.gmra.mrb[0].mxu0 %v2813
      %v2856 = vpop.f32.mrb[0].mxu0
      %v2857 = vadd.f32 %v2800, %v2856
      %v2858 = vpop.f32.mrb[0].mxu0
      %v2859 = vpop.f32.mrb[0].mxu0
      %v2860 = vadd.f32 %v2805, %v2859
      %v2861 = vpop.f32.mrb[0].mxu0
      %2862 = vdwg.mxu0
      %v2863 = vmax.f32 %v2857, 0.0
      %v2864 = vmax.f32 %v2860, 0.0
      %v2865 = vpack.c.bf16 %v2864, %v2863
      %v2866 = vld [vmem:[%s22] sm:$0xff]
      %v2867 = vld [vmem:[%s22 + $0x8] sm:$0xff]
      %v2868 = vld [vmem:[%s22 + $0x10] sm:$0xff]
      %v2869 = vld [vmem:[%s22 + $0x18] sm:$0xff]
      %v2870 = vld [vmem:[%s22 + $0x20] sm:$0xff]
      %v2871 = vld [vmem:[%s22 + $0x28] sm:$0xff]
      %v2872 = vld [vmem:[%s22 + $0x30] sm:$0xff]
      %v2873 = vld [vmem:[%s22 + $0x38] sm:$0xff]
      %v2882 = vunpack.c.l.b16 %v2866
      %v2883 = vunpack.c.h.b16 %v2866
      %v2884 = vunpack.c.l.b16 %v2867
      %v2885 = vunpack.c.h.b16 %v2867
      %v2886 = vunpack.c.l.b16 %v2868
      %v2887 = vunpack.c.h.b16 %v2868
      %v2888 = vunpack.c.l.b16 %v2869
      %v2889 = vunpack.c.h.b16 %v2869
      %v2890 = vunpack.c.l.b16 %v2870
      %v2891 = vunpack.c.h.b16 %v2870
      %v2892 = vunpack.c.l.b16 %v2871
      %v2893 = vunpack.c.h.b16 %v2871
      %v2894 = vunpack.c.l.b16 %v2872
      %v2895 = vunpack.c.h.b16 %v2872
      %v2896 = vunpack.c.l.b16 %v2873
      %v2897 = vunpack.c.h.b16 %v2873
      %v2898 = vpack.c.b16 %v2884, %v2882
      %v2899 = vpack.c.b16 %v2885, %v2883
      %v2900 = vpack.c.b16 %v2888, %v2886
      %v2901 = vpack.c.b16 %v2889, %v2887
      %v2902 = vpack.c.b16 %v2892, %v2890
      %v2903 = vpack.c.b16 %v2893, %v2891
      %v2904 = vpack.c.b16 %v2896, %v2894
      %v2905 = vpack.c.b16 %v2897, %v2895
      %v2915 = vsel %vm1695, %v2865, 0
      %2917 = vmatprep.subr.bf16.mxu0 %v2899
      %2918 = vmatpush1.bf16.msra.mxu0 %v2898
      %2919 = vmatprep.subr.bf16.mxu0 %v2901
      %2920 = vmatpush1.bf16.msra.mxu0 %v2900
      %2921 = vmatprep.subr.bf16.mxu0 %v2903
      %2922 = vmatpush1.bf16.msra.mxu0 %v2902
      %2923 = vmatprep.subr.bf16.mxu0 %v2905
      %2924 = vmatpush1.bf16.msra.mxu0 %v2904
      %2925 = vmatprep.subr.bf16.mxu0 0
      %2926 = vmatpush1.bf16.msra.mxu0 0
      %2927 = vmatprep.subr.bf16.mxu0 0
      %2928 = vmatpush1.bf16.msra.mxu0 0
      %2929 = vmatprep.subr.bf16.mxu0 0
      %2930 = vmatpush1.bf16.msra.mxu0 0
      %2931 = vmatprep.subr.bf16.mxu0 0
      %2932 = vmatpush1.bf16.msra.mxu0 0
      %2933 = vmatprep.subr.bf16.mxu0 0
      %2934 = vmatpush1.bf16.msra.mxu0 0
      %2935 = vmatprep.subr.bf16.mxu0 0
      %2936 = vmatpush1.bf16.msra.mxu0 0
      %2937 = vmatprep.subr.bf16.mxu0 0
      %2938 = vmatpush1.bf16.msra.mxu0 0
      %2939 = vmatprep.subr.bf16.mxu0 0
      %2940 = vmatpush1.bf16.msra.mxu0 0
      %2941 = vmatprep.subr.bf16.mxu0 0
      %2942 = vmatpush1.bf16.msra.mxu0 0
      %2943 = vmatprep.subr.bf16.mxu0 0
      %2944 = vmatpush1.bf16.msra.mxu0 0
      %2945 = vmatprep.subr.bf16.mxu0 0
      %2946 = vmatpush1.bf16.msra.mxu0 0
      %2947 = vmatprep.subr.bf16.mxu0 0
      %2948 = vmatpush1.bf16.msra.mxu0 0
      %2949 = vmatprep.mubr.bf16.mxu0 0
      %2950 = vmatmul.mubr.bf16.gmra.mrb[0].mxu0 %v2915
      %v2951 = vpop.f32.mrb[0].mxu0
      %v2952 = vadd.f32 0.0, %v2951
      %v2953 = vpop.f32.mrb[0].mxu0
      %v2954 = vadd.f32 0.0, %v2953
      %v2955 = vpop.f32.mrb[0].mxu0
      %v2956 = vadd.f32 0.0, %v2955
      %v2957 = vpop.f32.mrb[0].mxu0
      %v2958 = vadd.f32 0.0, %v2957
      %2959 = vdwg.mxu0
      %v2960 = vrot.slane %v1272, 4
      %v2961 = vrot.slane %v1273, 4
      %v2962 = vrot.slane %v1274, 4
      %v2963 = vsel %vm958, %v2960, %v2962
      %v2964 = vrot.slane %v1275, 4
      %v2965 = vsel %vm958, %v2961, %v2964
      %v2968 = vsel %vm958, %v2956, %v2960
      %v2969 = vsel %vm958, %v2958, %v2961
      %2974 = vrot.lane.b32.xlu0 %v2952, 17
      %v2975 = vpop.permute.xlu0 %2974
      %2976 = vrot.lane.b32.xlu0 %v2954, 17
      %v2977 = vpop.permute.xlu0 %2976
      %2978 = vrot.lane.b32.xlu0 %v2968, 17
      %v2979 = vpop.permute.xlu0 %2978
      %2980 = vrot.lane.b32.xlu0 %v2969, 17
      %v2981 = vpop.permute.xlu0 %2980
      %2982 = vrot.lane.b32.xlu0 %v2963, 17
      %v2983 = vpop.permute.xlu0 %2982
      %2984 = vrot.lane.b32.xlu0 %v2965, 17
      %v2985 = vpop.permute.xlu0 %2984
      %v2986 = vsel %vm750, %v2975, %v2977
      %v2987 = vsel %vm750, %v2979, %v2981
      %v2988 = vsel %vm750, %v2983, %v2985
      %v2998 = vsel %vm750, 0.0, %v2975
      %v2999 = vsel %vm750, 0.0, %v2979
      %v3000 = vsel %vm750, 0.0, %v2983
      %v3001 = vsel %vm750, %v2977, 0.0
      %v3002 = vsel %vm750, %v2981, 0.0
      %v3003 = vsel %vm750, %v2985, 0.0
      %v3004 = vmul.f32 %v2998, %v721
      %v3005 = vmul.f32 %v2986, %v722
      %v3006 = vmul.f32 %v2999, %v721
      %v3007 = vmul.f32 %v2987, %v722
      %v3008 = vmul.f32 %v3000, %v721
      %v3009 = vmul.f32 %v2988, %v722
      %v3010 = vmul.f32 %v2998, %v762
      %v3011 = vmul.f32 %v2986, %v766
      %v3012 = vmul.f32 %v3001, %v764
      %v3013 = vmul.f32 %v2999, %v762
      %v3014 = vmul.f32 %v2987, %v766
      %v3015 = vmul.f32 %v3002, %v764
      %v3016 = vmul.f32 %v3000, %v762
      %v3017 = vmul.f32 %v2988, %v766
      %v3018 = vmul.f32 %v3003, %v764
      %v3019 = vmul.f32 %v2998, %v776
      %v3020 = vmul.f32 %v2986, %v780
      %v3021 = vmul.f32 %v3001, %v778
      %v3022 = vmul.f32 %v2999, %v776
      %v3023 = vmul.f32 %v2987, %v780
      %v3024 = vmul.f32 %v3002, %v778
      %v3025 = vmul.f32 %v3000, %v776
      %v3026 = vmul.f32 %v2988, %v780
      %v3027 = vmul.f32 %v3003, %v778
      %v3028 = vmul.f32 %v2998, %v788
      %v3029 = vmul.f32 %v2986, %v792
      %v3030 = vmul.f32 %v3001, %v790
      %v3031 = vmul.f32 %v2999, %v788
      %v3032 = vmul.f32 %v2987, %v792
      %v3033 = vmul.f32 %v3002, %v790
      %v3034 = vmul.f32 %v3000, %v788
      %v3035 = vmul.f32 %v2988, %v792
      %v3036 = vmul.f32 %v3003, %v790
      %v3037 = vmul.f32 %v2998, %v800
      %v3038 = vmul.f32 %v2986, %v804
      %v3039 = vmul.f32 %v3001, %v802
      %v3040 = vmul.f32 %v2999, %v800
      %v3041 = vmul.f32 %v2987, %v804
      %v3042 = vmul.f32 %v3002, %v802
      %v3043 = vmul.f32 %v3000, %v800
      %v3044 = vmul.f32 %v2988, %v804
      %v3045 = vmul.f32 %v3003, %v802
      %v3046 = vmul.f32 %v2998, %v812
      %v3047 = vmul.f32 %v2986, %v816
      %v3048 = vmul.f32 %v3001, %v814
      %v3049 = vmul.f32 %v2999, %v812
      %v3050 = vmul.f32 %v2987, %v816
      %v3051 = vmul.f32 %v3002, %v814
      %v3052 = vmul.f32 %v3000, %v812
      %v3053 = vmul.f32 %v2988, %v816
      %v3054 = vmul.f32 %v3003, %v814
      %3061 = vrot.lane.b32.xlu0 %v2998, 127
      %v3062 = vpop.permute.xlu0 %3061
      %3063 = vrot.lane.b32.xlu0 %v2986, 127
      %v3064 = vpop.permute.xlu0 %3063
      %3065 = vrot.lane.b32.xlu0 %v3001, 127
      %v3066 = vpop.permute.xlu0 %3065
      %3067 = vrot.lane.b32.xlu0 %v2999, 127
      %v3068 = vpop.permute.xlu0 %3067
      %3069 = vrot.lane.b32.xlu0 %v2987, 127
      %v3070 = vpop.permute.xlu0 %3069
      %3071 = vrot.lane.b32.xlu0 %v3002, 127
      %v3072 = vpop.permute.xlu0 %3071
      %3073 = vrot.lane.b32.xlu0 %v3000, 127
      %v3074 = vpop.permute.xlu0 %3073
      %3075 = vrot.lane.b32.xlu0 %v2988, 127
      %v3076 = vpop.permute.xlu0 %3075
      %3077 = vrot.lane.b32.xlu0 %v3003, 127
      %v3078 = vpop.permute.xlu0 %3077
      %v3079 = vsel %vm834, %v3062, %v3064
      %v3080 = vsel %vm834, %v3064, %v3066
      %v3081 = vsel %vm834, %v3068, %v3070
      %v3082 = vsel %vm834, %v3070, %v3072
      %v3083 = vsel %vm834, %v3074, %v3076
      %v3084 = vsel %vm834, %v3076, %v3078
      %3100 = vrot.lane.b32.xlu0 %v3010, 126
      %v3101 = vpop.permute.xlu0 %3100
      %3102 = vrot.lane.b32.xlu0 %v3011, 126
      %v3103 = vpop.permute.xlu0 %3102
      %3104 = vrot.lane.b32.xlu0 %v3012, 126
      %v3105 = vpop.permute.xlu0 %3104
      %3106 = vrot.lane.b32.xlu0 %v3013, 126
      %v3107 = vpop.permute.xlu0 %3106
      %3108 = vrot.lane.b32.xlu0 %v3014, 126
      %v3109 = vpop.permute.xlu0 %3108
      %3110 = vrot.lane.b32.xlu0 %v3015, 126
      %v3111 = vpop.permute.xlu0 %3110
      %3112 = vrot.lane.b32.xlu0 %v3016, 126
      %v3113 = vpop.permute.xlu0 %3112
      %3114 = vrot.lane.b32.xlu0 %v3017, 126
      %v3115 = vpop.permute.xlu0 %3114
      %3116 = vrot.lane.b32.xlu0 %v3018, 126
      %v3117 = vpop.permute.xlu0 %3116
      %v3118 = vsel %vm851, %v3101, %v3103
      %v3119 = vsel %vm851, %v3103, %v3105
      %v3120 = vsel %vm851, %v3107, %v3109
      %v3121 = vsel %vm851, %v3109, %v3111
      %v3122 = vsel %vm851, %v3113, %v3115
      %v3123 = vsel %vm851, %v3115, %v3117
      %3139 = vrot.lane.b32.xlu0 %v3019, 112
      %v3140 = vpop.permute.xlu0 %3139
      %3141 = vrot.lane.b32.xlu0 %v3020, 112
      %v3142 = vpop.permute.xlu0 %3141
      %3143 = vrot.lane.b32.xlu0 %v3021, 112
      %v3144 = vpop.permute.xlu0 %3143
      %3145 = vrot.lane.b32.xlu0 %v3022, 112
      %v3146 = vpop.permute.xlu0 %3145
      %3147 = vrot.lane.b32.xlu0 %v3023, 112
      %v3148 = vpop.permute.xlu0 %3147
      %3149 = vrot.lane.b32.xlu0 %v3024, 112
      %v3150 = vpop.permute.xlu0 %3149
      %3151 = vrot.lane.b32.xlu0 %v3025, 112
      %v3152 = vpop.permute.xlu0 %3151
      %3153 = vrot.lane.b32.xlu0 %v3026, 112
      %v3154 = vpop.permute.xlu0 %3153
      %3155 = vrot.lane.b32.xlu0 %v3027, 112
      %v3156 = vpop.permute.xlu0 %3155
      %v3157 = vsel %vm868, %v3140, %v3142
      %v3158 = vsel %vm868, %v3142, %v3144
      %v3159 = vsel %vm868, %v3146, %v3148
      %v3160 = vsel %vm868, %v3148, %v3150
      %v3161 = vsel %vm868, %v3152, %v3154
      %v3162 = vsel %vm868, %v3154, %v3156
      %3169 = vrot.lane.b32.xlu0 %v2998, 111
      %v3170 = vpop.permute.xlu0 %3169
      %3171 = vrot.lane.b32.xlu0 %v2986, 111
      %v3172 = vpop.permute.xlu0 %3171
      %3173 = vrot.lane.b32.xlu0 %v3001, 111
      %v3174 = vpop.permute.xlu0 %3173
      %3175 = vrot.lane.b32.xlu0 %v2999, 111
      %v3176 = vpop.permute.xlu0 %3175
      %3177 = vrot.lane.b32.xlu0 %v2987, 111
      %v3178 = vpop.permute.xlu0 %3177
      %3179 = vrot.lane.b32.xlu0 %v3002, 111
      %v3180 = vpop.permute.xlu0 %3179
      %3181 = vrot.lane.b32.xlu0 %v3000, 111
      %v3182 = vpop.permute.xlu0 %3181
      %3183 = vrot.lane.b32.xlu0 %v2988, 111
      %v3184 = vpop.permute.xlu0 %3183
      %3185 = vrot.lane.b32.xlu0 %v3003, 111
      %v3186 = vpop.permute.xlu0 %3185
      %v3187 = vsel %vm882, %v3170, %v3172
      %v3188 = vsel %vm882, %v3172, %v3174
      %v3189 = vsel %vm882, %v3176, %v3178
      %v3190 = vsel %vm882, %v3178, %v3180
      %v3191 = vsel %vm882, %v3182, %v3184
      %v3192 = vsel %vm882, %v3184, %v3186
      %3208 = vrot.lane.b32.xlu0 %v3028, 110
      %v3209 = vpop.permute.xlu0 %3208
      %3210 = vrot.lane.b32.xlu0 %v3029, 110
      %v3211 = vpop.permute.xlu0 %3210
      %3212 = vrot.lane.b32.xlu0 %v3030, 110
      %v3213 = vpop.permute.xlu0 %3212
      %3214 = vrot.lane.b32.xlu0 %v3031, 110
      %v3215 = vpop.permute.xlu0 %3214
      %3216 = vrot.lane.b32.xlu0 %v3032, 110
      %v3217 = vpop.permute.xlu0 %3216
      %3218 = vrot.lane.b32.xlu0 %v3033, 110
      %v3219 = vpop.permute.xlu0 %3218
      %3220 = vrot.lane.b32.xlu0 %v3034, 110
      %v3221 = vpop.permute.xlu0 %3220
      %3222 = vrot.lane.b32.xlu0 %v3035, 110
      %v3223 = vpop.permute.xlu0 %3222
      %3224 = vrot.lane.b32.xlu0 %v3036, 110
      %v3225 = vpop.permute.xlu0 %3224
      %v3226 = vsel %vm899, %v3209, %v3211
      %v3227 = vsel %vm899, %v3211, %v3213
      %v3228 = vsel %vm899, %v3215, %v3217
      %v3229 = vsel %vm899, %v3217, %v3219
      %v3230 = vsel %vm899, %v3221, %v3223
      %v3231 = vsel %vm899, %v3223, %v3225
      %3247 = vrot.lane.b32.xlu0 %v3037, 96
      %v3248 = vpop.permute.xlu0 %3247
      %3249 = vrot.lane.b32.xlu0 %v3038, 96
      %v3250 = vpop.permute.xlu0 %3249
      %3251 = vrot.lane.b32.xlu0 %v3039, 96
      %v3252 = vpop.permute.xlu0 %3251
      %3253 = vrot.lane.b32.xlu0 %v3040, 96
      %v3254 = vpop.permute.xlu0 %3253
      %3255 = vrot.lane.b32.xlu0 %v3041, 96
      %v3256 = vpop.permute.xlu0 %3255
      %3257 = vrot.lane.b32.xlu0 %v3042, 96
      %v3258 = vpop.permute.xlu0 %3257
      %3259 = vrot.lane.b32.xlu0 %v3043, 96
      %v3260 = vpop.permute.xlu0 %3259
      %3261 = vrot.lane.b32.xlu0 %v3044, 96
      %v3262 = vpop.permute.xlu0 %3261
      %3263 = vrot.lane.b32.xlu0 %v3045, 96
      %v3264 = vpop.permute.xlu0 %3263
      %v3265 = vsel %vm916, %v3248, %v3250
      %v3266 = vsel %vm916, %v3250, %v3252
      %v3267 = vsel %vm916, %v3254, %v3256
      %v3268 = vsel %vm916, %v3256, %v3258
      %v3269 = vsel %vm916, %v3260, %v3262
      %v3270 = vsel %vm916, %v3262, %v3264
      %3277 = vrot.lane.b32.xlu0 %v2998, 95
      %v3278 = vpop.permute.xlu0 %3277
      %3279 = vrot.lane.b32.xlu0 %v2986, 95
      %v3280 = vpop.permute.xlu0 %3279
      %3281 = vrot.lane.b32.xlu0 %v3001, 95
      %v3282 = vpop.permute.xlu0 %3281
      %3283 = vrot.lane.b32.xlu0 %v2999, 95
      %v3284 = vpop.permute.xlu0 %3283
      %3285 = vrot.lane.b32.xlu0 %v2987, 95
      %v3286 = vpop.permute.xlu0 %3285
      %3287 = vrot.lane.b32.xlu0 %v3002, 95
      %v3288 = vpop.permute.xlu0 %3287
      %3289 = vrot.lane.b32.xlu0 %v3000, 95
      %v3290 = vpop.permute.xlu0 %3289
      %3291 = vrot.lane.b32.xlu0 %v2988, 95
      %v3292 = vpop.permute.xlu0 %3291
      %3293 = vrot.lane.b32.xlu0 %v3003, 95
      %v3294 = vpop.permute.xlu0 %3293
      %v3295 = vsel %vm930, %v3278, %v3280
      %v3296 = vsel %vm930, %v3280, %v3282
      %v3297 = vsel %vm930, %v3284, %v3286
      %v3298 = vsel %vm930, %v3286, %v3288
      %v3299 = vsel %vm930, %v3290, %v3292
      %v3300 = vsel %vm930, %v3292, %v3294
      %3316 = vrot.lane.b32.xlu0 %v3046, 94
      %v3317 = vpop.permute.xlu0 %3316
      %3318 = vrot.lane.b32.xlu0 %v3047, 94
      %v3319 = vpop.permute.xlu0 %3318
      %3320 = vrot.lane.b32.xlu0 %v3048, 94
      %v3321 = vpop.permute.xlu0 %3320
      %3322 = vrot.lane.b32.xlu0 %v3049, 94
      %v3323 = vpop.permute.xlu0 %3322
      %3324 = vrot.lane.b32.xlu0 %v3050, 94
      %v3325 = vpop.permute.xlu0 %3324
      %3326 = vrot.lane.b32.xlu0 %v3051, 94
      %v3327 = vpop.permute.xlu0 %3326
      %3328 = vrot.lane.b32.xlu0 %v3052, 94
      %v3329 = vpop.permute.xlu0 %3328
      %3330 = vrot.lane.b32.xlu0 %v3053, 94
      %v3331 = vpop.permute.xlu0 %3330
      %3332 = vrot.lane.b32.xlu0 %v3054, 94
      %v3333 = vpop.permute.xlu0 %3332
      %v3334 = vsel %vm944, %v3317, %v3319
      %v3335 = vsel %vm944, %v3319, %v3321
      %v3336 = vsel %vm944, %v3323, %v3325
      %v3337 = vsel %vm944, %v3325, %v3327
      %v3338 = vsel %vm944, %v3329, %v3331
      %v3339 = vsel %vm944, %v3331, %v3333
      %v3346 = vpack.c.bf16 %v3006, %v3004
      %v3347 = vpack.c.bf16 %v3007, %v3005
      %v3348 = vpack.c.bf16 %v3079, %v3008
      %v3349 = vpack.c.bf16 %v3080, %v3009
      %v3350 = vpack.c.bf16 %v3083, %v3081
      %v3351 = vpack.c.bf16 %v3084, %v3082
      %v3352 = vpack.c.bf16 %v3120, %v3118
      %v3353 = vpack.c.bf16 %v3121, %v3119
      %v3354 = vpack.c.bf16 %v3157, %v3122
      %v3355 = vpack.c.bf16 %v3158, %v3123
      %v3356 = vpack.c.bf16 %v3161, %v3159
      %v3357 = vpack.c.bf16 %v3162, %v3160
      %v3358 = vpack.c.bf16 %v3189, %v3187
      %v3359 = vpack.c.bf16 %v3190, %v3188
      %v3360 = vpack.c.bf16 %v3226, %v3191
      %v3361 = vpack.c.bf16 %v3227, %v3192
      %v3362 = vpack.c.bf16 %v3230, %v3228
      %v3363 = vpack.c.bf16 %v3231, %v3229
      %v3364 = vpack.c.bf16 %v3267, %v3265
      %v3365 = vpack.c.bf16 %v3268, %v3266
      %v3366 = vpack.c.bf16 %v3295, %v3269
      %v3367 = vpack.c.bf16 %v3296, %v3270
      %v3368 = vpack.c.bf16 %v3299, %v3297
      %v3369 = vpack.c.bf16 %v3300, %v3298
      %v3370 = vpack.c.bf16 %v3336, %v3334
      %v3371 = vpack.c.bf16 %v3337, %v3335
      %v3372 = vpack.c.bf16 %v3338, %v3338
      %v3373 = vpack.c.bf16 %v3339, %v3339
      %v3374 = vld [vmem:[%s17] sm:$0xf]
      %v3375 = vld [vmem:[%s18] sm:$0x7]
      %3377 = vset.pattern.permute.xlu0 0
      %3378 = vperm.xlu0 %3377, %v3375
      %v3379 = vpop.permute.xlu0 %3378
      %v3383 = vunpack.c.l.s4 1983009808
      %v3384 = vunpack.c.0.s8 %v3383
      %v3385 = vlaneseq
      %v3386 = vshrl.u32 %v3385, 7
      %v3387 = vsub.s32 %v3384, %v3386
      %v3388 = vrot.slane %v3374, %v3387
      %v3389 = vcombine.high %v3388, %v3388
      %v3392 = vsel %vm2328, %v3389, 0
      %v3395 = vsel %vm958, %v3372, 0
      %v3398 = vsel %vm958, %v3373, 0
      %3400 = vmatprep.subr.bf16.mxu0 %v3347
      %3401 = vmatpush1.bf16.msra.mxu0 %v3346
      %3402 = vmatprep.subr.bf16.mxu0 %v3349
      %3403 = vmatpush1.bf16.msra.mxu0 %v3348
      %3404 = vmatprep.subr.bf16.mxu0 %v3351
      %3405 = vmatpush1.bf16.msra.mxu0 %v3350
      %3406 = vmatprep.subr.bf16.mxu0 %v3353
      %3407 = vmatpush1.bf16.msra.mxu0 %v3352
      %3408 = vmatprep.subr.bf16.mxu0 %v3355
      %3409 = vmatpush1.bf16.msra.mxu0 %v3354
      %3410 = vmatprep.subr.bf16.mxu0 %v3357
      %3411 = vmatpush1.bf16.msra.mxu0 %v3356
      %3412 = vmatprep.subr.bf16.mxu0 %v3359
      %3413 = vmatpush1.bf16.msra.mxu0 %v3358
      %3414 = vmatprep.subr.bf16.mxu0 %v3361
      %3415 = vmatpush1.bf16.msra.mxu0 %v3360
      %3416 = vmatprep.subr.bf16.mxu0 %v3363
      %3417 = vmatpush1.bf16.msra.mxu0 %v3362
      %3418 = vmatprep.subr.bf16.mxu0 %v3365
      %3419 = vmatpush1.bf16.msra.mxu0 %v3364
      %3420 = vmatprep.subr.bf16.mxu0 %v3367
      %3421 = vmatpush1.bf16.msra.mxu0 %v3366
      %3422 = vmatprep.subr.bf16.mxu0 %v3369
      %3423 = vmatpush1.bf16.msra.mxu0 %v3368
      %3424 = vmatprep.subr.bf16.mxu0 %v3371
      %3425 = vmatpush1.bf16.msra.mxu0 %v3370
      %3426 = vmatprep.subr.bf16.mxu0 %v3398
      %3427 = vmatpush1.bf16.msra.mxu0 %v3395
      %3428 = vmatprep.subr.bf16.mxu0 0
      %3429 = vmatpush1.bf16.msra.mxu0 0
      %3430 = vmatprep.subr.bf16.mxu0 0
      %3431 = vmatpush1.bf16.msra.mxu0 0
      %3432 = vmatprep.mubr.bf16.mxu0 %v3392
      %3433 = vmatmul.mubr.bf16.gmra.mrb[0].mxu0 %v3388
      %v3434 = vpop.f32.mrb[0].mxu0
      %v3435 = vadd.f32 %v3379, %v3434
      %v3436 = vpop.f32.mrb[0].mxu0
      %v3437 = vadd.f32 %v3379, %v3436
      %v3438 = vpop.f32.mrb[0].mxu0
      %v3439 = vpop.f32.mrb[0].mxu0
      %3440 = vdwg.mxu0
      %v3441 = vmax.f32 %v3435, 0.0
      %v3442 = vmax.f32 %v3437, 0.0
      %v3443 = vadd.f32 %v3441, %v1034
      %v3444 = vadd.f32 %v3442, %v1035
      %v3447 = vcombine.low %v3443, %v3444
      %3449 = vst [vmem:[%s710] sm:$0x77] %v3447
      %p3450 = scmp.lt.s32.totalorder %s34, 1
      %s3451 = scalar_select %p3450, %s34, 1
      %s3452 = smul.addr %s3451, 2
      %s3453 = smul.addr %s3452, 4
      %s3454 = scalar_lea.vmem %s23, %s3453
      // Predicated region
      $region113: #{cpm2_forward.1} parent=111 // pred_check
        %p3455 = pneg %p540
      $region114: #{cpm2_forward.1} parent=111 // pred_check_branch
        %3457 = sbr.rel (%p3455) target = $region116
      $region115: #{cpm2_forward.1} parent=111 // pred_region
        _
      $region116: #{cpm2_forward.1} parent=111 // pred_fallthru
        _
    $region112: #{cpm2_forward.1} parent=5 // pred_fallthru
      _
    %p3458 = scmp.le.s32.totalorder 2, %s29
    // Predicated region
    $region117: #{cpm2_forward.1} parent=5 // pred_check
      %p3459 = pneg %p3458
    $region118: #{cpm2_forward.1} parent=5 // pred_check_branch
      %3461 = sbr.rel (%p3459) target = $region120
    $region119: #{cpm2_forward.1} parent=5 // pred_region
      %s3462 = ssub.s32 %s29, 2
      // Predicated region
      $region121: #{cpm2_forward.1} parent=119 // pred_check
        %p3463 = pneg %p546
      $region122: #{cpm2_forward.1} parent=119 // pred_check_branch
        %3465 = sbr.rel (%p3463) target = $region124
      $region123: #{cpm2_forward.1} parent=119 // pred_region
        %p3466 = scmp.lt.s32.totalorder %s35, 1
        %s3467 = scalar_select %p3466, %s35, 1
        %s3468 = smul.addr %s3467, 2
        %s3469 = smul.addr %s3468, 4
        %s3470 = scalar_lea.vmem %s23, %s3469
      $region124: #{cpm2_forward.1} parent=119 // pred_fallthru
        _
    $region120: #{cpm2_forward.1} parent=5 // pred_fallthru
      _
  $region6: #{cpm2_forward.1} parent=0 // loop_footer
    %s33 = sadd.s32 1, %s29
  $region7: #{cpm2_forward.1} parent=0 // loop_footer_branch
    %28 = sbr.rel target = $region3
  $region8: #{cpm2_forward.1} parent=0 // loop_exit
    _

</llo_original>
